<compile_context>
chip_gen: v6e
topology: v6e:2x2x1
jax: 0.10.0
libtpu: 0.0.40
codegen_flags: <defaults>
</compile_context>

<pallas_src>
import jax
import jax.numpy as jnp
import numpy as np
from jax.experimental import pallas as pl
from jax.experimental.pallas import tpu as pltpu

CH_IN = 5                 # channels_in (PyTorch default)
C_COLOR = CH_IN - 2       # 3
C_SPATIAL = 2
C_PAD = 8                 # input channels zero-padded to a full sublane group
HID1 = 32                 # per-branch hidden width after the first 1x1 conv
HID1F = 2 * HID1          # fused (color | spatial) hidden width = 64
MID = 2048                # branch output width == head input width
HID2 = 32                 # head hidden width
TILE_R = 256              # pixels per grid step (lane axis)
TILE_K = 256              # chunk of the 2048 merged channels per inner step

assert MID % TILE_K == 0


def pix_transform_kernel(x_ref, w1_ref, b1_ref, w2_ref, b2_ref,
                         wh1_ref, bh1_ref, wh2_ref, bh2_ref, o_ref):
    """One tile of pixels. Channels on sublanes, pixels on lanes.

    x_ref  : (C_PAD, TR)          bf16  input pixels (zero-padded channels)
    w1_ref : (HID1F, C_PAD)       bf16  fused block-diagonal first 1x1 conv
    b1_ref : (HID1F, 1)           f32
    w2_ref : (NK, TILE_K, HID1F)  bf16  fused second 1x1 conv, chunked over MID
    b2_ref : (NK, TILE_K, 1)      f32
    wh1_ref: (NK, HID2, TILE_K)   bf16  head conv 2048 -> 32, chunked over MID
    bh1_ref: (HID2, 1)            f32
    wh2_ref: (HID2, 1)            bf16  head conv 32 -> 1 (as a column)
    bh2_ref: (1, 1)               f32
    o_ref  : (1, TR)              f32
    """
    x = x_ref[...]
    tr = x.shape[1]
    nk = w2_ref.shape[0]

    # Fused first 1x1 conv + ReLU: rows [0:32] = color branch, [32:64] = spatial.
    h1 = jnp.dot(w1_ref[...], x, preferred_element_type=jnp.float32)
    h1 = jnp.maximum(h1 + b1_ref[...], 0.0).astype(jnp.bfloat16)      # (64, TR)

    # merged = W2f @ h1 + b2f is consumed chunk-by-chunk (ReLU then contraction
    # with the matching head-weight slice) so the (2048, TR) tensor never exists.
    acc = jnp.zeros((HID2, tr), jnp.float32)
    for k in range(nk):
        m = jnp.dot(w2_ref[k], h1, preferred_element_type=jnp.float32)
        m = jnp.maximum(m + b2_ref[k], 0.0).astype(jnp.bfloat16)      # (TK, TR)
        acc = acc + jnp.dot(wh1_ref[k], m, preferred_element_type=jnp.float32)

    h2 = jnp.maximum(acc + bh1_ref[...], 0.0)                          # (32, TR)

    # Head 32 -> 1 as a VPU multiply + sublane reduction (no 1-row MXU pass).
    h2b = h2.astype(jnp.bfloat16).astype(jnp.float32)
    wv = wh2_ref[...].astype(jnp.float32)                              # (32, 1)
    o_ref[...] = jnp.sum(h2b * wv, axis=0, keepdims=True) + bh2_ref[...]


def _whole(a):
    nd = a.ndim
    return pl.BlockSpec(a.shape, lambda r, _nd=nd: (0,) * _nd)


@jax.jit
def pix_transform_net_base(x_nchw, p):
    """Forward pass of PixTransformNetBase (kernel_size=1).

    x_nchw: (N, 5, H, W) float32. Returns (N, 1, H, W) float32.
    """
    N, C, H, W = x_nchw.shape
    assert C == CH_IN
    R = N * H * W

    # ---- fuse the color / spatial branches --------------------------------
    w1f = jnp.zeros((HID1F, C_PAD), jnp.float32)
    w1f = w1f.at[:HID1, :C_COLOR].set(p["wc1"])          # color rows
    w1f = w1f.at[HID1:, C_COLOR:CH_IN].set(p["ws1"])     # spatial rows
    b1f = jnp.concatenate([p["bc1"], p["bs1"]]).reshape(HID1F, 1)
    w2f = jnp.concatenate([p["wc2"], p["ws2"]], axis=1)  # (2048, 64)
    b2f = (p["bc2"] + p["bs2"]).reshape(MID, 1)

    nk = MID // TILE_K
    w2r = w2f.astype(jnp.bfloat16).reshape(nk, TILE_K, HID1F)
    b2r = b2f.reshape(nk, TILE_K, 1)
    wh1r = jnp.transpose(
        p["wh1"].astype(jnp.bfloat16).reshape(HID2, nk, TILE_K), (1, 0, 2))
    bh1 = p["bh1"].reshape(HID2, 1)
    wh2 = jnp.transpose(p["wh2"]).astype(jnp.bfloat16)   # (32, 1)
    bh2 = p["bh2"].reshape(1, 1)

    # ---- pixels on the lane axis: (C_PAD, N*H*W) --------------------------
    x_cr = jnp.transpose(x_nchw, (1, 0, 2, 3)).reshape(CH_IN, R)
    grid_r = pl.cdiv(R, TILE_R)
    r_pad = grid_r * TILE_R
    x_cr = jnp.pad(x_cr, ((0, C_PAD - CH_IN), (0, r_pad - R)))
    x_cr = x_cr.astype(jnp.bfloat16)

    weights = [w1f.astype(jnp.bfloat16), b1f, w2r, b2r, wh1r, bh1, wh2, bh2]

    out = pl.pallas_call(
        pix_transform_kernel,
        out_shape=jax.ShapeDtypeStruct((1, r_pad), jnp.float32),
        grid_spec=pltpu.PrefetchScalarGridSpec(
            num_scalar_prefetch=0,
            grid=(grid_r,),
            in_specs=[pl.BlockSpec((C_PAD, TILE_R), lambda r: (0, r))]
                    + [_whole(w) for w in weights],
            out_specs=pl.BlockSpec((1, TILE_R), lambda r: (0, r)),
        ),
        compiler_params=pltpu.CompilerParams(
            dimension_semantics=("parallel",)),
    )(x_cr, *weights)

    out = out[:, :R].reshape(1, N, H, W)
    return jnp.transpose(out, (1, 0, 2, 3))


# ---------------------------------------------------------------------------
# Pure-JAX reference (mirrors the PyTorch module; bf16 matmuls, f32 accumulate)
# and parameter init.
# ---------------------------------------------------------------------------
def ref_forward(x_nchw, p):
    N, C, H, W = x_nchw.shape
    R = N * H * W
    x = jnp.transpose(x_nchw, (1, 0, 2, 3)).reshape(C, R)
    xc, xs = x[:C_COLOR], x[C_COLOR:]

    def mm(w, a):
        return jnp.dot(w.astype(jnp.bfloat16), a.astype(jnp.bfloat16),
                       preferred_element_type=jnp.float32)

    c1 = jnp.maximum(mm(p["wc1"], xc) + p["bc1"][:, None], 0.0)
    s1 = jnp.maximum(mm(p["ws1"], xs) + p["bs1"][:, None], 0.0)
    merged = (mm(p["wc2"], c1) + p["bc2"][:, None]
              + mm(p["ws2"], s1) + p["bs2"][:, None])
    h = jnp.maximum(merged, 0.0)
    h2 = jnp.maximum(mm(p["wh1"], h) + p["bh1"][:, None], 0.0)
    out = mm(p["wh2"], h2) + p["bh2"][:, None]
    return jnp.transpose(out.reshape(1, N, H, W), (1, 0, 2, 3))


def init_params(key):
    ks = jax.random.split(key, 12)

    def rnd(k, shape, scale=0.1):
        return scale * jax.random.normal(k, shape, jnp.float32)

    return {
        # spatial_net: Conv2d(2, 32, 1) -> ReLU -> Conv2d(32, 2048, 1)
        "ws1": rnd(ks[0], (HID1, C_SPATIAL)), "bs1": rnd(ks[1], (HID1,)),
        "ws2": rnd(ks[2], (MID, HID1)),       "bs2": rnd(ks[3], (MID,)),
        # color_net: Conv2d(3, 32, 1) -> ReLU -> Conv2d(32, 2048, 1)
        "wc1": rnd(ks[4], (HID1, C_COLOR)),   "bc1": rnd(ks[5], (HID1,)),
        "wc2": rnd(ks[6], (MID, HID1)),       "bc2": rnd(ks[7], (MID,)),
        # head_net: ReLU -> Conv2d(2048, 32, 1) -> ReLU -> Conv2d(32, 1, 1)
        "wh1": rnd(ks[8], (HID2, MID)),       "bh1": rnd(ks[9], (HID2,)),
        "wh2": rnd(ks[10], (1, HID2)),        "bh2": rnd(ks[11], (1,)),
    }


if __name__ == "__main__":
    key = jax.random.PRNGKey(0)
    k_params, k_x = jax.random.split(key)
    params = init_params(k_params)

    N, H, W = 2, 16, 16
    x = jax.random.normal(k_x, (N, CH_IN, H, W), jnp.float32)  # NCHW like PyTorch

    out = jax.block_until_ready(pix_transform_net_base(x, params))
    ref = jax.block_until_ready(ref_forward(x, params))

    assert out.shape == (N, 1, H, W), out.shape
    np.testing.assert_allclose(np.asarray(out), np.asarray(ref),
                               rtol=1e-3, atol=1e-3)
    print("KERNEL_OK")
</pallas_src>

<mosaic_0001>
module attributes {stable_mosaic.version = 11 : i64} {
  func.func @pix_transform_kernel(%arg0: i32, %arg1: memref<8x256xbf16, #tpu.memory_space<vmem>>, %arg2: memref<64x8xbf16, #tpu.memory_space<vmem>>, %arg3: memref<64x1xf32, #tpu.memory_space<vmem>>, %arg4: memref<8x256x64xbf16, #tpu.memory_space<vmem>>, %arg5: memref<8x256x1xf32, #tpu.memory_space<vmem>>, %arg6: memref<8x32x256xbf16, #tpu.memory_space<vmem>>, %arg7: memref<32x1xf32, #tpu.memory_space<vmem>>, %arg8: memref<32x1xbf16, #tpu.memory_space<vmem>>, %arg9: memref<1x1xf32, #tpu.memory_space<vmem>>, %arg10: memref<1x256xf32, #tpu.memory_space<vmem>>) attributes {dimension_semantics = [#tpu.dimension_semantics<parallel>], iteration_bounds = array<i64: 2>, scalar_prefetch = 0 : i64, scratch_operands = 0 : i64, tpu.core_type = #tpu.core_type<tc>, window_params = [{transform_indices = @transform_0, window_bounds = array<i64: 8, 256>}, {pipeline_mode = #tpu.pipeline_mode<synchronous>, transform_indices = @transform_1, window_bounds = array<i64: 64, 8>}, {pipeline_mode = #tpu.pipeline_mode<synchronous>, transform_indices = @transform_2, window_bounds = array<i64: 64, 1>}, {pipeline_mode = #tpu.pipeline_mode<synchronous>, transform_indices = @transform_3, window_bounds = array<i64: 8, 256, 64>}, {pipeline_mode = #tpu.pipeline_mode<synchronous>, transform_indices = @transform_4, window_bounds = array<i64: 8, 256, 1>}, {pipeline_mode = #tpu.pipeline_mode<synchronous>, transform_indices = @transform_5, window_bounds = array<i64: 8, 32, 256>}, {pipeline_mode = #tpu.pipeline_mode<synchronous>, transform_indices = @transform_6, window_bounds = array<i64: 32, 1>}, {pipeline_mode = #tpu.pipeline_mode<synchronous>, transform_indices = @transform_7, window_bounds = array<i64: 32, 1>}, {pipeline_mode = #tpu.pipeline_mode<synchronous>, transform_indices = @transform_8, window_bounds = array<i64: 1, 1>}, {transform_indices = @transform_9, window_bounds = array<i64: 1, 256>}]} {
    %c0 = arith.constant 0 : index
    %c0_0 = arith.constant 0 : index
    %0 = vector.load %arg1[%c0, %c0_0] : memref<8x256xbf16, #tpu.memory_space<vmem>>, vector<8x256xbf16>
    %c0_1 = arith.constant 0 : index
    %c0_2 = arith.constant 0 : index
    %1 = vector.load %arg2[%c0_1, %c0_2] : memref<64x8xbf16, #tpu.memory_space<vmem>>, vector<64x8xbf16>
    %cst = arith.constant dense<0.000000e+00> : vector<64x256xf32>
    %2 = tpu.matmul %1, %0, %cst {dimension_numbers = #tpu.dot_dimension_numbers<[1], [0], [0], [1], [0, 0, 1, 1], [], []>} : vector<64x8xbf16>, vector<8x256xbf16>, vector<64x256xf32> -> vector<64x256xf32>
    %c0_3 = arith.constant 0 : index
    %c0_4 = arith.constant 0 : index
    %3 = vector.load %arg3[%c0_3, %c0_4] : memref<64x1xf32, #tpu.memory_space<vmem>>, vector<64x1xf32>
    %4 = vector.broadcast %3 : vector<64x1xf32> to vector<64x256xf32>
    %5 = arith.addf %2, %4 : vector<64x256xf32>
    %cst_5 = arith.constant 0.000000e+00 : f32
    %6 = vector.broadcast %cst_5 : f32 to vector<64x256xf32>
    %7 = arith.maximumf %5, %6 : vector<64x256xf32>
    %8 = arith.truncf %7 : vector<64x256xf32> to vector<64x256xbf16>
    %cst_6 = arith.constant 0.000000e+00 : f32
    %9 = vector.broadcast %cst_6 : f32 to vector<32x256xf32>
    %c0_7 = arith.constant 0 : index
    %c0_8 = arith.constant 0 : index
    %c0_9 = arith.constant 0 : index
    %10 = vector.load %arg4[%c0_7, %c0_8, %c0_9] : memref<8x256x64xbf16, #tpu.memory_space<vmem>>, vector<1x256x64xbf16>
    %11 = vector.shape_cast %10 : vector<1x256x64xbf16> to vector<256x64xbf16>
    %cst_10 = arith.constant dense<0.000000e+00> : vector<256x256xf32>
    %12 = tpu.matmul %11, %8, %cst_10 {dimension_numbers = #tpu.dot_dimension_numbers<[1], [0], [0], [1], [0, 0, 1, 1], [], []>} : vector<256x64xbf16>, vector<64x256xbf16>, vector<256x256xf32> -> vector<256x256xf32>
    %c0_11 = arith.constant 0 : index
    %c0_12 = arith.constant 0 : index
    %c0_13 = arith.constant 0 : index
    %13 = vector.load %arg5[%c0_11, %c0_12, %c0_13] : memref<8x256x1xf32, #tpu.memory_space<vmem>>, vector<1x256x1xf32>
    %14 = vector.shape_cast %13 : vector<1x256x1xf32> to vector<256x1xf32>
    %15 = vector.broadcast %14 : vector<256x1xf32> to vector<256x256xf32>
    %16 = arith.addf %12, %15 : vector<256x256xf32>
    %cst_14 = arith.constant 0.000000e+00 : f32
    %17 = vector.broadcast %cst_14 : f32 to vector<256x256xf32>
    %18 = arith.maximumf %16, %17 : vector<256x256xf32>
    %19 = arith.truncf %18 : vector<256x256xf32> to vector<256x256xbf16>
    %c0_15 = arith.constant 0 : index
    %c0_16 = arith.constant 0 : index
    %c0_17 = arith.constant 0 : index
    %20 = vector.load %arg6[%c0_15, %c0_16, %c0_17] : memref<8x32x256xbf16, #tpu.memory_space<vmem>>, vector<1x32x256xbf16>
    %21 = vector.shape_cast %20 : vector<1x32x256xbf16> to vector<32x256xbf16>
    %cst_18 = arith.constant dense<0.000000e+00> : vector<32x256xf32>
    %22 = tpu.matmul %21, %19, %cst_18 {dimension_numbers = #tpu.dot_dimension_numbers<[1], [0], [0], [1], [0, 0, 1, 1], [], []>} : vector<32x256xbf16>, vector<256x256xbf16>, vector<32x256xf32> -> vector<32x256xf32>
    %23 = arith.addf %9, %22 : vector<32x256xf32>
    %c1 = arith.constant 1 : index
    %c0_19 = arith.constant 0 : index
    %c0_20 = arith.constant 0 : index
    %24 = vector.load %arg4[%c1, %c0_19, %c0_20] : memref<8x256x64xbf16, #tpu.memory_space<vmem>>, vector<1x256x64xbf16>
    %25 = vector.shape_cast %24 : vector<1x256x64xbf16> to vector<256x64xbf16>
    %cst_21 = arith.constant dense<0.000000e+00> : vector<256x256xf32>
    %26 = tpu.matmul %25, %8, %cst_21 {dimension_numbers = #tpu.dot_dimension_numbers<[1], [0], [0], [1], [0, 0, 1, 1], [], []>} : vector<256x64xbf16>, vector<64x256xbf16>, vector<256x256xf32> -> vector<256x256xf32>
    %c1_22 = arith.constant 1 : index
    %c0_23 = arith.constant 0 : index
    %c0_24 = arith.constant 0 : index
    %27 = vector.load %arg5[%c1_22, %c0_23, %c0_24] : memref<8x256x1xf32, #tpu.memory_space<vmem>>, vector<1x256x1xf32>
    %28 = vector.shape_cast %27 : vector<1x256x1xf32> to vector<256x1xf32>
    %29 = vector.broadcast %28 : vector<256x1xf32> to vector<256x256xf32>
    %30 = arith.addf %26, %29 : vector<256x256xf32>
    %cst_25 = arith.constant 0.000000e+00 : f32
    %31 = vector.broadcast %cst_25 : f32 to vector<256x256xf32>
    %32 = arith.maximumf %30, %31 : vector<256x256xf32>
    %33 = arith.truncf %32 : vector<256x256xf32> to vector<256x256xbf16>
    %c1_26 = arith.constant 1 : index
    %c0_27 = arith.constant 0 : index
    %c0_28 = arith.constant 0 : index
    %34 = vector.load %arg6[%c1_26, %c0_27, %c0_28] : memref<8x32x256xbf16, #tpu.memory_space<vmem>>, vector<1x32x256xbf16>
    %35 = vector.shape_cast %34 : vector<1x32x256xbf16> to vector<32x256xbf16>
    %cst_29 = arith.constant dense<0.000000e+00> : vector<32x256xf32>
    %36 = tpu.matmul %35, %33, %cst_29 {dimension_numbers = #tpu.dot_dimension_numbers<[1], [0], [0], [1], [0, 0, 1, 1], [], []>} : vector<32x256xbf16>, vector<256x256xbf16>, vector<32x256xf32> -> vector<32x256xf32>
    %37 = arith.addf %23, %36 : vector<32x256xf32>
    %c2 = arith.constant 2 : index
    %c0_30 = arith.constant 0 : index
    %c0_31 = arith.constant 0 : index
    %38 = vector.load %arg4[%c2, %c0_30, %c0_31] : memref<8x256x64xbf16, #tpu.memory_space<vmem>>, vector<1x256x64xbf16>
    %39 = vector.shape_cast %38 : vector<1x256x64xbf16> to vector<256x64xbf16>
    %cst_32 = arith.constant dense<0.000000e+00> : vector<256x256xf32>
    %40 = tpu.matmul %39, %8, %cst_32 {dimension_numbers = #tpu.dot_dimension_numbers<[1], [0], [0], [1], [0, 0, 1, 1], [], []>} : vector<256x64xbf16>, vector<64x256xbf16>, vector<256x256xf32> -> vector<256x256xf32>
    %c2_33 = arith.constant 2 : index
    %c0_34 = arith.constant 0 : index
    %c0_35 = arith.constant 0 : index
    %41 = vector.load %arg5[%c2_33, %c0_34, %c0_35] : memref<8x256x1xf32, #tpu.memory_space<vmem>>, vector<1x256x1xf32>
    %42 = vector.shape_cast %41 : vector<1x256x1xf32> to vector<256x1xf32>
    %43 = vector.broadcast %42 : vector<256x1xf32> to vector<256x256xf32>
    %44 = arith.addf %40, %43 : vector<256x256xf32>
    %cst_36 = arith.constant 0.000000e+00 : f32
    %45 = vector.broadcast %cst_36 : f32 to vector<256x256xf32>
    %46 = arith.maximumf %44, %45 : vector<256x256xf32>
    %47 = arith.truncf %46 : vector<256x256xf32> to vector<256x256xbf16>
    %c2_37 = arith.constant 2 : index
    %c0_38 = arith.constant 0 : index
    %c0_39 = arith.constant 0 : index
    %48 = vector.load %arg6[%c2_37, %c0_38, %c0_39] : memref<8x32x256xbf16, #tpu.memory_space<vmem>>, vector<1x32x256xbf16>
    %49 = vector.shape_cast %48 : vector<1x32x256xbf16> to vector<32x256xbf16>
    %cst_40 = arith.constant dense<0.000000e+00> : vector<32x256xf32>
    %50 = tpu.matmul %49, %47, %cst_40 {dimension_numbers = #tpu.dot_dimension_numbers<[1], [0], [0], [1], [0, 0, 1, 1], [], []>} : vector<32x256xbf16>, vector<256x256xbf16>, vector<32x256xf32> -> vector<32x256xf32>
    %51 = arith.addf %37, %50 : vector<32x256xf32>
    %c3 = arith.constant 3 : index
    %c0_41 = arith.constant 0 : index
    %c0_42 = arith.constant 0 : index
    %52 = vector.load %arg4[%c3, %c0_41, %c0_42] : memref<8x256x64xbf16, #tpu.memory_space<vmem>>, vector<1x256x64xbf16>
    %53 = vector.shape_cast %52 : vector<1x256x64xbf16> to vector<256x64xbf16>
    %cst_43 = arith.constant dense<0.000000e+00> : vector<256x256xf32>
    %54 = tpu.matmul %53, %8, %cst_43 {dimension_numbers = #tpu.dot_dimension_numbers<[1], [0], [0], [1], [0, 0, 1, 1], [], []>} : vector<256x64xbf16>, vector<64x256xbf16>, vector<256x256xf32> -> vector<256x256xf32>
    %c3_44 = arith.constant 3 : index
    %c0_45 = arith.constant 0 : index
    %c0_46 = arith.constant 0 : index
    %55 = vector.load %arg5[%c3_44, %c0_45, %c0_46] : memref<8x256x1xf32, #tpu.memory_space<vmem>>, vector<1x256x1xf32>
    %56 = vector.shape_cast %55 : vector<1x256x1xf32> to vector<256x1xf32>
    %57 = vector.broadcast %56 : vector<256x1xf32> to vector<256x256xf32>
    %58 = arith.addf %54, %57 : vector<256x256xf32>
    %cst_47 = arith.constant 0.000000e+00 : f32
    %59 = vector.broadcast %cst_47 : f32 to vector<256x256xf32>
    %60 = arith.maximumf %58, %59 : vector<256x256xf32>
    %61 = arith.truncf %60 : vector<256x256xf32> to vector<256x256xbf16>
    %c3_48 = arith.constant 3 : index
    %c0_49 = arith.constant 0 : index
    %c0_50 = arith.constant 0 : index
    %62 = vector.load %arg6[%c3_48, %c0_49, %c0_50] : memref<8x32x256xbf16, #tpu.memory_space<vmem>>, vector<1x32x256xbf16>
    %63 = vector.shape_cast %62 : vector<1x32x256xbf16> to vector<32x256xbf16>
    %cst_51 = arith.constant dense<0.000000e+00> : vector<32x256xf32>
    %64 = tpu.matmul %63, %61, %cst_51 {dimension_numbers = #tpu.dot_dimension_numbers<[1], [0], [0], [1], [0, 0, 1, 1], [], []>} : vector<32x256xbf16>, vector<256x256xbf16>, vector<32x256xf32> -> vector<32x256xf32>
    %65 = arith.addf %51, %64 : vector<32x256xf32>
    %c4 = arith.constant 4 : index
    %c0_52 = arith.constant 0 : index
    %c0_53 = arith.constant 0 : index
    %66 = vector.load %arg4[%c4, %c0_52, %c0_53] : memref<8x256x64xbf16, #tpu.memory_space<vmem>>, vector<1x256x64xbf16>
    %67 = vector.shape_cast %66 : vector<1x256x64xbf16> to vector<256x64xbf16>
    %cst_54 = arith.constant dense<0.000000e+00> : vector<256x256xf32>
    %68 = tpu.matmul %67, %8, %cst_54 {dimension_numbers = #tpu.dot_dimension_numbers<[1], [0], [0], [1], [0, 0, 1, 1], [], []>} : vector<256x64xbf16>, vector<64x256xbf16>, vector<256x256xf32> -> vector<256x256xf32>
    %c4_55 = arith.constant 4 : index
    %c0_56 = arith.constant 0 : index
    %c0_57 = arith.constant 0 : index
    %69 = vector.load %arg5[%c4_55, %c0_56, %c0_57] : memref<8x256x1xf32, #tpu.memory_space<vmem>>, vector<1x256x1xf32>
    %70 = vector.shape_cast %69 : vector<1x256x1xf32> to vector<256x1xf32>
    %71 = vector.broadcast %70 : vector<256x1xf32> to vector<256x256xf32>
    %72 = arith.addf %68, %71 : vector<256x256xf32>
    %cst_58 = arith.constant 0.000000e+00 : f32
    %73 = vector.broadcast %cst_58 : f32 to vector<256x256xf32>
    %74 = arith.maximumf %72, %73 : vector<256x256xf32>
    %75 = arith.truncf %74 : vector<256x256xf32> to vector<256x256xbf16>
    %c4_59 = arith.constant 4 : index
    %c0_60 = arith.constant 0 : index
    %c0_61 = arith.constant 0 : index
    %76 = vector.load %arg6[%c4_59, %c0_60, %c0_61] : memref<8x32x256xbf16, #tpu.memory_space<vmem>>, vector<1x32x256xbf16>
    %77 = vector.shape_cast %76 : vector<1x32x256xbf16> to vector<32x256xbf16>
    %cst_62 = arith.constant dense<0.000000e+00> : vector<32x256xf32>
    %78 = tpu.matmul %77, %75, %cst_62 {dimension_numbers = #tpu.dot_dimension_numbers<[1], [0], [0], [1], [0, 0, 1, 1], [], []>} : vector<32x256xbf16>, vector<256x256xbf16>, vector<32x256xf32> -> vector<32x256xf32>
    %79 = arith.addf %65, %78 : vector<32x256xf32>
    %c5 = arith.constant 5 : index
    %c0_63 = arith.constant 0 : index
    %c0_64 = arith.constant 0 : index
    %80 = vector.load %arg4[%c5, %c0_63, %c0_64] : memref<8x256x64xbf16, #tpu.memory_space<vmem>>, vector<1x256x64xbf16>
    %81 = vector.shape_cast %80 : vector<1x256x64xbf16> to vector<256x64xbf16>
    %cst_65 = arith.constant dense<0.000000e+00> : vector<256x256xf32>
    %82 = tpu.matmul %81, %8, %cst_65 {dimension_numbers = #tpu.dot_dimension_numbers<[1], [0], [0], [1], [0, 0, 1, 1], [], []>} : vector<256x64xbf16>, vector<64x256xbf16>, vector<256x256xf32> -> vector<256x256xf32>
    %c5_66 = arith.constant 5 : index
    %c0_67 = arith.constant 0 : index
    %c0_68 = arith.constant 0 : index
    %83 = vector.load %arg5[%c5_66, %c0_67, %c0_68] : memref<8x256x1xf32, #tpu.memory_space<vmem>>, vector<1x256x1xf32>
    %84 = vector.shape_cast %83 : vector<1x256x1xf32> to vector<256x1xf32>
    %85 = vector.broadcast %84 : vector<256x1xf32> to vector<256x256xf32>
    %86 = arith.addf %82, %85 : vector<256x256xf32>
    %cst_69 = arith.constant 0.000000e+00 : f32
    %87 = vector.broadcast %cst_69 : f32 to vector<256x256xf32>
    %88 = arith.maximumf %86, %87 : vector<256x256xf32>
    %89 = arith.truncf %88 : vector<256x256xf32> to vector<256x256xbf16>
    %c5_70 = arith.constant 5 : index
    %c0_71 = arith.constant 0 : index
    %c0_72 = arith.constant 0 : index
    %90 = vector.load %arg6[%c5_70, %c0_71, %c0_72] : memref<8x32x256xbf16, #tpu.memory_space<vmem>>, vector<1x32x256xbf16>
    %91 = vector.shape_cast %90 : vector<1x32x256xbf16> to vector<32x256xbf16>
    %cst_73 = arith.constant dense<0.000000e+00> : vector<32x256xf32>
    %92 = tpu.matmul %91, %89, %cst_73 {dimension_numbers = #tpu.dot_dimension_numbers<[1], [0], [0], [1], [0, 0, 1, 1], [], []>} : vector<32x256xbf16>, vector<256x256xbf16>, vector<32x256xf32> -> vector<32x256xf32>
    %93 = arith.addf %79, %92 : vector<32x256xf32>
    %c6 = arith.constant 6 : index
    %c0_74 = arith.constant 0 : index
    %c0_75 = arith.constant 0 : index
    %94 = vector.load %arg4[%c6, %c0_74, %c0_75] : memref<8x256x64xbf16, #tpu.memory_space<vmem>>, vector<1x256x64xbf16>
    %95 = vector.shape_cast %94 : vector<1x256x64xbf16> to vector<256x64xbf16>
    %cst_76 = arith.constant dense<0.000000e+00> : vector<256x256xf32>
    %96 = tpu.matmul %95, %8, %cst_76 {dimension_numbers = #tpu.dot_dimension_numbers<[1], [0], [0], [1], [0, 0, 1, 1], [], []>} : vector<256x64xbf16>, vector<64x256xbf16>, vector<256x256xf32> -> vector<256x256xf32>
    %c6_77 = arith.constant 6 : index
    %c0_78 = arith.constant 0 : index
    %c0_79 = arith.constant 0 : index
    %97 = vector.load %arg5[%c6_77, %c0_78, %c0_79] : memref<8x256x1xf32, #tpu.memory_space<vmem>>, vector<1x256x1xf32>
    %98 = vector.shape_cast %97 : vector<1x256x1xf32> to vector<256x1xf32>
    %99 = vector.broadcast %98 : vector<256x1xf32> to vector<256x256xf32>
    %100 = arith.addf %96, %99 : vector<256x256xf32>
    %cst_80 = arith.constant 0.000000e+00 : f32
    %101 = vector.broadcast %cst_80 : f32 to vector<256x256xf32>
    %102 = arith.maximumf %100, %101 : vector<256x256xf32>
    %103 = arith.truncf %102 : vector<256x256xf32> to vector<256x256xbf16>
    %c6_81 = arith.constant 6 : index
    %c0_82 = arith.constant 0 : index
    %c0_83 = arith.constant 0 : index
    %104 = vector.load %arg6[%c6_81, %c0_82, %c0_83] : memref<8x32x256xbf16, #tpu.memory_space<vmem>>, vector<1x32x256xbf16>
    %105 = vector.shape_cast %104 : vector<1x32x256xbf16> to vector<32x256xbf16>
    %cst_84 = arith.constant dense<0.000000e+00> : vector<32x256xf32>
    %106 = tpu.matmul %105, %103, %cst_84 {dimension_numbers = #tpu.dot_dimension_numbers<[1], [0], [0], [1], [0, 0, 1, 1], [], []>} : vector<32x256xbf16>, vector<256x256xbf16>, vector<32x256xf32> -> vector<32x256xf32>
    %107 = arith.addf %93, %106 : vector<32x256xf32>
    %c7 = arith.constant 7 : index
    %c0_85 = arith.constant 0 : index
    %c0_86 = arith.constant 0 : index
    %108 = vector.load %arg4[%c7, %c0_85, %c0_86] : memref<8x256x64xbf16, #tpu.memory_space<vmem>>, vector<1x256x64xbf16>
    %109 = vector.shape_cast %108 : vector<1x256x64xbf16> to vector<256x64xbf16>
    %cst_87 = arith.constant dense<0.000000e+00> : vector<256x256xf32>
    %110 = tpu.matmul %109, %8, %cst_87 {dimension_numbers = #tpu.dot_dimension_numbers<[1], [0], [0], [1], [0, 0, 1, 1], [], []>} : vector<256x64xbf16>, vector<64x256xbf16>, vector<256x256xf32> -> vector<256x256xf32>
    %c7_88 = arith.constant 7 : index
    %c0_89 = arith.constant 0 : index
    %c0_90 = arith.constant 0 : index
    %111 = vector.load %arg5[%c7_88, %c0_89, %c0_90] : memref<8x256x1xf32, #tpu.memory_space<vmem>>, vector<1x256x1xf32>
    %112 = vector.shape_cast %111 : vector<1x256x1xf32> to vector<256x1xf32>
    %113 = vector.broadcast %112 : vector<256x1xf32> to vector<256x256xf32>
    %114 = arith.addf %110, %113 : vector<256x256xf32>
    %cst_91 = arith.constant 0.000000e+00 : f32
    %115 = vector.broadcast %cst_91 : f32 to vector<256x256xf32>
    %116 = arith.maximumf %114, %115 : vector<256x256xf32>
    %117 = arith.truncf %116 : vector<256x256xf32> to vector<256x256xbf16>
    %c7_92 = arith.constant 7 : index
    %c0_93 = arith.constant 0 : index
    %c0_94 = arith.constant 0 : index
    %118 = vector.load %arg6[%c7_92, %c0_93, %c0_94] : memref<8x32x256xbf16, #tpu.memory_space<vmem>>, vector<1x32x256xbf16>
    %119 = vector.shape_cast %118 : vector<1x32x256xbf16> to vector<32x256xbf16>
    %cst_95 = arith.constant dense<0.000000e+00> : vector<32x256xf32>
    %120 = tpu.matmul %119, %117, %cst_95 {dimension_numbers = #tpu.dot_dimension_numbers<[1], [0], [0], [1], [0, 0, 1, 1], [], []>} : vector<32x256xbf16>, vector<256x256xbf16>, vector<32x256xf32> -> vector<32x256xf32>
    %121 = arith.addf %107, %120 : vector<32x256xf32>
    %c0_96 = arith.constant 0 : index
    %c0_97 = arith.constant 0 : index
    %122 = vector.load %arg7[%c0_96, %c0_97] : memref<32x1xf32, #tpu.memory_space<vmem>>, vector<32x1xf32>
    %123 = vector.broadcast %122 : vector<32x1xf32> to vector<32x256xf32>
    %124 = arith.addf %121, %123 : vector<32x256xf32>
    %cst_98 = arith.constant 0.000000e+00 : f32
    %125 = vector.broadcast %cst_98 : f32 to vector<32x256xf32>
    %126 = arith.maximumf %124, %125 : vector<32x256xf32>
    %127 = arith.truncf %126 : vector<32x256xf32> to vector<32x256xbf16>
    %128 = arith.extf %127 : vector<32x256xbf16> to vector<32x256xf32>
    %c0_99 = arith.constant 0 : index
    %c0_100 = arith.constant 0 : index
    %129 = vector.load %arg8[%c0_99, %c0_100] : memref<32x1xbf16, #tpu.memory_space<vmem>>, vector<32x1xbf16>
    %130 = arith.extf %129 : vector<32x1xbf16> to vector<32x1xf32>
    %131 = vector.broadcast %130 : vector<32x1xf32> to vector<32x256xf32>
    %132 = arith.mulf %128, %131 : vector<32x256xf32>
    %cst_101 = arith.constant dense<0.000000e+00> : vector<256xf32>
    %133 = vector.multi_reduction <add>, %132, %cst_101 [0] : vector<32x256xf32> to vector<256xf32>
    %134 = vector.shape_cast %133 : vector<256xf32> to vector<1x256xf32>
    %c0_102 = arith.constant 0 : index
    %c0_103 = arith.constant 0 : index
    %135 = vector.load %arg9[%c0_102, %c0_103] : memref<1x1xf32, #tpu.memory_space<vmem>>, vector<1x1xf32>
    %136 = vector.broadcast %135 : vector<1x1xf32> to vector<1x256xf32>
    %137 = arith.addf %134, %136 : vector<1x256xf32>
    %c0_104 = arith.constant 0 : index
    %c0_105 = arith.constant 0 : index
    %138 = vector.load %arg10[%c0_104, %c0_105] : memref<1x256xf32, #tpu.memory_space<vmem>>, vector<1x256xf32>
    tpu.vector_store %arg10[%c0_104, %c0_105], %137 {strides = array<i32>} : memref<1x256xf32, #tpu.memory_space<vmem>>, vector<1x256xf32>,
    return
  }
  func.func @transform_0(%arg0: i32) -> (i32, i32) {
    %c0_i32 = arith.constant 0 : i32
    %c0_i32_0 = arith.constant 0 : i32
    return %c0_i32, %arg0 : i32, i32
  }
  func.func @transform_1(%arg0: i32) -> (i32, i32) {
    %c0_i32 = arith.constant 0 : i32
    %c0_i32_0 = arith.constant 0 : i32
    %c0_i32_1 = arith.constant 0 : i32
    return %c0_i32, %c0_i32_0 : i32, i32
  }
  func.func @transform_2(%arg0: i32) -> (i32, i32) {
    %c0_i32 = arith.constant 0 : i32
    %c0_i32_0 = arith.constant 0 : i32
    %c0_i32_1 = arith.constant 0 : i32
    return %c0_i32, %c0_i32_0 : i32, i32
  }
  func.func @transform_3(%arg0: i32) -> (i32, i32, i32) {
    %c0_i32 = arith.constant 0 : i32
    %c0_i32_0 = arith.constant 0 : i32
    %c0_i32_1 = arith.constant 0 : i32
    %c0_i32_2 = arith.constant 0 : i32
    return %c0_i32, %c0_i32_0, %c0_i32_1 : i32, i32, i32
  }
  func.func @transform_4(%arg0: i32) -> (i32, i32, i32) {
    %c0_i32 = arith.constant 0 : i32
    %c0_i32_0 = arith.constant 0 : i32
    %c0_i32_1 = arith.constant 0 : i32
    %c0_i32_2 = arith.constant 0 : i32
    return %c0_i32, %c0_i32_0, %c0_i32_1 : i32, i32, i32
  }
  func.func @transform_5(%arg0: i32) -> (i32, i32, i32) {
    %c0_i32 = arith.constant 0 : i32
    %c0_i32_0 = arith.constant 0 : i32
    %c0_i32_1 = arith.constant 0 : i32
    %c0_i32_2 = arith.constant 0 : i32
    return %c0_i32, %c0_i32_0, %c0_i32_1 : i32, i32, i32
  }
  func.func @transform_6(%arg0: i32) -> (i32, i32) {
    %c0_i32 = arith.constant 0 : i32
    %c0_i32_0 = arith.constant 0 : i32
    %c0_i32_1 = arith.constant 0 : i32
    return %c0_i32, %c0_i32_0 : i32, i32
  }
  func.func @transform_7(%arg0: i32) -> (i32, i32) {
    %c0_i32 = arith.constant 0 : i32
    %c0_i32_0 = arith.constant 0 : i32
    %c0_i32_1 = arith.constant 0 : i32
    return %c0_i32, %c0_i32_0 : i32, i32
  }
  func.func @transform_8(%arg0: i32) -> (i32, i32) {
    %c0_i32 = arith.constant 0 : i32
    %c0_i32_0 = arith.constant 0 : i32
    %c0_i32_1 = arith.constant 0 : i32
    return %c0_i32, %c0_i32_0 : i32, i32
  }
  func.func @transform_9(%arg0: i32) -> (i32, i32) {
    %c0_i32 = arith.constant 0 : i32
    %c0_i32_0 = arith.constant 0 : i32
    return %c0_i32, %arg0 : i32, i32
  }
}

</mosaic_0001>

<llo_original>
// kernel: pix_transform_net_base.1
$region0: #{pix_transform_net_base.1}
  #allocation0 [shape = 'u32[]', space=smem, size = 0x4, offset = 0x4, fixed_abs, tag = 'smem constant byte address 0x4 - core index']
  #allocation1 [shape = 'u32[144,128]{1,0:T(1,128)}', space=vmem, size = 0x12000, scoped, tag = 'internal scratch']
  #allocation2 [shape = 'f32[1,1]{1,0:T(1,128)S(1)}', space=vmem, size = 0x200, scoped, tag = 'scoped memory for pix_transform_net_base.1']
  %s0 = inlined_call_operand.vmem [shape: bf16[8,512], index: 0, kind: input, shape index: {}]
  %s1 = inlined_call_operand.vmem [shape: bf16[64,8], index: 1, kind: input, shape index: {}]
  %s2 = inlined_call_operand.vmem [shape: f32[64,1], index: 2, kind: input, shape index: {}]
  %s3 = inlined_call_operand.vmem [shape: bf16[8,256,64], index: 3, kind: input, shape index: {}]
  %s4 = inlined_call_operand.vmem [shape: f32[8,256,1], index: 4, kind: input, shape index: {}]
  %s5 = inlined_call_operand.vmem [shape: bf16[8,32,256], index: 5, kind: input, shape index: {}]
  %s6 = inlined_call_operand.vmem [shape: f32[32,1], index: 6, kind: input, shape index: {}]
  %s7 = inlined_call_operand.vmem [shape: bf16[32,1], index: 7, kind: input, shape index: {}]
  %s8 = inlined_call_operand.<no memory space> [shape: f32[1,1], index: 8, kind: input, shape index: {}]
  %s9 = inlined_call_operand.vmem [shape: f32[1,512], index: 9, kind: output, shape index: {}]
  %s10 = sld [smem:[#allocation0]]
  $region69: #{pix_transform_net_base.1} parent=0
    _
  %s12 = ssub.s32 1, %s10
  %s13 = scalar_select 0, %s12, %s10
  %v14 = vstv %s8
  %15 = vst [vmem:[#allocation2] sm:$0x1] %v14
  loop: start=0, step=1, limit=4
  $region2: #{pix_transform_net_base.1} parent=0 // loop_pre_header
    _
  $region3: #{pix_transform_net_base.1} parent=0 // loop_header
    %s17 = sphi 0, %s21
    %p18 = scmp.ge.s32.totalorder %s17, 4
    %s27 = sphi 0, %s29
    %s30 = sphi 0, %s27
    %s31 = sphi 0, %s30
    %s47 = sphi 0, %s31
    %s51 = sphi 0, %s51
    %s53 = sphi 0, %s51
    %s54 = sphi 0, %s53
    %s68 = sphi 0, %s54
    %s72 = sphi 0, %s72
    %s74 = sphi 0, %s72
    %s75 = sphi 0, %s74
    %s89 = sphi 0, %s75
    %s93 = sphi 0, %s93
    %s95 = sphi 0, %s93
    %s96 = sphi 0, %s95
    %s110 = sphi 0, %s96
    %s114 = sphi 0, %s114
    %s116 = sphi 0, %s114
    %s117 = sphi 0, %s116
    %s131 = sphi 0, %s117
    %s135 = sphi 0, %s135
    %s137 = sphi 0, %s135
    %s138 = sphi 0, %s137
    %s152 = sphi 0, %s138
    %s156 = sphi 0, %s156
    %s158 = sphi 0, %s156
    %s159 = sphi 0, %s158
    %s173 = sphi 0, %s159
    %s177 = sphi 0, %s177
    %s179 = sphi 0, %s177
    %s180 = sphi 0, %s179
    %s194 = sphi 0, %s180
    %s198 = sphi 0, %s198
    %s200 = sphi 0, %s198
    %s201 = sphi 0, %s200
    %s215 = sphi 0, %s201
    %s221 = sphi 0, %s223
    %s224 = sphi 0, %s221
    %s225 = sphi 0, %s224
    %s241 = sphi 0, %s225
  $region4: #{pix_transform_net_base.1} parent=0 // loop_header_branch
    %20 = sbr.rel (%p18) target = $region8
  $region5: #{pix_transform_net_base.1} parent=0 // loop_body
    %s22 = ssub.s32 %s17, 1
    %s23 = ssub.s32 %s17, 2
    %s24 = sadd.s32 %s17, 1
    %s25 = ssub.s32 %s17, %s24
    %p26 = scmp.eq.s32.totalorder %s25, 0
    %s28 = sadd.s32 %s27, 1
    %s29 = scalar_select %p26, %s27, %s28
    %p32 = pneg %p26
    %p33 = scmp.eq.s32.totalorder %s17, 1
    %p34 = por %p32, %p33
    %p35 = scmp.ne.s32.totalorder %s27, %s30
    %p36 = scmp.eq.s32.totalorder %s17, 0
    %p37 = por %p35, %p36
    %p38 = scmp.ne.s32.totalorder %s27, %s30
    %p39 = scmp.eq.s32.totalorder %s22, 1
    %p40 = por %p38, %p39
    %p41 = scmp.ne.s32.totalorder %s30, %s31
    %p42 = scmp.eq.s32.totalorder %s22, 0
    %p43 = por %p41, %p42
    %p44 = scmp.ne.s32.totalorder %s30, %s31
    %p45 = scmp.eq.s32.totalorder %s23, 1
    %p46 = por %p44, %p45
    %p48 = scmp.ne.s32.totalorder %s31, %s47
    %p49 = scmp.eq.s32.totalorder %s23, 0
    %p50 = por %p48, %p49
    %s52 = sadd.s32 %s51, 1
    %p55 = scmp.eq.s32.totalorder %s17, 1
    %p56 = scmp.ne.s32.totalorder %s51, %s53
    %p57 = scmp.eq.s32.totalorder %s17, 0
    %p58 = por %p56, %p57
    %p59 = scmp.ne.s32.totalorder %s51, %s53
    %p60 = scmp.eq.s32.totalorder %s22, 1
    %p61 = por %p59, %p60
    %p62 = scmp.ne.s32.totalorder %s53, %s54
    %p63 = scmp.eq.s32.totalorder %s22, 0
    %p64 = por %p62, %p63
    %p65 = scmp.ne.s32.totalorder %s53, %s54
    %p66 = scmp.eq.s32.totalorder %s23, 1
    %p67 = por %p65, %p66
    %p69 = scmp.ne.s32.totalorder %s54, %s68
    %p70 = scmp.eq.s32.totalorder %s23, 0
    %p71 = por %p69, %p70
    %s73 = sadd.s32 %s72, 1
    %p76 = scmp.eq.s32.totalorder %s17, 1
    %p77 = scmp.ne.s32.totalorder %s72, %s74
    %p78 = scmp.eq.s32.totalorder %s17, 0
    %p79 = por %p77, %p78
    %p80 = scmp.ne.s32.totalorder %s72, %s74
    %p81 = scmp.eq.s32.totalorder %s22, 1
    %p82 = por %p80, %p81
    %p83 = scmp.ne.s32.totalorder %s74, %s75
    %p84 = scmp.eq.s32.totalorder %s22, 0
    %p85 = por %p83, %p84
    %p86 = scmp.ne.s32.totalorder %s74, %s75
    %p87 = scmp.eq.s32.totalorder %s23, 1
    %p88 = por %p86, %p87
    %p90 = scmp.ne.s32.totalorder %s75, %s89
    %p91 = scmp.eq.s32.totalorder %s23, 0
    %p92 = por %p90, %p91
    %s94 = sadd.s32 %s93, 1
    %p97 = scmp.eq.s32.totalorder %s17, 1
    %p98 = scmp.ne.s32.totalorder %s93, %s95
    %p99 = scmp.eq.s32.totalorder %s17, 0
    %p100 = por %p98, %p99
    %p101 = scmp.ne.s32.totalorder %s93, %s95
    %p102 = scmp.eq.s32.totalorder %s22, 1
    %p103 = por %p101, %p102
    %p104 = scmp.ne.s32.totalorder %s95, %s96
    %p105 = scmp.eq.s32.totalorder %s22, 0
    %p106 = por %p104, %p105
    %p107 = scmp.ne.s32.totalorder %s95, %s96
    %p108 = scmp.eq.s32.totalorder %s23, 1
    %p109 = por %p107, %p108
    %p111 = scmp.ne.s32.totalorder %s96, %s110
    %p112 = scmp.eq.s32.totalorder %s23, 0
    %p113 = por %p111, %p112
    %s115 = sadd.s32 %s114, 1
    %p118 = scmp.eq.s32.totalorder %s17, 1
    %p119 = scmp.ne.s32.totalorder %s114, %s116
    %p120 = scmp.eq.s32.totalorder %s17, 0
    %p121 = por %p119, %p120
    %p122 = scmp.ne.s32.totalorder %s114, %s116
    %p123 = scmp.eq.s32.totalorder %s22, 1
    %p124 = por %p122, %p123
    %p125 = scmp.ne.s32.totalorder %s116, %s117
    %p126 = scmp.eq.s32.totalorder %s22, 0
    %p127 = por %p125, %p126
    %p128 = scmp.ne.s32.totalorder %s116, %s117
    %p129 = scmp.eq.s32.totalorder %s23, 1
    %p130 = por %p128, %p129
    %p132 = scmp.ne.s32.totalorder %s117, %s131
    %p133 = scmp.eq.s32.totalorder %s23, 0
    %p134 = por %p132, %p133
    %s136 = sadd.s32 %s135, 1
    %p139 = scmp.eq.s32.totalorder %s17, 1
    %p140 = scmp.ne.s32.totalorder %s135, %s137
    %p141 = scmp.eq.s32.totalorder %s17, 0
    %p142 = por %p140, %p141
    %p143 = scmp.ne.s32.totalorder %s135, %s137
    %p144 = scmp.eq.s32.totalorder %s22, 1
    %p145 = por %p143, %p144
    %p146 = scmp.ne.s32.totalorder %s137, %s138
    %p147 = scmp.eq.s32.totalorder %s22, 0
    %p148 = por %p146, %p147
    %p149 = scmp.ne.s32.totalorder %s137, %s138
    %p150 = scmp.eq.s32.totalorder %s23, 1
    %p151 = por %p149, %p150
    %p153 = scmp.ne.s32.totalorder %s138, %s152
    %p154 = scmp.eq.s32.totalorder %s23, 0
    %p155 = por %p153, %p154
    %s157 = sadd.s32 %s156, 1
    %p160 = scmp.eq.s32.totalorder %s17, 1
    %p161 = scmp.ne.s32.totalorder %s156, %s158
    %p162 = scmp.eq.s32.totalorder %s17, 0
    %p163 = por %p161, %p162
    %p164 = scmp.ne.s32.totalorder %s156, %s158
    %p165 = scmp.eq.s32.totalorder %s22, 1
    %p166 = por %p164, %p165
    %p167 = scmp.ne.s32.totalorder %s158, %s159
    %p168 = scmp.eq.s32.totalorder %s22, 0
    %p169 = por %p167, %p168
    %p170 = scmp.ne.s32.totalorder %s158, %s159
    %p171 = scmp.eq.s32.totalorder %s23, 1
    %p172 = por %p170, %p171
    %p174 = scmp.ne.s32.totalorder %s159, %s173
    %p175 = scmp.eq.s32.totalorder %s23, 0
    %p176 = por %p174, %p175
    %s178 = sadd.s32 %s177, 1
    %p181 = scmp.eq.s32.totalorder %s17, 1
    %p182 = scmp.ne.s32.totalorder %s177, %s179
    %p183 = scmp.eq.s32.totalorder %s17, 0
    %p184 = por %p182, %p183
    %p185 = scmp.ne.s32.totalorder %s177, %s179
    %p186 = scmp.eq.s32.totalorder %s22, 1
    %p187 = por %p185, %p186
    %p188 = scmp.ne.s32.totalorder %s179, %s180
    %p189 = scmp.eq.s32.totalorder %s22, 0
    %p190 = por %p188, %p189
    %p191 = scmp.ne.s32.totalorder %s179, %s180
    %p192 = scmp.eq.s32.totalorder %s23, 1
    %p193 = por %p191, %p192
    %p195 = scmp.ne.s32.totalorder %s180, %s194
    %p196 = scmp.eq.s32.totalorder %s23, 0
    %p197 = por %p195, %p196
    %s199 = sadd.s32 %s198, 1
    %p202 = scmp.eq.s32.totalorder %s17, 1
    %p203 = scmp.ne.s32.totalorder %s198, %s200
    %p204 = scmp.eq.s32.totalorder %s17, 0
    %p205 = por %p203, %p204
    %p206 = scmp.ne.s32.totalorder %s198, %s200
    %p207 = scmp.eq.s32.totalorder %s22, 1
    %p208 = por %p206, %p207
    %p209 = scmp.ne.s32.totalorder %s200, %s201
    %p210 = scmp.eq.s32.totalorder %s22, 0
    %p211 = por %p209, %p210
    %p212 = scmp.ne.s32.totalorder %s200, %s201
    %p213 = scmp.eq.s32.totalorder %s23, 1
    %p214 = por %p212, %p213
    %p216 = scmp.ne.s32.totalorder %s201, %s215
    %p217 = scmp.eq.s32.totalorder %s23, 0
    %p218 = por %p216, %p217
    %s219 = ssub.s32 %s17, %s24
    %p220 = scmp.eq.s32.totalorder %s219, 0
    %s222 = sadd.s32 %s221, 1
    %s223 = scalar_select %p220, %s221, %s222
    %p226 = pneg %p220
    %p227 = scmp.eq.s32.totalorder %s17, 1
    %p228 = por %p226, %p227
    %p229 = scmp.ne.s32.totalorder %s221, %s224
    %p230 = scmp.eq.s32.totalorder %s17, 0
    %p231 = por %p229, %p230
    %p232 = scmp.ne.s32.totalorder %s221, %s224
    %p233 = scmp.eq.s32.totalorder %s22, 1
    %p234 = por %p232, %p233
    %p235 = scmp.ne.s32.totalorder %s224, %s225
    %p236 = scmp.eq.s32.totalorder %s22, 0
    %p237 = por %p235, %p236
    %p238 = scmp.ne.s32.totalorder %s224, %s225
    %p239 = scmp.eq.s32.totalorder %s23, 1
    %p240 = por %p238, %p239
    %p242 = scmp.ne.s32.totalorder %s225, %s241
    %p243 = scmp.eq.s32.totalorder %s23, 0
    %p244 = por %p242, %p243
    %p245 = scmp.le.s32.totalorder 1, %s17
    %p246 = scmp.lt.s32.totalorder %s17, 3
    %p247 = pnand %p245, %p246
    %p248 = pneg %p247
    // Predicated region
    $region9: #{pix_transform_net_base.1} parent=5 // pred_check
      _
    $region10: #{pix_transform_net_base.1} parent=5 // pred_check_branch
      %250 = sbr.rel (%p247) target = $region12
    $region11: #{pix_transform_net_base.1} parent=5 // pred_region
      %s251 = ssub.s32 %s17, 1
      // Predicated region
      $region13: #{pix_transform_net_base.1} parent=11 // pred_check
        %p252 = pneg %p64
      $region14: #{pix_transform_net_base.1} parent=11 // pred_check_branch
        %254 = sbr.rel (%p252) target = $region16
      $region15: #{pix_transform_net_base.1} parent=11 // pred_region
        _
      $region16: #{pix_transform_net_base.1} parent=11 // pred_fallthru
        _
      // Predicated region
      $region17: #{pix_transform_net_base.1} parent=11 // pred_check
        %p255 = pneg %p85
      $region18: #{pix_transform_net_base.1} parent=11 // pred_check_branch
        %257 = sbr.rel (%p255) target = $region20
      $region19: #{pix_transform_net_base.1} parent=11 // pred_region
        _
      $region20: #{pix_transform_net_base.1} parent=11 // pred_fallthru
        _
      // Predicated region
      $region21: #{pix_transform_net_base.1} parent=11 // pred_check
        %p258 = pneg %p106
      $region22: #{pix_transform_net_base.1} parent=11 // pred_check_branch
        %260 = sbr.rel (%p258) target = $region24
      $region23: #{pix_transform_net_base.1} parent=11 // pred_region
        _
      $region24: #{pix_transform_net_base.1} parent=11 // pred_fallthru
        _
      // Predicated region
      $region25: #{pix_transform_net_base.1} parent=11 // pred_check
        %p261 = pneg %p127
      $region26: #{pix_transform_net_base.1} parent=11 // pred_check_branch
        %263 = sbr.rel (%p261) target = $region28
      $region27: #{pix_transform_net_base.1} parent=11 // pred_region
        _
      $region28: #{pix_transform_net_base.1} parent=11 // pred_fallthru
        _
      // Predicated region
      $region29: #{pix_transform_net_base.1} parent=11 // pred_check
        %p264 = pneg %p148
      $region30: #{pix_transform_net_base.1} parent=11 // pred_check_branch
        %266 = sbr.rel (%p264) target = $region32
      $region31: #{pix_transform_net_base.1} parent=11 // pred_region
        _
      $region32: #{pix_transform_net_base.1} parent=11 // pred_fallthru
        _
      // Predicated region
      $region33: #{pix_transform_net_base.1} parent=11 // pred_check
        %p267 = pneg %p169
      $region34: #{pix_transform_net_base.1} parent=11 // pred_check_branch
        %269 = sbr.rel (%p267) target = $region36
      $region35: #{pix_transform_net_base.1} parent=11 // pred_region
        _
      $region36: #{pix_transform_net_base.1} parent=11 // pred_fallthru
        _
      // Predicated region
      $region37: #{pix_transform_net_base.1} parent=11 // pred_check
        %p270 = pneg %p190
      $region38: #{pix_transform_net_base.1} parent=11 // pred_check_branch
        %272 = sbr.rel (%p270) target = $region40
      $region39: #{pix_transform_net_base.1} parent=11 // pred_region
        _
      $region40: #{pix_transform_net_base.1} parent=11 // pred_fallthru
        _
      // Predicated region
      $region41: #{pix_transform_net_base.1} parent=11 // pred_check
        %p273 = pneg %p211
      $region42: #{pix_transform_net_base.1} parent=11 // pred_check_branch
        %275 = sbr.rel (%p273) target = $region44
      $region43: #{pix_transform_net_base.1} parent=11 // pred_region
        _
      $region44: #{pix_transform_net_base.1} parent=11 // pred_fallthru
        _
    $region12: #{pix_transform_net_base.1} parent=5 // pred_fallthru
      _
    %p276 = scmp.lt.s32.totalorder %s17, 2
    // Predicated region
    $region45: #{pix_transform_net_base.1} parent=5 // pred_check
      %p277 = pneg %p276
    $region46: #{pix_transform_net_base.1} parent=5 // pred_check_branch
      %279 = sbr.rel (%p277) target = $region48
    $region47: #{pix_transform_net_base.1} parent=5 // pred_region
      // Predicated region
      $region49: #{pix_transform_net_base.1} parent=47 // pred_check
        %p280 = pneg %p37
      $region50: #{pix_transform_net_base.1} parent=47 // pred_check_branch
        %282 = sbr.rel (%p280) target = $region52
      $region51: #{pix_transform_net_base.1} parent=47 // pred_region
        %s283 = smul.u32 2, %s17
        %p284 = scmp.lt.s32.totalorder %s283, 3
        %s285 = scalar_select %p284, %s283, 3
        %s286 = smul.addr %s285, 4
        %s287 = scalar_lea.vmem %s0, %s286
        %s288 = smul.u32 2, %s17
      $region52: #{pix_transform_net_base.1} parent=47 // pred_fallthru
        _
    $region48: #{pix_transform_net_base.1} parent=5 // pred_fallthru
      _
    %p289 = scmp.le.s32.totalorder 1, %s17
    %p290 = scmp.lt.s32.totalorder %s17, 3
    %p291 = pnand %p289, %p290
    %p292 = pneg %p291
    // Predicated region
    $region53: #{pix_transform_net_base.1} parent=5 // pred_check
      _
    $region54: #{pix_transform_net_base.1} parent=5 // pred_check_branch
      %294 = sbr.rel (%p291) target = $region56
    $region55: #{pix_transform_net_base.1} parent=5 // pred_region
      %s295 = ssub.s32 %s17, 1
      %s296 = smul.u32 2, %s22
      %p297 = scmp.lt.s32.totalorder %s296, 3
      %s298 = scalar_select %p297, %s296, 3
      %s299 = smul.addr %s298, 4
      %s300 = scalar_lea.vmem %s0, %s299
      %p301 = pneg %p43
      %p302 = pneg %p40
      %p303 = pneg %p64
      %p304 = pneg %p61
      %p305 = pneg %p85
      %p306 = pneg %p82
      %p307 = pneg %p106
      %p308 = pneg %p103
      %p309 = pneg %p127
      %p310 = pneg %p124
      %p311 = pneg %p148
      %p312 = pneg %p145
      %p313 = pneg %p169
      %p314 = pneg %p166
      %p315 = pneg %p190
      %p316 = pneg %p187
      %p317 = pneg %p211
      %p318 = pneg %p208
      %p319 = pneg %p237
      %p320 = pneg %p234
      %s321 = smul.u32 2, %s22
      %p322 = scmp.lt.s32.totalorder %s321, 3
      %s323 = scalar_select %p322, %s321, 3
      %s324 = scalar_lea.vmem %s9, %s323
      %s325 = smul.u32 2, %s22
      %p326 = scmp.lt.s32.totalorder %s325, 3
      %s327 = scalar_select %p326, %s325, 3
      %s328 = smul.addr %s327, 4
      %s329 = scalar_lea.vmem %s0, %s328
      %s330 = smul.u32 2, %s22
      %s331 = smul.u32 2, %s22
      %p332 = scmp.lt.s32.totalorder %s331, 3
      %s333 = scalar_select %p332, %s331, 3
      %s334 = scalar_lea.vmem %s9, %s333
      %s335 = smul.u32 2, %s22
      %v337 = vld [vmem:[%s329] sm:$0xff]
      %v338 = vld [vmem:[%s1] sm:$0xf]
      %v339 = vld [vmem:[%s1 + $0x4] sm:$0xf]
      %v340 = vld [vmem:[%s1 + $0x8] sm:$0xf]
      %v341 = vld [vmem:[%s1 + $0xc] sm:$0xf]
      %v342 = vld [vmem:[%s1 + $0x10] sm:$0xf]
      %v343 = vld [vmem:[%s1 + $0x14] sm:$0xf]
      %v344 = vld [vmem:[%s1 + $0x18] sm:$0xf]
      %v345 = vld [vmem:[%s1 + $0x1c] sm:$0xf]
      %v346 = vld [vmem:[%s2] sm:$0xff]
      %v347 = vld [vmem:[%s2 + $0x8] sm:$0xff]
      %v348 = vld [vmem:[%s2 + $0x10] sm:$0xff]
      %v349 = vld [vmem:[%s2 + $0x18] sm:$0xff]
      %v350 = vld [vmem:[%s2 + $0x20] sm:$0xff]
      %v351 = vld [vmem:[%s2 + $0x28] sm:$0xff]
      %v352 = vld [vmem:[%s2 + $0x30] sm:$0xff]
      %v353 = vld [vmem:[%s2 + $0x38] sm:$0xff]
      %355 = vset.pattern.permute.xlu0 0
      %356 = vperm.xlu0 %355, %v346
      %v357 = vpop.permute.xlu0 %356
      %360 = vset.pattern.permute.xlu0 0
      %361 = vperm.xlu0 %360, %v347
      %v362 = vpop.permute.xlu0 %361
      %365 = vset.pattern.permute.xlu0 0
      %366 = vperm.xlu0 %365, %v348
      %v367 = vpop.permute.xlu0 %366
      %370 = vset.pattern.permute.xlu0 0
      %371 = vperm.xlu0 %370, %v349
      %v372 = vpop.permute.xlu0 %371
      %375 = vset.pattern.permute.xlu0 0
      %376 = vperm.xlu0 %375, %v350
      %v377 = vpop.permute.xlu0 %376
      %380 = vset.pattern.permute.xlu0 0
      %381 = vperm.xlu0 %380, %v351
      %v382 = vpop.permute.xlu0 %381
      %385 = vset.pattern.permute.xlu0 0
      %386 = vperm.xlu0 %385, %v352
      %v387 = vpop.permute.xlu0 %386
      %390 = vset.pattern.permute.xlu0 0
      %391 = vperm.xlu0 %390, %v353
      %v392 = vpop.permute.xlu0 %391
      %v402 = vunpack.c.l.b16 %v338
      %v403 = vunpack.c.l.b16 %v339
      %v404 = vunpack.c.l.b16 %v340
      %v405 = vunpack.c.l.b16 %v341
      %v406 = vunpack.c.l.b16 %v342
      %v407 = vunpack.c.l.b16 %v343
      %v408 = vunpack.c.l.b16 %v344
      %v409 = vunpack.c.l.b16 %v345
      %v410 = vpack.c.b16 %v403, %v402
      %v411 = vpack.c.b16 %v405, %v404
      %v412 = vpack.c.b16 %v407, %v406
      %v413 = vpack.c.b16 %v409, %v408
      %v415 = vunpack.c.l.b16 %v337
      %v416 = vunpack.c.h.b16 %v337
      %v417 = vpack.c.b16 %v415, %v415
      %v418 = vpack.c.b16 %v416, %v416
      %vm419 = vcmask 64512
      %v421 = vsel %vm419, %v410, 0
      %v424 = vsel %vm419, %v411, 0
      %v427 = vsel %vm419, %v412, 0
      %v430 = vsel %vm419, %v413, 0
      %vm432 = vcmask 1043456
      %v434 = vsel %vm432, %v417, 0
      %v437 = vsel %vm432, %v418, 0
      %439 = vmatprep.subr.bf16.mxu0 0
      %440 = vmatpush1.bf16.msra.mxu0 0
      %441 = vmatprep.subr.bf16.mxu0 0
      %442 = vmatpush1.bf16.msra.mxu0 0
      %443 = vmatprep.subr.bf16.mxu0 0
      %444 = vmatpush1.bf16.msra.mxu0 0
      %445 = vmatprep.subr.bf16.mxu0 0
      %446 = vmatpush1.bf16.msra.mxu0 0
      %447 = vmatprep.subr.bf16.mxu0 0
      %448 = vmatpush1.bf16.msra.mxu0 0
      %449 = vmatprep.subr.bf16.mxu0 0
      %450 = vmatpush1.bf16.msra.mxu0 0
      %451 = vmatprep.subr.bf16.mxu0 0
      %452 = vmatpush1.bf16.msra.mxu0 0
      %453 = vmatprep.subr.bf16.mxu0 %v437
      %454 = vmatpush1.bf16.msra.mxu0 %v434
      %455 = vmatprep.subr.bf16.mxu0 0
      %456 = vmatpush2.bf16.msra.mxu0 0
      %457 = vmatprep.subr.bf16.mxu0 0
      %458 = vmatpush2.bf16.msra.mxu0 0
      %459 = vmatprep.subr.bf16.mxu0 0
      %460 = vmatpush2.bf16.msra.mxu0 0
      %461 = vmatprep.subr.bf16.mxu0 0
      %462 = vmatpush2.bf16.msra.mxu0 0
      %463 = vmatprep.subr.bf16.mxu0 0
      %464 = vmatpush2.bf16.msra.mxu0 0
      %465 = vmatprep.subr.bf16.mxu0 0
      %466 = vmatpush2.bf16.msra.mxu0 0
      %467 = vmatprep.subr.bf16.mxu0 0
      %468 = vmatpush2.bf16.msra.mxu0 0
      %469 = vmatprep.subr.bf16.mxu0 0
      %470 = vmatpush2.bf16.msra.mxu0 0
      %471 = vmatprep.mubr.bf16.mxu0 0
      %472 = vmatmul.mubr.bf16.gmra.mxu0 %v421
      %v473 = vpop.f32.mrf.mxu0
      %v474 = vadd.f32 %v357, %v473
      %v475 = vpop.f32.mrf.mxu0
      %v476 = vadd.f32 %v357, %v475
      %v477 = vpop.f32.mrf.mxu0
      %v478 = vadd.f32 %v362, %v477
      %v479 = vpop.f32.mrf.mxu0
      %v480 = vadd.f32 %v362, %v479
      %481 = vmatprep.mubr.bf16.mxu0 0
      %482 = vmatmul.mubr.bf16.gmra.mxu0 %v424
      %v483 = vpop.f32.mrf.mxu0
      %v484 = vadd.f32 %v367, %v483
      %v485 = vpop.f32.mrf.mxu0
      %v486 = vadd.f32 %v367, %v485
      %v487 = vpop.f32.mrf.mxu0
      %v488 = vadd.f32 %v372, %v487
      %v489 = vpop.f32.mrf.mxu0
      %v490 = vadd.f32 %v372, %v489
      %491 = vmatprep.mubr.bf16.mxu0 0
      %492 = vmatmul.mubr.bf16.gmra.mxu0 %v427
      %v493 = vpop.f32.mrf.mxu0
      %v494 = vadd.f32 %v377, %v493
      %v495 = vpop.f32.mrf.mxu0
      %v496 = vadd.f32 %v377, %v495
      %v497 = vpop.f32.mrf.mxu0
      %v498 = vadd.f32 %v382, %v497
      %v499 = vpop.f32.mrf.mxu0
      %v500 = vadd.f32 %v382, %v499
      %501 = vmatprep.mubr.bf16.mxu0 0
      %502 = vmatmul.mubr.bf16.gmra.mxu0 %v430
      %v503 = vpop.f32.mrf.mxu0
      %v504 = vadd.f32 %v387, %v503
      %v505 = vpop.f32.mrf.mxu0
      %v506 = vadd.f32 %v387, %v505
      %v507 = vpop.f32.mrf.mxu0
      %v508 = vadd.f32 %v392, %v507
      %v509 = vpop.f32.mrf.mxu0
      %v510 = vadd.f32 %v392, %v509
      %511 = vdwg.mxu0
      %v512 = vmax.f32 %v474, 0.0
      %v513 = vmax.f32 %v476, 0.0
      %v514 = vmax.f32 %v478, 0.0
      %v515 = vmax.f32 %v480, 0.0
      %v516 = vmax.f32 %v484, 0.0
      %v517 = vmax.f32 %v486, 0.0
      %v518 = vmax.f32 %v488, 0.0
      %v519 = vmax.f32 %v490, 0.0
      %v520 = vmax.f32 %v494, 0.0
      %v521 = vmax.f32 %v496, 0.0
      %v522 = vmax.f32 %v498, 0.0
      %v523 = vmax.f32 %v500, 0.0
      %v524 = vmax.f32 %v504, 0.0
      %v525 = vmax.f32 %v506, 0.0
      %v526 = vmax.f32 %v508, 0.0
      %v527 = vmax.f32 %v510, 0.0
      %v528 = vpack.c.bf16 %v514, %v512
      %v529 = vpack.c.bf16 %v515, %v513
      %v530 = vpack.c.bf16 %v518, %v516
      %v531 = vpack.c.bf16 %v519, %v517
      %v532 = vpack.c.bf16 %v522, %v520
      %v533 = vpack.c.bf16 %v523, %v521
      %v534 = vpack.c.bf16 %v526, %v524
      %v535 = vpack.c.bf16 %v527, %v525
      %v536 = vld [vmem:[%s3] sm:$0xf]
      %v537 = vld [vmem:[%s3 + $0x4] sm:$0xf]
      %v538 = vld [vmem:[%s3 + $0x8] sm:$0xf]
      %v539 = vld [vmem:[%s3 + $0xc] sm:$0xf]
      %v540 = vld [vmem:[%s3 + $0x10] sm:$0xf]
      %v541 = vld [vmem:[%s3 + $0x14] sm:$0xf]
      %v542 = vld [vmem:[%s3 + $0x18] sm:$0xf]
      %v543 = vld [vmem:[%s3 + $0x1c] sm:$0xf]
      %v544 = vld [vmem:[%s3 + $0x20] sm:$0xf]
      %v545 = vld [vmem:[%s3 + $0x24] sm:$0xf]
      %v546 = vld [vmem:[%s3 + $0x28] sm:$0xf]
      %v547 = vld [vmem:[%s3 + $0x2c] sm:$0xf]
      %v548 = vld [vmem:[%s3 + $0x30] sm:$0xf]
      %v549 = vld [vmem:[%s3 + $0x34] sm:$0xf]
      %v550 = vld [vmem:[%s3 + $0x38] sm:$0xf]
      %v551 = vld [vmem:[%s3 + $0x3c] sm:$0xf]
      %v552 = vld [vmem:[%s3 + $0x40] sm:$0xf]
      %v553 = vld [vmem:[%s3 + $0x44] sm:$0xf]
      %v554 = vld [vmem:[%s3 + $0x48] sm:$0xf]
      %v555 = vld [vmem:[%s3 + $0x4c] sm:$0xf]
      %v556 = vld [vmem:[%s3 + $0x50] sm:$0xf]
      %v557 = vld [vmem:[%s3 + $0x54] sm:$0xf]
      %v558 = vld [vmem:[%s3 + $0x58] sm:$0xf]
      %v559 = vld [vmem:[%s3 + $0x5c] sm:$0xf]
      %v560 = vld [vmem:[%s3 + $0x60] sm:$0xf]
      %v561 = vld [vmem:[%s3 + $0x64] sm:$0xf]
      %v562 = vld [vmem:[%s3 + $0x68] sm:$0xf]
      %v563 = vld [vmem:[%s3 + $0x6c] sm:$0xf]
      %v564 = vld [vmem:[%s3 + $0x70] sm:$0xf]
      %v565 = vld [vmem:[%s3 + $0x74] sm:$0xf]
      %v566 = vld [vmem:[%s3 + $0x78] sm:$0xf]
      %v567 = vld [vmem:[%s3 + $0x7c] sm:$0xf]
      %v568 = vld [vmem:[%s4] sm:$0xff]
      %v569 = vld [vmem:[%s4 + $0x8] sm:$0xff]
      %v570 = vld [vmem:[%s4 + $0x10] sm:$0xff]
      %v571 = vld [vmem:[%s4 + $0x18] sm:$0xff]
      %v572 = vld [vmem:[%s4 + $0x20] sm:$0xff]
      %v573 = vld [vmem:[%s4 + $0x28] sm:$0xff]
      %v574 = vld [vmem:[%s4 + $0x30] sm:$0xff]
      %v575 = vld [vmem:[%s4 + $0x38] sm:$0xff]
      %v576 = vld [vmem:[%s4 + $0x40] sm:$0xff]
      %v577 = vld [vmem:[%s4 + $0x48] sm:$0xff]
      %v578 = vld [vmem:[%s4 + $0x50] sm:$0xff]
      %v579 = vld [vmem:[%s4 + $0x58] sm:$0xff]
      %v580 = vld [vmem:[%s4 + $0x60] sm:$0xff]
      %v581 = vld [vmem:[%s4 + $0x68] sm:$0xff]
      %v582 = vld [vmem:[%s4 + $0x70] sm:$0xff]
      %v583 = vld [vmem:[%s4 + $0x78] sm:$0xff]
      %v584 = vld [vmem:[%s4 + $0x80] sm:$0xff]
      %v585 = vld [vmem:[%s4 + $0x88] sm:$0xff]
      %v586 = vld [vmem:[%s4 + $0x90] sm:$0xff]
      %v587 = vld [vmem:[%s4 + $0x98] sm:$0xff]
      %v588 = vld [vmem:[%s4 + $0xa0] sm:$0xff]
      %v589 = vld [vmem:[%s4 + $0xa8] sm:$0xff]
      %v590 = vld [vmem:[%s4 + $0xb0] sm:$0xff]
      %v591 = vld [vmem:[%s4 + $0xb8] sm:$0xff]
      %v592 = vld [vmem:[%s4 + $0xc0] sm:$0xff]
      %v593 = vld [vmem:[%s4 + $0xc8] sm:$0xff]
      %v594 = vld [vmem:[%s4 + $0xd0] sm:$0xff]
      %v595 = vld [vmem:[%s4 + $0xd8] sm:$0xff]
      %v596 = vld [vmem:[%s4 + $0xe0] sm:$0xff]
      %v597 = vld [vmem:[%s4 + $0xe8] sm:$0xff]
      %v598 = vld [vmem:[%s4 + $0xf0] sm:$0xff]
      %v599 = vld [vmem:[%s4 + $0xf8] sm:$0xff]
      %601 = vset.pattern.permute.xlu0 0
      %602 = vperm.xlu0 %601, %v568
      %v603 = vpop.permute.xlu0 %602
      %606 = vset.pattern.permute.xlu0 0
      %607 = vperm.xlu0 %606, %v569
      %v608 = vpop.permute.xlu0 %607
      %611 = vset.pattern.permute.xlu0 0
      %612 = vperm.xlu0 %611, %v570
      %v613 = vpop.permute.xlu0 %612
      %616 = vset.pattern.permute.xlu0 0
      %617 = vperm.xlu0 %616, %v571
      %v618 = vpop.permute.xlu0 %617
      %621 = vset.pattern.permute.xlu0 0
      %622 = vperm.xlu0 %621, %v572
      %v623 = vpop.permute.xlu0 %622
      %626 = vset.pattern.permute.xlu0 0
      %627 = vperm.xlu0 %626, %v573
      %v628 = vpop.permute.xlu0 %627
      %631 = vset.pattern.permute.xlu0 0
      %632 = vperm.xlu0 %631, %v574
      %v633 = vpop.permute.xlu0 %632
      %636 = vset.pattern.permute.xlu0 0
      %637 = vperm.xlu0 %636, %v575
      %v638 = vpop.permute.xlu0 %637
      %641 = vset.pattern.permute.xlu0 0
      %642 = vperm.xlu0 %641, %v576
      %v643 = vpop.permute.xlu0 %642
      %646 = vset.pattern.permute.xlu0 0
      %647 = vperm.xlu0 %646, %v577
      %v648 = vpop.permute.xlu0 %647
      %651 = vset.pattern.permute.xlu0 0
      %652 = vperm.xlu0 %651, %v578
      %v653 = vpop.permute.xlu0 %652
      %656 = vset.pattern.permute.xlu0 0
      %657 = vperm.xlu0 %656, %v579
      %v658 = vpop.permute.xlu0 %657
      %661 = vset.pattern.permute.xlu0 0
      %662 = vperm.xlu0 %661, %v580
      %v663 = vpop.permute.xlu0 %662
      %666 = vset.pattern.permute.xlu0 0
      %667 = vperm.xlu0 %666, %v581
      %v668 = vpop.permute.xlu0 %667
      %671 = vset.pattern.permute.xlu0 0
      %672 = vperm.xlu0 %671, %v582
      %v673 = vpop.permute.xlu0 %672
      %676 = vset.pattern.permute.xlu0 0
      %677 = vperm.xlu0 %676, %v583
      %v678 = vpop.permute.xlu0 %677
      %681 = vset.pattern.permute.xlu0 0
      %682 = vperm.xlu0 %681, %v584
      %v683 = vpop.permute.xlu0 %682
      %686 = vset.pattern.permute.xlu0 0
      %687 = vperm.xlu0 %686, %v585
      %v688 = vpop.permute.xlu0 %687
      %691 = vset.pattern.permute.xlu0 0
      %692 = vperm.xlu0 %691, %v586
      %v693 = vpop.permute.xlu0 %692
      %696 = vset.pattern.permute.xlu0 0
      %697 = vperm.xlu0 %696, %v587
      %v698 = vpop.permute.xlu0 %697
      %701 = vset.pattern.permute.xlu0 0
      %702 = vperm.xlu0 %701, %v588
      %v703 = vpop.permute.xlu0 %702
      %706 = vset.pattern.permute.xlu0 0
      %707 = vperm.xlu0 %706, %v589
      %v708 = vpop.permute.xlu0 %707
      %711 = vset.pattern.permute.xlu0 0
      %712 = vperm.xlu0 %711, %v590
      %v713 = vpop.permute.xlu0 %712
      %716 = vset.pattern.permute.xlu0 0
      %717 = vperm.xlu0 %716, %v591
      %v718 = vpop.permute.xlu0 %717
      %721 = vset.pattern.permute.xlu0 0
      %722 = vperm.xlu0 %721, %v592
      %v723 = vpop.permute.xlu0 %722
      %726 = vset.pattern.permute.xlu0 0
      %727 = vperm.xlu0 %726, %v593
      %v728 = vpop.permute.xlu0 %727
      %731 = vset.pattern.permute.xlu0 0
      %732 = vperm.xlu0 %731, %v594
      %v733 = vpop.permute.xlu0 %732
      %736 = vset.pattern.permute.xlu0 0
      %737 = vperm.xlu0 %736, %v595
      %v738 = vpop.permute.xlu0 %737
      %741 = vset.pattern.permute.xlu0 0
      %742 = vperm.xlu0 %741, %v596
      %v743 = vpop.permute.xlu0 %742
      %746 = vset.pattern.permute.xlu0 0
      %747 = vperm.xlu0 %746, %v597
      %v748 = vpop.permute.xlu0 %747
      %751 = vset.pattern.permute.xlu0 0
      %752 = vperm.xlu0 %751, %v598
      %v753 = vpop.permute.xlu0 %752
      %756 = vset.pattern.permute.xlu0 0
      %757 = vperm.xlu0 %756, %v599
      %v758 = vpop.permute.xlu0 %757
      %v792 = vunpack.c.l.b16 %v536
      %v793 = vunpack.c.l.b16 %v537
      %v794 = vunpack.c.l.b16 %v538
      %v795 = vunpack.c.l.b16 %v539
      %v796 = vunpack.c.l.b16 %v540
      %v797 = vunpack.c.l.b16 %v541
      %v798 = vunpack.c.l.b16 %v542
      %v799 = vunpack.c.l.b16 %v543
      %v800 = vunpack.c.l.b16 %v544
      %v801 = vunpack.c.l.b16 %v545
      %v802 = vunpack.c.l.b16 %v546
      %v803 = vunpack.c.l.b16 %v547
      %v804 = vunpack.c.l.b16 %v548
      %v805 = vunpack.c.l.b16 %v549
      %v806 = vunpack.c.l.b16 %v550
      %v807 = vunpack.c.l.b16 %v551
      %v808 = vunpack.c.l.b16 %v552
      %v809 = vunpack.c.l.b16 %v553
      %v810 = vunpack.c.l.b16 %v554
      %v811 = vunpack.c.l.b16 %v555
      %v812 = vunpack.c.l.b16 %v556
      %v813 = vunpack.c.l.b16 %v557
      %v814 = vunpack.c.l.b16 %v558
      %v815 = vunpack.c.l.b16 %v559
      %v816 = vunpack.c.l.b16 %v560
      %v817 = vunpack.c.l.b16 %v561
      %v818 = vunpack.c.l.b16 %v562
      %v819 = vunpack.c.l.b16 %v563
      %v820 = vunpack.c.l.b16 %v564
      %v821 = vunpack.c.l.b16 %v565
      %v822 = vunpack.c.l.b16 %v566
      %v823 = vunpack.c.l.b16 %v567
      %v824 = vpack.c.b16 %v793, %v792
      %v825 = vpack.c.b16 %v795, %v794
      %v826 = vpack.c.b16 %v797, %v796
      %v827 = vpack.c.b16 %v799, %v798
      %v828 = vpack.c.b16 %v801, %v800
      %v829 = vpack.c.b16 %v803, %v802
      %v830 = vpack.c.b16 %v805, %v804
      %v831 = vpack.c.b16 %v807, %v806
      %v832 = vpack.c.b16 %v809, %v808
      %v833 = vpack.c.b16 %v811, %v810
      %v834 = vpack.c.b16 %v813, %v812
      %v835 = vpack.c.b16 %v815, %v814
      %v836 = vpack.c.b16 %v817, %v816
      %v837 = vpack.c.b16 %v819, %v818
      %v838 = vpack.c.b16 %v821, %v820
      %v839 = vpack.c.b16 %v823, %v822
      %vm840 = vcmask 523264
      %v842 = vsel %vm840, %v824, 0
      %v845 = vsel %vm840, %v825, 0
      %v848 = vsel %vm840, %v826, 0
      %v851 = vsel %vm840, %v827, 0
      %v854 = vsel %vm840, %v828, 0
      %v857 = vsel %vm840, %v829, 0
      %v860 = vsel %vm840, %v830, 0
      %v863 = vsel %vm840, %v831, 0
      %v866 = vsel %vm840, %v832, 0
      %v869 = vsel %vm840, %v833, 0
      %v872 = vsel %vm840, %v834, 0
      %v875 = vsel %vm840, %v835, 0
      %v878 = vsel %vm840, %v836, 0
      %v881 = vsel %vm840, %v837, 0
      %v884 = vsel %vm840, %v838, 0
      %v887 = vsel %vm840, %v839, 0
      %889 = vmatprep.subr.bf16.mxu0 0
      %890 = vmatpush1.bf16.msra.mxu0 0
      %891 = vmatprep.subr.bf16.mxu0 0
      %892 = vmatpush1.bf16.msra.mxu0 0
      %893 = vmatprep.subr.bf16.mxu0 0
      %894 = vmatpush1.bf16.msra.mxu0 0
      %895 = vmatprep.subr.bf16.mxu0 0
      %896 = vmatpush1.bf16.msra.mxu0 0
      %897 = vmatprep.subr.bf16.mxu0 %v535
      %898 = vmatpush1.bf16.msra.mxu0 %v534
      %899 = vmatprep.subr.bf16.mxu0 %v533
      %900 = vmatpush1.bf16.msra.mxu0 %v532
      %901 = vmatprep.subr.bf16.mxu0 %v531
      %902 = vmatpush1.bf16.msra.mxu0 %v530
      %903 = vmatprep.subr.bf16.mxu0 %v529
      %904 = vmatpush1.bf16.msra.mxu0 %v528
      %905 = vmatprep.subr.bf16.mxu0 0
      %906 = vmatpush2.bf16.msra.mxu0 0
      %907 = vmatprep.subr.bf16.mxu0 0
      %908 = vmatpush2.bf16.msra.mxu0 0
      %909 = vmatprep.subr.bf16.mxu0 0
      %910 = vmatpush2.bf16.msra.mxu0 0
      %911 = vmatprep.subr.bf16.mxu0 0
      %912 = vmatpush2.bf16.msra.mxu0 0
      %913 = vmatprep.subr.bf16.mxu0 0
      %914 = vmatpush2.bf16.msra.mxu0 0
      %915 = vmatprep.subr.bf16.mxu0 0
      %916 = vmatpush2.bf16.msra.mxu0 0
      %917 = vmatprep.subr.bf16.mxu0 0
      %918 = vmatpush2.bf16.msra.mxu0 0
      %919 = vmatprep.subr.bf16.mxu0 0
      %920 = vmatpush2.bf16.msra.mxu0 0
      %921 = vmatprep.mubr.bf16.mxu0 0
      %922 = vmatmul.mubr.bf16.gmra.mxu0 %v842
      %v923 = vpop.f32.mrf.mxu0
      %v924 = vadd.f32 %v603, %v923
      %v925 = vpop.f32.mrf.mxu0
      %v926 = vadd.f32 %v603, %v925
      %v927 = vpop.f32.mrf.mxu0
      %v928 = vadd.f32 %v608, %v927
      %v929 = vpop.f32.mrf.mxu0
      %v930 = vadd.f32 %v608, %v929
      %931 = vmatprep.mubr.bf16.mxu0 0
      %932 = vmatmul.mubr.bf16.gmra.mxu0 %v845
      %v933 = vpop.f32.mrf.mxu0
      %v934 = vadd.f32 %v613, %v933
      %v935 = vpop.f32.mrf.mxu0
      %v936 = vadd.f32 %v613, %v935
      %v937 = vpop.f32.mrf.mxu0
      %v938 = vadd.f32 %v618, %v937
      %v939 = vpop.f32.mrf.mxu0
      %v940 = vadd.f32 %v618, %v939
      %941 = vmatprep.mubr.bf16.mxu0 0
      %942 = vmatmul.mubr.bf16.gmra.mxu0 %v848
      %v943 = vpop.f32.mrf.mxu0
      %v944 = vadd.f32 %v623, %v943
      %v945 = vpop.f32.mrf.mxu0
      %v946 = vadd.f32 %v623, %v945
      %v947 = vpop.f32.mrf.mxu0
      %v948 = vadd.f32 %v628, %v947
      %v949 = vpop.f32.mrf.mxu0
      %v950 = vadd.f32 %v628, %v949
      %951 = vmatprep.mubr.bf16.mxu0 0
      %952 = vmatmul.mubr.bf16.gmra.mxu0 %v851
      %v953 = vpop.f32.mrf.mxu0
      %v954 = vadd.f32 %v633, %v953
      %v955 = vpop.f32.mrf.mxu0
      %v956 = vadd.f32 %v633, %v955
      %v957 = vpop.f32.mrf.mxu0
      %v958 = vadd.f32 %v638, %v957
      %v959 = vpop.f32.mrf.mxu0
      %v960 = vadd.f32 %v638, %v959
      %961 = vmatprep.mubr.bf16.mxu0 0
      %962 = vmatmul.mubr.bf16.gmra.mxu0 %v854
      %v963 = vpop.f32.mrf.mxu0
      %v964 = vadd.f32 %v643, %v963
      %v965 = vpop.f32.mrf.mxu0
      %v966 = vadd.f32 %v643, %v965
      %v967 = vpop.f32.mrf.mxu0
      %v968 = vadd.f32 %v648, %v967
      %v969 = vpop.f32.mrf.mxu0
      %v970 = vadd.f32 %v648, %v969
      %971 = vmatprep.mubr.bf16.mxu0 0
      %972 = vmatmul.mubr.bf16.gmra.mxu0 %v857
      %v973 = vpop.f32.mrf.mxu0
      %v974 = vadd.f32 %v653, %v973
      %v975 = vpop.f32.mrf.mxu0
      %v976 = vadd.f32 %v653, %v975
      %v977 = vpop.f32.mrf.mxu0
      %v978 = vadd.f32 %v658, %v977
      %v979 = vpop.f32.mrf.mxu0
      %v980 = vadd.f32 %v658, %v979
      %981 = vmatprep.mubr.bf16.mxu0 0
      %982 = vmatmul.mubr.bf16.gmra.mxu0 %v860
      %v983 = vpop.f32.mrf.mxu0
      %v984 = vadd.f32 %v663, %v983
      %v985 = vpop.f32.mrf.mxu0
      %v986 = vadd.f32 %v663, %v985
      %v987 = vpop.f32.mrf.mxu0
      %v988 = vadd.f32 %v668, %v987
      %v989 = vpop.f32.mrf.mxu0
      %v990 = vadd.f32 %v668, %v989
      %991 = vmatprep.mubr.bf16.mxu0 0
      %992 = vmatmul.mubr.bf16.gmra.mxu0 %v863
      %v993 = vpop.f32.mrf.mxu0
      %v994 = vadd.f32 %v673, %v993
      %v995 = vpop.f32.mrf.mxu0
      %v996 = vadd.f32 %v673, %v995
      %v997 = vpop.f32.mrf.mxu0
      %v998 = vadd.f32 %v678, %v997
      %v999 = vpop.f32.mrf.mxu0
      %v1000 = vadd.f32 %v678, %v999
      %1001 = vmatprep.mubr.bf16.mxu0 0
      %1002 = vmatmul.mubr.bf16.gmra.mxu0 %v866
      %v1003 = vpop.f32.mrf.mxu0
      %v1004 = vadd.f32 %v683, %v1003
      %v1005 = vpop.f32.mrf.mxu0
      %v1006 = vadd.f32 %v683, %v1005
      %v1007 = vpop.f32.mrf.mxu0
      %v1008 = vadd.f32 %v688, %v1007
      %v1009 = vpop.f32.mrf.mxu0
      %v1010 = vadd.f32 %v688, %v1009
      %1011 = vmatprep.mubr.bf16.mxu0 0
      %1012 = vmatmul.mubr.bf16.gmra.mxu0 %v869
      %v1013 = vpop.f32.mrf.mxu0
      %v1014 = vadd.f32 %v693, %v1013
      %v1015 = vpop.f32.mrf.mxu0
      %v1016 = vadd.f32 %v693, %v1015
      %v1017 = vpop.f32.mrf.mxu0
      %v1018 = vadd.f32 %v698, %v1017
      %v1019 = vpop.f32.mrf.mxu0
      %v1020 = vadd.f32 %v698, %v1019
      %1021 = vmatprep.mubr.bf16.mxu0 0
      %1022 = vmatmul.mubr.bf16.gmra.mxu0 %v872
      %v1023 = vpop.f32.mrf.mxu0
      %v1024 = vadd.f32 %v703, %v1023
      %v1025 = vpop.f32.mrf.mxu0
      %v1026 = vadd.f32 %v703, %v1025
      %v1027 = vpop.f32.mrf.mxu0
      %v1028 = vadd.f32 %v708, %v1027
      %v1029 = vpop.f32.mrf.mxu0
      %v1030 = vadd.f32 %v708, %v1029
      %1031 = vmatprep.mubr.bf16.mxu0 0
      %1032 = vmatmul.mubr.bf16.gmra.mxu0 %v875
      %v1033 = vpop.f32.mrf.mxu0
      %v1034 = vadd.f32 %v713, %v1033
      %v1035 = vpop.f32.mrf.mxu0
      %v1036 = vadd.f32 %v713, %v1035
      %v1037 = vpop.f32.mrf.mxu0
      %v1038 = vadd.f32 %v718, %v1037
      %v1039 = vpop.f32.mrf.mxu0
      %v1040 = vadd.f32 %v718, %v1039
      %1041 = vmatprep.mubr.bf16.mxu0 0
      %1042 = vmatmul.mubr.bf16.gmra.mxu0 %v878
      %v1043 = vpop.f32.mrf.mxu0
      %v1044 = vadd.f32 %v723, %v1043
      %v1045 = vpop.f32.mrf.mxu0
      %v1046 = vadd.f32 %v723, %v1045
      %v1047 = vpop.f32.mrf.mxu0
      %v1048 = vadd.f32 %v728, %v1047
      %v1049 = vpop.f32.mrf.mxu0
      %v1050 = vadd.f32 %v728, %v1049
      %1051 = vmatprep.mubr.bf16.mxu0 0
      %1052 = vmatmul.mubr.bf16.gmra.mxu0 %v881
      %v1053 = vpop.f32.mrf.mxu0
      %v1054 = vadd.f32 %v733, %v1053
      %v1055 = vpop.f32.mrf.mxu0
      %v1056 = vadd.f32 %v733, %v1055
      %v1057 = vpop.f32.mrf.mxu0
      %v1058 = vadd.f32 %v738, %v1057
      %v1059 = vpop.f32.mrf.mxu0
      %v1060 = vadd.f32 %v738, %v1059
      %1061 = vmatprep.mubr.bf16.mxu0 0
      %1062 = vmatmul.mubr.bf16.gmra.mxu0 %v884
      %v1063 = vpop.f32.mrf.mxu0
      %v1064 = vadd.f32 %v743, %v1063
      %v1065 = vpop.f32.mrf.mxu0
      %v1066 = vadd.f32 %v743, %v1065
      %v1067 = vpop.f32.mrf.mxu0
      %v1068 = vadd.f32 %v748, %v1067
      %v1069 = vpop.f32.mrf.mxu0
      %v1070 = vadd.f32 %v748, %v1069
      %1071 = vmatprep.mubr.bf16.mxu0 0
      %1072 = vmatmul.mubr.bf16.gmra.mxu0 %v887
      %v1073 = vpop.f32.mrf.mxu0
      %v1074 = vadd.f32 %v753, %v1073
      %v1075 = vpop.f32.mrf.mxu0
      %v1076 = vadd.f32 %v753, %v1075
      %v1077 = vpop.f32.mrf.mxu0
      %v1078 = vadd.f32 %v758, %v1077
      %v1079 = vpop.f32.mrf.mxu0
      %v1080 = vadd.f32 %v758, %v1079
      %1081 = vdwg.mxu0
      %v1082 = vmax.f32 %v924, 0.0
      %v1083 = vmax.f32 %v926, 0.0
      %v1084 = vmax.f32 %v928, 0.0
      %v1085 = vmax.f32 %v930, 0.0
      %v1086 = vmax.f32 %v934, 0.0
      %v1087 = vmax.f32 %v936, 0.0
      %v1088 = vmax.f32 %v938, 0.0
      %v1089 = vmax.f32 %v940, 0.0
      %v1090 = vmax.f32 %v944, 0.0
      %v1091 = vmax.f32 %v946, 0.0
      %v1092 = vmax.f32 %v948, 0.0
      %v1093 = vmax.f32 %v950, 0.0
      %v1094 = vmax.f32 %v954, 0.0
      %v1095 = vmax.f32 %v956, 0.0
      %v1096 = vmax.f32 %v958, 0.0
      %v1097 = vmax.f32 %v960, 0.0
      %v1098 = vmax.f32 %v964, 0.0
      %v1099 = vmax.f32 %v966, 0.0
      %v1100 = vmax.f32 %v968, 0.0
      %v1101 = vmax.f32 %v970, 0.0
      %v1102 = vmax.f32 %v974, 0.0
      %v1103 = vmax.f32 %v976, 0.0
      %v1104 = vmax.f32 %v978, 0.0
      %v1105 = vmax.f32 %v980, 0.0
      %v1106 = vmax.f32 %v984, 0.0
      %v1107 = vmax.f32 %v986, 0.0
      %v1108 = vmax.f32 %v988, 0.0
      %v1109 = vmax.f32 %v990, 0.0
      %v1110 = vmax.f32 %v994, 0.0
      %v1111 = vmax.f32 %v996, 0.0
      %v1112 = vmax.f32 %v998, 0.0
      %v1113 = vmax.f32 %v1000, 0.0
      %v1114 = vmax.f32 %v1004, 0.0
      %v1115 = vmax.f32 %v1006, 0.0
      %v1116 = vmax.f32 %v1008, 0.0
      %v1117 = vmax.f32 %v1010, 0.0
      %v1118 = vmax.f32 %v1014, 0.0
      %v1119 = vmax.f32 %v1016, 0.0
      %v1120 = vmax.f32 %v1018, 0.0
      %v1121 = vmax.f32 %v1020, 0.0
      %v1122 = vmax.f32 %v1024, 0.0
      %v1123 = vmax.f32 %v1026, 0.0
      %v1124 = vmax.f32 %v1028, 0.0
      %v1125 = vmax.f32 %v1030, 0.0
      %v1126 = vmax.f32 %v1034, 0.0
      %v1127 = vmax.f32 %v1036, 0.0
      %v1128 = vmax.f32 %v1038, 0.0
      %v1129 = vmax.f32 %v1040, 0.0
      %v1130 = vmax.f32 %v1044, 0.0
      %v1131 = vmax.f32 %v1046, 0.0
      %v1132 = vmax.f32 %v1048, 0.0
      %v1133 = vmax.f32 %v1050, 0.0
      %v1134 = vmax.f32 %v1054, 0.0
      %v1135 = vmax.f32 %v1056, 0.0
      %v1136 = vmax.f32 %v1058, 0.0
      %v1137 = vmax.f32 %v1060, 0.0
      %v1138 = vmax.f32 %v1064, 0.0
      %v1139 = vmax.f32 %v1066, 0.0
      %v1140 = vmax.f32 %v1068, 0.0
      %v1141 = vmax.f32 %v1070, 0.0
      %v1142 = vmax.f32 %v1074, 0.0
      %v1143 = vmax.f32 %v1076, 0.0
      %v1144 = vmax.f32 %v1078, 0.0
      %v1145 = vmax.f32 %v1080, 0.0
      %v1146 = vpack.c.bf16 %v1084, %v1082
      %v1147 = vpack.c.bf16 %v1085, %v1083
      %v1148 = vpack.c.bf16 %v1088, %v1086
      %v1149 = vpack.c.bf16 %v1089, %v1087
      %v1150 = vpack.c.bf16 %v1092, %v1090
      %v1151 = vpack.c.bf16 %v1093, %v1091
      %v1152 = vpack.c.bf16 %v1096, %v1094
      %v1153 = vpack.c.bf16 %v1097, %v1095
      %v1154 = vpack.c.bf16 %v1100, %v1098
      %v1155 = vpack.c.bf16 %v1101, %v1099
      %v1156 = vpack.c.bf16 %v1104, %v1102
      %v1157 = vpack.c.bf16 %v1105, %v1103
      %v1158 = vpack.c.bf16 %v1108, %v1106
      %v1159 = vpack.c.bf16 %v1109, %v1107
      %v1160 = vpack.c.bf16 %v1112, %v1110
      %v1161 = vpack.c.bf16 %v1113, %v1111
      %v1162 = vpack.c.bf16 %v1116, %v1114
      %v1163 = vpack.c.bf16 %v1117, %v1115
      %v1164 = vpack.c.bf16 %v1120, %v1118
      %v1165 = vpack.c.bf16 %v1121, %v1119
      %v1166 = vpack.c.bf16 %v1124, %v1122
      %v1167 = vpack.c.bf16 %v1125, %v1123
      %v1168 = vpack.c.bf16 %v1128, %v1126
      %v1169 = vpack.c.bf16 %v1129, %v1127
      %v1170 = vpack.c.bf16 %v1132, %v1130
      %v1171 = vpack.c.bf16 %v1133, %v1131
      %v1172 = vpack.c.bf16 %v1136, %v1134
      %v1173 = vpack.c.bf16 %v1137, %v1135
      %v1174 = vpack.c.bf16 %v1140, %v1138
      %v1175 = vpack.c.bf16 %v1141, %v1139
      %v1176 = vpack.c.bf16 %v1144, %v1142
      %v1177 = vpack.c.bf16 %v1145, %v1143
      %v1178 = vld [vmem:[%s5] sm:$0xff]
      %v1179 = vld [vmem:[%s5 + $0x8] sm:$0xff]
      %v1180 = vld [vmem:[%s5 + $0x10] sm:$0xff]
      %v1181 = vld [vmem:[%s5 + $0x18] sm:$0xff]
      %s1182 = scalar_lea.vmem %s3, 128
      %v1183 = vld [vmem:[%s1182] sm:$0xf]
      %v1184 = vld [vmem:[%s1182 + $0x4] sm:$0xf]
      %v1185 = vld [vmem:[%s1182 + $0x8] sm:$0xf]
      %v1186 = vld [vmem:[%s1182 + $0xc] sm:$0xf]
      %v1187 = vld [vmem:[%s1182 + $0x10] sm:$0xf]
      %v1188 = vld [vmem:[%s1182 + $0x14] sm:$0xf]
      %v1189 = vld [vmem:[%s1182 + $0x18] sm:$0xf]
      %v1190 = vld [vmem:[%s1182 + $0x1c] sm:$0xf]
      %v1191 = vld [vmem:[%s1182 + $0x20] sm:$0xf]
      %v1192 = vld [vmem:[%s1182 + $0x24] sm:$0xf]
      %v1193 = vld [vmem:[%s1182 + $0x28] sm:$0xf]
      %v1194 = vld [vmem:[%s1182 + $0x2c] sm:$0xf]
      %v1195 = vld [vmem:[%s1182 + $0x30] sm:$0xf]
      %v1196 = vld [vmem:[%s1182 + $0x34] sm:$0xf]
      %v1197 = vld [vmem:[%s1182 + $0x38] sm:$0xf]
      %v1198 = vld [vmem:[%s1182 + $0x3c] sm:$0xf]
      %v1199 = vld [vmem:[%s1182 + $0x40] sm:$0xf]
      %v1200 = vld [vmem:[%s1182 + $0x44] sm:$0xf]
      %v1201 = vld [vmem:[%s1182 + $0x48] sm:$0xf]
      %v1202 = vld [vmem:[%s1182 + $0x4c] sm:$0xf]
      %v1203 = vld [vmem:[%s1182 + $0x50] sm:$0xf]
      %v1204 = vld [vmem:[%s1182 + $0x54] sm:$0xf]
      %v1205 = vld [vmem:[%s1182 + $0x58] sm:$0xf]
      %v1206 = vld [vmem:[%s1182 + $0x5c] sm:$0xf]
      %v1207 = vld [vmem:[%s1182 + $0x60] sm:$0xf]
      %v1208 = vld [vmem:[%s1182 + $0x64] sm:$0xf]
      %v1209 = vld [vmem:[%s1182 + $0x68] sm:$0xf]
      %v1210 = vld [vmem:[%s1182 + $0x6c] sm:$0xf]
      %v1211 = vld [vmem:[%s1182 + $0x70] sm:$0xf]
      %v1212 = vld [vmem:[%s1182 + $0x74] sm:$0xf]
      %v1213 = vld [vmem:[%s1182 + $0x78] sm:$0xf]
      %v1214 = vld [vmem:[%s1182 + $0x7c] sm:$0xf]
      %s1215 = scalar_lea.vmem %s4, 256
      %v1216 = vld [vmem:[%s1215] sm:$0xff]
      %v1217 = vld [vmem:[%s1215 + $0x8] sm:$0xff]
      %v1218 = vld [vmem:[%s1215 + $0x10] sm:$0xff]
      %v1219 = vld [vmem:[%s1215 + $0x18] sm:$0xff]
      %v1220 = vld [vmem:[%s1215 + $0x20] sm:$0xff]
      %v1221 = vld [vmem:[%s1215 + $0x28] sm:$0xff]
      %v1222 = vld [vmem:[%s1215 + $0x30] sm:$0xff]
      %v1223 = vld [vmem:[%s1215 + $0x38] sm:$0xff]
      %v1224 = vld [vmem:[%s1215 + $0x40] sm:$0xff]
      %v1225 = vld [vmem:[%s1215 + $0x48] sm:$0xff]
      %v1226 = vld [vmem:[%s1215 + $0x50] sm:$0xff]
      %v1227 = vld [vmem:[%s1215 + $0x58] sm:$0xff]
      %v1228 = vld [vmem:[%s1215 + $0x60] sm:$0xff]
      %v1229 = vld [vmem:[%s1215 + $0x68] sm:$0xff]
      %v1230 = vld [vmem:[%s1215 + $0x70] sm:$0xff]
      %v1231 = vld [vmem:[%s1215 + $0x78] sm:$0xff]
      %v1232 = vld [vmem:[%s1215 + $0x80] sm:$0xff]
      %v1233 = vld [vmem:[%s1215 + $0x88] sm:$0xff]
      %v1234 = vld [vmem:[%s1215 + $0x90] sm:$0xff]
      %v1235 = vld [vmem:[%s1215 + $0x98] sm:$0xff]
      %v1236 = vld [vmem:[%s1215 + $0xa0] sm:$0xff]
      %v1237 = vld [vmem:[%s1215 + $0xa8] sm:$0xff]
      %v1238 = vld [vmem:[%s1215 + $0xb0] sm:$0xff]
      %v1239 = vld [vmem:[%s1215 + $0xb8] sm:$0xff]
      %v1240 = vld [vmem:[%s1215 + $0xc0] sm:$0xff]
      %v1241 = vld [vmem:[%s1215 + $0xc8] sm:$0xff]
      %v1242 = vld [vmem:[%s1215 + $0xd0] sm:$0xff]
      %v1243 = vld [vmem:[%s1215 + $0xd8] sm:$0xff]
      %v1244 = vld [vmem:[%s1215 + $0xe0] sm:$0xff]
      %v1245 = vld [vmem:[%s1215 + $0xe8] sm:$0xff]
      %v1246 = vld [vmem:[%s1215 + $0xf0] sm:$0xff]
      %v1247 = vld [vmem:[%s1215 + $0xf8] sm:$0xff]
      %1249 = vset.pattern.permute.xlu0 0
      %1250 = vperm.xlu0 %1249, %v1216
      %v1251 = vpop.permute.xlu0 %1250
      %1254 = vset.pattern.permute.xlu0 0
      %1255 = vperm.xlu0 %1254, %v1217
      %v1256 = vpop.permute.xlu0 %1255
      %1259 = vset.pattern.permute.xlu0 0
      %1260 = vperm.xlu0 %1259, %v1218
      %v1261 = vpop.permute.xlu0 %1260
      %1264 = vset.pattern.permute.xlu0 0
      %1265 = vperm.xlu0 %1264, %v1219
      %v1266 = vpop.permute.xlu0 %1265
      %1269 = vset.pattern.permute.xlu0 0
      %1270 = vperm.xlu0 %1269, %v1220
      %v1271 = vpop.permute.xlu0 %1270
      %1274 = vset.pattern.permute.xlu0 0
      %1275 = vperm.xlu0 %1274, %v1221
      %v1276 = vpop.permute.xlu0 %1275
      %1279 = vset.pattern.permute.xlu0 0
      %1280 = vperm.xlu0 %1279, %v1222
      %v1281 = vpop.permute.xlu0 %1280
      %1284 = vset.pattern.permute.xlu0 0
      %1285 = vperm.xlu0 %1284, %v1223
      %v1286 = vpop.permute.xlu0 %1285
      %1289 = vset.pattern.permute.xlu0 0
      %1290 = vperm.xlu0 %1289, %v1224
      %v1291 = vpop.permute.xlu0 %1290
      %1294 = vset.pattern.permute.xlu0 0
      %1295 = vperm.xlu0 %1294, %v1225
      %v1296 = vpop.permute.xlu0 %1295
      %1299 = vset.pattern.permute.xlu0 0
      %1300 = vperm.xlu0 %1299, %v1226
      %v1301 = vpop.permute.xlu0 %1300
      %1304 = vset.pattern.permute.xlu0 0
      %1305 = vperm.xlu0 %1304, %v1227
      %v1306 = vpop.permute.xlu0 %1305
      %1309 = vset.pattern.permute.xlu0 0
      %1310 = vperm.xlu0 %1309, %v1228
      %v1311 = vpop.permute.xlu0 %1310
      %1314 = vset.pattern.permute.xlu0 0
      %1315 = vperm.xlu0 %1314, %v1229
      %v1316 = vpop.permute.xlu0 %1315
      %1319 = vset.pattern.permute.xlu0 0
      %1320 = vperm.xlu0 %1319, %v1230
      %v1321 = vpop.permute.xlu0 %1320
      %1324 = vset.pattern.permute.xlu0 0
      %1325 = vperm.xlu0 %1324, %v1231
      %v1326 = vpop.permute.xlu0 %1325
      %1329 = vset.pattern.permute.xlu0 0
      %1330 = vperm.xlu0 %1329, %v1232
      %v1331 = vpop.permute.xlu0 %1330
      %1334 = vset.pattern.permute.xlu0 0
      %1335 = vperm.xlu0 %1334, %v1233
      %v1336 = vpop.permute.xlu0 %1335
      %1339 = vset.pattern.permute.xlu0 0
      %1340 = vperm.xlu0 %1339, %v1234
      %v1341 = vpop.permute.xlu0 %1340
      %1344 = vset.pattern.permute.xlu0 0
      %1345 = vperm.xlu0 %1344, %v1235
      %v1346 = vpop.permute.xlu0 %1345
      %1349 = vset.pattern.permute.xlu0 0
      %1350 = vperm.xlu0 %1349, %v1236
      %v1351 = vpop.permute.xlu0 %1350
      %1354 = vset.pattern.permute.xlu0 0
      %1355 = vperm.xlu0 %1354, %v1237
      %v1356 = vpop.permute.xlu0 %1355
      %1359 = vset.pattern.permute.xlu0 0
      %1360 = vperm.xlu0 %1359, %v1238
      %v1361 = vpop.permute.xlu0 %1360
      %1364 = vset.pattern.permute.xlu0 0
      %1365 = vperm.xlu0 %1364, %v1239
      %v1366 = vpop.permute.xlu0 %1365
      %1369 = vset.pattern.permute.xlu0 0
      %1370 = vperm.xlu0 %1369, %v1240
      %v1371 = vpop.permute.xlu0 %1370
      %1374 = vset.pattern.permute.xlu0 0
      %1375 = vperm.xlu0 %1374, %v1241
      %v1376 = vpop.permute.xlu0 %1375
      %1379 = vset.pattern.permute.xlu0 0
      %1380 = vperm.xlu0 %1379, %v1242
      %v1381 = vpop.permute.xlu0 %1380
      %1384 = vset.pattern.permute.xlu0 0
      %1385 = vperm.xlu0 %1384, %v1243
      %v1386 = vpop.permute.xlu0 %1385
      %1389 = vset.pattern.permute.xlu0 0
      %1390 = vperm.xlu0 %1389, %v1244
      %v1391 = vpop.permute.xlu0 %1390
      %1394 = vset.pattern.permute.xlu0 0
      %1395 = vperm.xlu0 %1394, %v1245
      %v1396 = vpop.permute.xlu0 %1395
      %1399 = vset.pattern.permute.xlu0 0
      %1400 = vperm.xlu0 %1399, %v1246
      %v1401 = vpop.permute.xlu0 %1400
      %1404 = vset.pattern.permute.xlu0 0
      %1405 = vperm.xlu0 %1404, %v1247
      %v1406 = vpop.permute.xlu0 %1405
      %v1440 = vunpack.c.l.b16 %v1183
      %v1441 = vunpack.c.l.b16 %v1184
      %v1442 = vunpack.c.l.b16 %v1185
      %v1443 = vunpack.c.l.b16 %v1186
      %v1444 = vunpack.c.l.b16 %v1187
      %v1445 = vunpack.c.l.b16 %v1188
      %v1446 = vunpack.c.l.b16 %v1189
      %v1447 = vunpack.c.l.b16 %v1190
      %v1448 = vunpack.c.l.b16 %v1191
      %v1449 = vunpack.c.l.b16 %v1192
      %v1450 = vunpack.c.l.b16 %v1193
      %v1451 = vunpack.c.l.b16 %v1194
      %v1452 = vunpack.c.l.b16 %v1195
      %v1453 = vunpack.c.l.b16 %v1196
      %v1454 = vunpack.c.l.b16 %v1197
      %v1455 = vunpack.c.l.b16 %v1198
      %v1456 = vunpack.c.l.b16 %v1199
      %v1457 = vunpack.c.l.b16 %v1200
      %v1458 = vunpack.c.l.b16 %v1201
      %v1459 = vunpack.c.l.b16 %v1202
      %v1460 = vunpack.c.l.b16 %v1203
      %v1461 = vunpack.c.l.b16 %v1204
      %v1462 = vunpack.c.l.b16 %v1205
      %v1463 = vunpack.c.l.b16 %v1206
      %v1464 = vunpack.c.l.b16 %v1207
      %v1465 = vunpack.c.l.b16 %v1208
      %v1466 = vunpack.c.l.b16 %v1209
      %v1467 = vunpack.c.l.b16 %v1210
      %v1468 = vunpack.c.l.b16 %v1211
      %v1469 = vunpack.c.l.b16 %v1212
      %v1470 = vunpack.c.l.b16 %v1213
      %v1471 = vunpack.c.l.b16 %v1214
      %v1472 = vpack.c.b16 %v1441, %v1440
      %v1473 = vpack.c.b16 %v1443, %v1442
      %v1474 = vpack.c.b16 %v1445, %v1444
      %v1475 = vpack.c.b16 %v1447, %v1446
      %v1476 = vpack.c.b16 %v1449, %v1448
      %v1477 = vpack.c.b16 %v1451, %v1450
      %v1478 = vpack.c.b16 %v1453, %v1452
      %v1479 = vpack.c.b16 %v1455, %v1454
      %v1480 = vpack.c.b16 %v1457, %v1456
      %v1481 = vpack.c.b16 %v1459, %v1458
      %v1482 = vpack.c.b16 %v1461, %v1460
      %v1483 = vpack.c.b16 %v1463, %v1462
      %v1484 = vpack.c.b16 %v1465, %v1464
      %v1485 = vpack.c.b16 %v1467, %v1466
      %v1486 = vpack.c.b16 %v1469, %v1468
      %v1487 = vpack.c.b16 %v1471, %v1470
      %v1489 = vsel %vm840, %v1472, 0
      %v1492 = vsel %vm840, %v1473, 0
      %v1495 = vsel %vm840, %v1474, 0
      %v1498 = vsel %vm840, %v1475, 0
      %v1501 = vsel %vm840, %v1476, 0
      %v1504 = vsel %vm840, %v1477, 0
      %v1507 = vsel %vm840, %v1478, 0
      %v1510 = vsel %vm840, %v1479, 0
      %v1513 = vsel %vm840, %v1480, 0
      %v1516 = vsel %vm840, %v1481, 0
      %v1519 = vsel %vm840, %v1482, 0
      %v1522 = vsel %vm840, %v1483, 0
      %v1525 = vsel %vm840, %v1484, 0
      %v1528 = vsel %vm840, %v1485, 0
      %v1531 = vsel %vm840, %v1486, 0
      %v1534 = vsel %vm840, %v1487, 0
      %1536 = vmatprep.subr.bf16.mxu0 0
      %1537 = vmatpush1.bf16.msra.mxu0 0
      %1538 = vmatprep.subr.bf16.mxu0 0
      %1539 = vmatpush1.bf16.msra.mxu0 0
      %1540 = vmatprep.subr.bf16.mxu0 0
      %1541 = vmatpush1.bf16.msra.mxu0 0
      %1542 = vmatprep.subr.bf16.mxu0 0
      %1543 = vmatpush1.bf16.msra.mxu0 0
      %1544 = vmatprep.subr.bf16.mxu0 %v535
      %1545 = vmatpush1.bf16.msra.mxu0 %v534
      %1546 = vmatprep.subr.bf16.mxu0 %v533
      %1547 = vmatpush1.bf16.msra.mxu0 %v532
      %1548 = vmatprep.subr.bf16.mxu0 %v531
      %1549 = vmatpush1.bf16.msra.mxu0 %v530
      %1550 = vmatprep.subr.bf16.mxu0 %v529
      %1551 = vmatpush1.bf16.msra.mxu0 %v528
      %1552 = vmatprep.subr.bf16.mxu0 0
      %1553 = vmatpush2.bf16.msra.mxu0 0
      %1554 = vmatprep.subr.bf16.mxu0 0
      %1555 = vmatpush2.bf16.msra.mxu0 0
      %1556 = vmatprep.subr.bf16.mxu0 0
      %1557 = vmatpush2.bf16.msra.mxu0 0
      %1558 = vmatprep.subr.bf16.mxu0 0
      %1559 = vmatpush2.bf16.msra.mxu0 0
      %1560 = vmatprep.subr.bf16.mxu0 0
      %1561 = vmatpush2.bf16.msra.mxu0 0
      %1562 = vmatprep.subr.bf16.mxu0 0
      %1563 = vmatpush2.bf16.msra.mxu0 0
      %1564 = vmatprep.subr.bf16.mxu0 0
      %1565 = vmatpush2.bf16.msra.mxu0 0
      %1566 = vmatprep.subr.bf16.mxu0 0
      %1567 = vmatpush2.bf16.msra.mxu0 0
      %1568 = vmatprep.mubr.bf16.mxu0 0
      %1569 = vmatmul.mubr.bf16.gmra.mxu0 %v1489
      %v1570 = vpop.f32.mrf.mxu0
      %v1571 = vadd.f32 %v1251, %v1570
      %v1572 = vpop.f32.mrf.mxu0
      %v1573 = vadd.f32 %v1251, %v1572
      %v1574 = vpop.f32.mrf.mxu0
      %v1575 = vadd.f32 %v1256, %v1574
      %v1576 = vpop.f32.mrf.mxu0
      %v1577 = vadd.f32 %v1256, %v1576
      %1578 = vmatprep.mubr.bf16.mxu0 0
      %1579 = vmatmul.mubr.bf16.gmra.mxu0 %v1492
      %v1580 = vpop.f32.mrf.mxu0
      %v1581 = vadd.f32 %v1261, %v1580
      %v1582 = vpop.f32.mrf.mxu0
      %v1583 = vadd.f32 %v1261, %v1582
      %v1584 = vpop.f32.mrf.mxu0
      %v1585 = vadd.f32 %v1266, %v1584
      %v1586 = vpop.f32.mrf.mxu0
      %v1587 = vadd.f32 %v1266, %v1586
      %1588 = vmatprep.mubr.bf16.mxu0 0
      %1589 = vmatmul.mubr.bf16.gmra.mxu0 %v1495
      %v1590 = vpop.f32.mrf.mxu0
      %v1591 = vadd.f32 %v1271, %v1590
      %v1592 = vpop.f32.mrf.mxu0
      %v1593 = vadd.f32 %v1271, %v1592
      %v1594 = vpop.f32.mrf.mxu0
      %v1595 = vadd.f32 %v1276, %v1594
      %v1596 = vpop.f32.mrf.mxu0
      %v1597 = vadd.f32 %v1276, %v1596
      %1598 = vmatprep.mubr.bf16.mxu0 0
      %1599 = vmatmul.mubr.bf16.gmra.mxu0 %v1498
      %v1600 = vpop.f32.mrf.mxu0
      %v1601 = vadd.f32 %v1281, %v1600
      %v1602 = vpop.f32.mrf.mxu0
      %v1603 = vadd.f32 %v1281, %v1602
      %v1604 = vpop.f32.mrf.mxu0
      %v1605 = vadd.f32 %v1286, %v1604
      %v1606 = vpop.f32.mrf.mxu0
      %v1607 = vadd.f32 %v1286, %v1606
      %1608 = vmatprep.mubr.bf16.mxu0 0
      %1609 = vmatmul.mubr.bf16.gmra.mxu0 %v1501
      %v1610 = vpop.f32.mrf.mxu0
      %v1611 = vadd.f32 %v1291, %v1610
      %v1612 = vpop.f32.mrf.mxu0
      %v1613 = vadd.f32 %v1291, %v1612
      %v1614 = vpop.f32.mrf.mxu0
      %v1615 = vadd.f32 %v1296, %v1614
      %v1616 = vpop.f32.mrf.mxu0
      %v1617 = vadd.f32 %v1296, %v1616
      %1618 = vmatprep.mubr.bf16.mxu0 0
      %1619 = vmatmul.mubr.bf16.gmra.mxu0 %v1504
      %v1620 = vpop.f32.mrf.mxu0
      %v1621 = vadd.f32 %v1301, %v1620
      %v1622 = vpop.f32.mrf.mxu0
      %v1623 = vadd.f32 %v1301, %v1622
      %v1624 = vpop.f32.mrf.mxu0
      %v1625 = vadd.f32 %v1306, %v1624
      %v1626 = vpop.f32.mrf.mxu0
      %v1627 = vadd.f32 %v1306, %v1626
      %1628 = vmatprep.mubr.bf16.mxu0 0
      %1629 = vmatmul.mubr.bf16.gmra.mxu0 %v1507
      %v1630 = vpop.f32.mrf.mxu0
      %v1631 = vadd.f32 %v1311, %v1630
      %v1632 = vpop.f32.mrf.mxu0
      %v1633 = vadd.f32 %v1311, %v1632
      %v1634 = vpop.f32.mrf.mxu0
      %v1635 = vadd.f32 %v1316, %v1634
      %v1636 = vpop.f32.mrf.mxu0
      %v1637 = vadd.f32 %v1316, %v1636
      %1638 = vmatprep.mubr.bf16.mxu0 0
      %1639 = vmatmul.mubr.bf16.gmra.mxu0 %v1510
      %v1640 = vpop.f32.mrf.mxu0
      %v1641 = vadd.f32 %v1321, %v1640
      %v1642 = vpop.f32.mrf.mxu0
      %v1643 = vadd.f32 %v1321, %v1642
      %v1644 = vpop.f32.mrf.mxu0
      %v1645 = vadd.f32 %v1326, %v1644
      %v1646 = vpop.f32.mrf.mxu0
      %v1647 = vadd.f32 %v1326, %v1646
      %1648 = vmatprep.mubr.bf16.mxu0 0
      %1649 = vmatmul.mubr.bf16.gmra.mxu0 %v1513
      %v1650 = vpop.f32.mrf.mxu0
      %v1651 = vadd.f32 %v1331, %v1650
      %v1652 = vpop.f32.mrf.mxu0
      %v1653 = vadd.f32 %v1331, %v1652
      %v1654 = vpop.f32.mrf.mxu0
      %v1655 = vadd.f32 %v1336, %v1654
      %v1656 = vpop.f32.mrf.mxu0
      %v1657 = vadd.f32 %v1336, %v1656
      %1658 = vmatprep.mubr.bf16.mxu0 0
      %1659 = vmatmul.mubr.bf16.gmra.mxu0 %v1516
      %v1660 = vpop.f32.mrf.mxu0
      %v1661 = vadd.f32 %v1341, %v1660
      %v1662 = vpop.f32.mrf.mxu0
      %v1663 = vadd.f32 %v1341, %v1662
      %v1664 = vpop.f32.mrf.mxu0
      %v1665 = vadd.f32 %v1346, %v1664
      %v1666 = vpop.f32.mrf.mxu0
      %v1667 = vadd.f32 %v1346, %v1666
      %1668 = vmatprep.mubr.bf16.mxu0 0
      %1669 = vmatmul.mubr.bf16.gmra.mxu0 %v1519
      %v1670 = vpop.f32.mrf.mxu0
      %v1671 = vadd.f32 %v1351, %v1670
      %v1672 = vpop.f32.mrf.mxu0
      %v1673 = vadd.f32 %v1351, %v1672
      %v1674 = vpop.f32.mrf.mxu0
      %v1675 = vadd.f32 %v1356, %v1674
      %v1676 = vpop.f32.mrf.mxu0
      %v1677 = vadd.f32 %v1356, %v1676
      %1678 = vmatprep.mubr.bf16.mxu0 0
      %1679 = vmatmul.mubr.bf16.gmra.mxu0 %v1522
      %v1680 = vpop.f32.mrf.mxu0
      %v1681 = vadd.f32 %v1361, %v1680
      %v1682 = vpop.f32.mrf.mxu0
      %v1683 = vadd.f32 %v1361, %v1682
      %v1684 = vpop.f32.mrf.mxu0
      %v1685 = vadd.f32 %v1366, %v1684
      %v1686 = vpop.f32.mrf.mxu0
      %v1687 = vadd.f32 %v1366, %v1686
      %1688 = vmatprep.mubr.bf16.mxu0 0
      %1689 = vmatmul.mubr.bf16.gmra.mxu0 %v1525
      %v1690 = vpop.f32.mrf.mxu0
      %v1691 = vadd.f32 %v1371, %v1690
      %v1692 = vpop.f32.mrf.mxu0
      %v1693 = vadd.f32 %v1371, %v1692
      %v1694 = vpop.f32.mrf.mxu0
      %v1695 = vadd.f32 %v1376, %v1694
      %v1696 = vpop.f32.mrf.mxu0
      %v1697 = vadd.f32 %v1376, %v1696
      %1698 = vmatprep.mubr.bf16.mxu0 0
      %1699 = vmatmul.mubr.bf16.gmra.mxu0 %v1528
      %v1700 = vpop.f32.mrf.mxu0
      %v1701 = vadd.f32 %v1381, %v1700
      %v1702 = vpop.f32.mrf.mxu0
      %v1703 = vadd.f32 %v1381, %v1702
      %v1704 = vpop.f32.mrf.mxu0
      %v1705 = vadd.f32 %v1386, %v1704
      %v1706 = vpop.f32.mrf.mxu0
      %v1707 = vadd.f32 %v1386, %v1706
      %1708 = vmatprep.mubr.bf16.mxu0 0
      %1709 = vmatmul.mubr.bf16.gmra.mxu0 %v1531
      %v1710 = vpop.f32.mrf.mxu0
      %v1711 = vadd.f32 %v1391, %v1710
      %v1712 = vpop.f32.mrf.mxu0
      %v1713 = vadd.f32 %v1391, %v1712
      %v1714 = vpop.f32.mrf.mxu0
      %v1715 = vadd.f32 %v1396, %v1714
      %v1716 = vpop.f32.mrf.mxu0
      %v1717 = vadd.f32 %v1396, %v1716
      %1718 = vmatprep.mubr.bf16.mxu0 0
      %1719 = vmatmul.mubr.bf16.gmra.mxu0 %v1534
      %v1720 = vpop.f32.mrf.mxu0
      %v1721 = vadd.f32 %v1401, %v1720
      %v1722 = vpop.f32.mrf.mxu0
      %v1723 = vadd.f32 %v1401, %v1722
      %v1724 = vpop.f32.mrf.mxu0
      %v1725 = vadd.f32 %v1406, %v1724
      %v1726 = vpop.f32.mrf.mxu0
      %v1727 = vadd.f32 %v1406, %v1726
      %1728 = vdwg.mxu0
      %v1729 = vmax.f32 %v1571, 0.0
      %v1730 = vmax.f32 %v1573, 0.0
      %v1731 = vmax.f32 %v1575, 0.0
      %v1732 = vmax.f32 %v1577, 0.0
      %v1733 = vmax.f32 %v1581, 0.0
      %v1734 = vmax.f32 %v1583, 0.0
      %v1735 = vmax.f32 %v1585, 0.0
      %v1736 = vmax.f32 %v1587, 0.0
      %v1737 = vmax.f32 %v1591, 0.0
      %v1738 = vmax.f32 %v1593, 0.0
      %v1739 = vmax.f32 %v1595, 0.0
      %v1740 = vmax.f32 %v1597, 0.0
      %v1741 = vmax.f32 %v1601, 0.0
      %v1742 = vmax.f32 %v1603, 0.0
      %v1743 = vmax.f32 %v1605, 0.0
      %v1744 = vmax.f32 %v1607, 0.0
      %v1745 = vmax.f32 %v1611, 0.0
      %v1746 = vmax.f32 %v1613, 0.0
      %v1747 = vmax.f32 %v1615, 0.0
      %v1748 = vmax.f32 %v1617, 0.0
      %v1749 = vmax.f32 %v1621, 0.0
      %v1750 = vmax.f32 %v1623, 0.0
      %v1751 = vmax.f32 %v1625, 0.0
      %v1752 = vmax.f32 %v1627, 0.0
      %v1753 = vmax.f32 %v1631, 0.0
      %v1754 = vmax.f32 %v1633, 0.0
      %v1755 = vmax.f32 %v1635, 0.0
      %v1756 = vmax.f32 %v1637, 0.0
      %v1757 = vmax.f32 %v1641, 0.0
      %v1758 = vmax.f32 %v1643, 0.0
      %v1759 = vmax.f32 %v1645, 0.0
      %v1760 = vmax.f32 %v1647, 0.0
      %v1761 = vmax.f32 %v1651, 0.0
      %v1762 = vmax.f32 %v1653, 0.0
      %v1763 = vmax.f32 %v1655, 0.0
      %v1764 = vmax.f32 %v1657, 0.0
      %v1765 = vmax.f32 %v1661, 0.0
      %v1766 = vmax.f32 %v1663, 0.0
      %v1767 = vmax.f32 %v1665, 0.0
      %v1768 = vmax.f32 %v1667, 0.0
      %v1769 = vmax.f32 %v1671, 0.0
      %v1770 = vmax.f32 %v1673, 0.0
      %v1771 = vmax.f32 %v1675, 0.0
      %v1772 = vmax.f32 %v1677, 0.0
      %v1773 = vmax.f32 %v1681, 0.0
      %v1774 = vmax.f32 %v1683, 0.0
      %v1775 = vmax.f32 %v1685, 0.0
      %v1776 = vmax.f32 %v1687, 0.0
      %v1777 = vmax.f32 %v1691, 0.0
      %v1778 = vmax.f32 %v1693, 0.0
      %v1779 = vmax.f32 %v1695, 0.0
      %v1780 = vmax.f32 %v1697, 0.0
      %v1781 = vmax.f32 %v1701, 0.0
      %v1782 = vmax.f32 %v1703, 0.0
      %v1783 = vmax.f32 %v1705, 0.0
      %v1784 = vmax.f32 %v1707, 0.0
      %v1785 = vmax.f32 %v1711, 0.0
      %v1786 = vmax.f32 %v1713, 0.0
      %v1787 = vmax.f32 %v1715, 0.0
      %v1788 = vmax.f32 %v1717, 0.0
      %v1789 = vmax.f32 %v1721, 0.0
      %v1790 = vmax.f32 %v1723, 0.0
      %v1791 = vmax.f32 %v1725, 0.0
      %v1792 = vmax.f32 %v1727, 0.0
      %v1793 = vpack.c.bf16 %v1731, %v1729
      %v1794 = vpack.c.bf16 %v1732, %v1730
      %v1795 = vpack.c.bf16 %v1735, %v1733
      %v1796 = vpack.c.bf16 %v1736, %v1734
      %v1797 = vpack.c.bf16 %v1739, %v1737
      %v1798 = vpack.c.bf16 %v1740, %v1738
      %v1799 = vpack.c.bf16 %v1743, %v1741
      %v1800 = vpack.c.bf16 %v1744, %v1742
      %v1801 = vpack.c.bf16 %v1747, %v1745
      %v1802 = vpack.c.bf16 %v1748, %v1746
      %v1803 = vpack.c.bf16 %v1751, %v1749
      %v1804 = vpack.c.bf16 %v1752, %v1750
      %v1805 = vpack.c.bf16 %v1755, %v1753
      %v1806 = vpack.c.bf16 %v1756, %v1754
      %v1807 = vpack.c.bf16 %v1759, %v1757
      %v1808 = vpack.c.bf16 %v1760, %v1758
      %v1809 = vpack.c.bf16 %v1763, %v1761
      %v1810 = vpack.c.bf16 %v1764, %v1762
      %v1811 = vpack.c.bf16 %v1767, %v1765
      %v1812 = vpack.c.bf16 %v1768, %v1766
      %v1813 = vpack.c.bf16 %v1771, %v1769
      %v1814 = vpack.c.bf16 %v1772, %v1770
      %v1815 = vpack.c.bf16 %v1775, %v1773
      %v1816 = vpack.c.bf16 %v1776, %v1774
      %v1817 = vpack.c.bf16 %v1779, %v1777
      %v1818 = vpack.c.bf16 %v1780, %v1778
      %v1819 = vpack.c.bf16 %v1783, %v1781
      %v1820 = vpack.c.bf16 %v1784, %v1782
      %v1821 = vpack.c.bf16 %v1787, %v1785
      %v1822 = vpack.c.bf16 %v1788, %v1786
      %v1823 = vpack.c.bf16 %v1791, %v1789
      %v1824 = vpack.c.bf16 %v1792, %v1790
      %s1825 = scalar_lea.vmem %s5, 32
      %v1826 = vld [vmem:[%s1825] sm:$0xff]
      %v1827 = vld [vmem:[%s1825 + $0x8] sm:$0xff]
      %v1828 = vld [vmem:[%s1825 + $0x10] sm:$0xff]
      %v1829 = vld [vmem:[%s1825 + $0x18] sm:$0xff]
      %v1834 = vunpack.c.l.b16 %v1826
      %v1835 = vunpack.c.h.b16 %v1826
      %v1836 = vunpack.c.l.b16 %v1827
      %v1837 = vunpack.c.h.b16 %v1827
      %v1838 = vunpack.c.l.b16 %v1828
      %v1839 = vunpack.c.h.b16 %v1828
      %v1840 = vunpack.c.l.b16 %v1829
      %v1841 = vunpack.c.h.b16 %v1829
      %v1842 = vpack.c.b16 %v1836, %v1834
      %v1843 = vpack.c.b16 %v1837, %v1835
      %v1844 = vpack.c.b16 %v1840, %v1838
      %v1845 = vpack.c.b16 %v1841, %v1839
      %1850 = vmatprep.subr.bf16.mxu0 %v1808
      %1851 = vmatpush1.bf16.msra.mxu0 %v1807
      %1852 = vmatprep.subr.bf16.mxu0 %v1806
      %1853 = vmatpush1.bf16.msra.mxu0 %v1805
      %1854 = vmatprep.subr.bf16.mxu0 %v1804
      %1855 = vmatpush1.bf16.msra.mxu0 %v1803
      %1856 = vmatprep.subr.bf16.mxu0 %v1802
      %1857 = vmatpush1.bf16.msra.mxu0 %v1801
      %1858 = vmatprep.subr.bf16.mxu0 %v1800
      %1859 = vmatpush1.bf16.msra.mxu0 %v1799
      %1860 = vmatprep.subr.bf16.mxu0 %v1798
      %1861 = vmatpush1.bf16.msra.mxu0 %v1797
      %1862 = vmatprep.subr.bf16.mxu0 %v1796
      %1863 = vmatpush1.bf16.msra.mxu0 %v1795
      %1864 = vmatprep.subr.bf16.mxu0 %v1794
      %1865 = vmatpush1.bf16.msra.mxu0 %v1793
      %1866 = vmatprep.subr.bf16.mxu0 %v1824
      %1867 = vmatpush2.bf16.msra.mxu0 %v1823
      %1868 = vmatprep.subr.bf16.mxu0 %v1822
      %1869 = vmatpush2.bf16.msra.mxu0 %v1821
      %1870 = vmatprep.subr.bf16.mxu0 %v1820
      %1871 = vmatpush2.bf16.msra.mxu0 %v1819
      %1872 = vmatprep.subr.bf16.mxu0 %v1818
      %1873 = vmatpush2.bf16.msra.mxu0 %v1817
      %1874 = vmatprep.subr.bf16.mxu0 %v1816
      %1875 = vmatpush2.bf16.msra.mxu0 %v1815
      %1876 = vmatprep.subr.bf16.mxu0 %v1814
      %1877 = vmatpush2.bf16.msra.mxu0 %v1813
      %1878 = vmatprep.subr.bf16.mxu0 %v1812
      %1879 = vmatpush2.bf16.msra.mxu0 %v1811
      %1880 = vmatprep.subr.bf16.mxu0 %v1810
      %1881 = vmatpush2.bf16.msra.mxu0 %v1809
      %1882 = vmatprep.mubr.bf16.mxu0 %v1843
      %1883 = vmatmul.mubr.bf16.gmra.mxu0 %v1842
      %v1884 = vpop.f32.mrf.mxu0
      %v1885 = vadd.f32 0.0, %v1884
      %v1886 = vpop.f32.mrf.mxu0
      %v1887 = vadd.f32 0.0, %v1886
      %v1888 = vpop.f32.mrf.mxu0
      %v1889 = vadd.f32 0.0, %v1888
      %v1890 = vpop.f32.mrf.mxu0
      %v1891 = vadd.f32 0.0, %v1890
      %1892 = vmatprep.mubr.bf16.mxu0 %v1845
      %1893 = vmatmul.mubr.bf16.gmra.mxu0 %v1844
      %v1894 = vpop.f32.mrf.mxu0
      %v1895 = vadd.f32 0.0, %v1894
      %v1896 = vpop.f32.mrf.mxu0
      %v1897 = vadd.f32 0.0, %v1896
      %v1898 = vpop.f32.mrf.mxu0
      %v1899 = vadd.f32 0.0, %v1898
      %v1900 = vpop.f32.mrf.mxu0
      %v1901 = vadd.f32 0.0, %v1900
      %1902 = vdwg.mxu0
      %v1907 = vunpack.c.l.b16 %v1178
      %v1908 = vunpack.c.h.b16 %v1178
      %v1909 = vunpack.c.l.b16 %v1179
      %v1910 = vunpack.c.h.b16 %v1179
      %v1911 = vunpack.c.l.b16 %v1180
      %v1912 = vunpack.c.h.b16 %v1180
      %v1913 = vunpack.c.l.b16 %v1181
      %v1914 = vunpack.c.h.b16 %v1181
      %v1915 = vpack.c.b16 %v1909, %v1907
      %v1916 = vpack.c.b16 %v1910, %v1908
      %v1917 = vpack.c.b16 %v1913, %v1911
      %v1918 = vpack.c.b16 %v1914, %v1912
      %1923 = vmatprep.subr.bf16.mxu0 %v1161
      %1924 = vmatpush1.bf16.msra.mxu0 %v1160
      %1925 = vmatprep.subr.bf16.mxu0 %v1159
      %1926 = vmatpush1.bf16.msra.mxu0 %v1158
      %1927 = vmatprep.subr.bf16.mxu0 %v1157
      %1928 = vmatpush1.bf16.msra.mxu0 %v1156
      %1929 = vmatprep.subr.bf16.mxu0 %v1155
      %1930 = vmatpush1.bf16.msra.mxu0 %v1154
      %1931 = vmatprep.subr.bf16.mxu0 %v1153
      %1932 = vmatpush1.bf16.msra.mxu0 %v1152
      %1933 = vmatprep.subr.bf16.mxu0 %v1151
      %1934 = vmatpush1.bf16.msra.mxu0 %v1150
      %1935 = vmatprep.subr.bf16.mxu0 %v1149
      %1936 = vmatpush1.bf16.msra.mxu0 %v1148
      %1937 = vmatprep.subr.bf16.mxu0 %v1147
      %1938 = vmatpush1.bf16.msra.mxu0 %v1146
      %1939 = vmatprep.subr.bf16.mxu0 %v1177
      %1940 = vmatpush2.bf16.msra.mxu0 %v1176
      %1941 = vmatprep.subr.bf16.mxu0 %v1175
      %1942 = vmatpush2.bf16.msra.mxu0 %v1174
      %1943 = vmatprep.subr.bf16.mxu0 %v1173
      %1944 = vmatpush2.bf16.msra.mxu0 %v1172
      %1945 = vmatprep.subr.bf16.mxu0 %v1171
      %1946 = vmatpush2.bf16.msra.mxu0 %v1170
      %1947 = vmatprep.subr.bf16.mxu0 %v1169
      %1948 = vmatpush2.bf16.msra.mxu0 %v1168
      %1949 = vmatprep.subr.bf16.mxu0 %v1167
      %1950 = vmatpush2.bf16.msra.mxu0 %v1166
      %1951 = vmatprep.subr.bf16.mxu0 %v1165
      %1952 = vmatpush2.bf16.msra.mxu0 %v1164
      %1953 = vmatprep.subr.bf16.mxu0 %v1163
      %1954 = vmatpush2.bf16.msra.mxu0 %v1162
      %1955 = vmatprep.mubr.bf16.mxu0 %v1916
      %1956 = vmatmul.mubr.bf16.gmra.mxu0 %v1915
      %v1957 = vpop.f32.mrf.mxu0
      %v1958 = vadd.f32 %v1885, %v1957
      %v1959 = vpop.f32.mrf.mxu0
      %v1960 = vadd.f32 %v1887, %v1959
      %v1961 = vpop.f32.mrf.mxu0
      %v1962 = vadd.f32 %v1889, %v1961
      %v1963 = vpop.f32.mrf.mxu0
      %v1964 = vadd.f32 %v1891, %v1963
      %1965 = vmatprep.mubr.bf16.mxu0 %v1918
      %1966 = vmatmul.mubr.bf16.gmra.mxu0 %v1917
      %v1967 = vpop.f32.mrf.mxu0
      %v1968 = vadd.f32 %v1895, %v1967
      %v1969 = vpop.f32.mrf.mxu0
      %v1970 = vadd.f32 %v1897, %v1969
      %v1971 = vpop.f32.mrf.mxu0
      %v1972 = vadd.f32 %v1899, %v1971
      %v1973 = vpop.f32.mrf.mxu0
      %v1974 = vadd.f32 %v1901, %v1973
      %1975 = vdwg.mxu0
      %s1976 = scalar_lea.vmem %s3, 256
      %v1977 = vld [vmem:[%s1976] sm:$0xf]
      %v1978 = vld [vmem:[%s1976 + $0x4] sm:$0xf]
      %v1979 = vld [vmem:[%s1976 + $0x8] sm:$0xf]
      %v1980 = vld [vmem:[%s1976 + $0xc] sm:$0xf]
      %v1981 = vld [vmem:[%s1976 + $0x10] sm:$0xf]
      %v1982 = vld [vmem:[%s1976 + $0x14] sm:$0xf]
      %v1983 = vld [vmem:[%s1976 + $0x18] sm:$0xf]
      %v1984 = vld [vmem:[%s1976 + $0x1c] sm:$0xf]
      %v1985 = vld [vmem:[%s1976 + $0x20] sm:$0xf]
      %v1986 = vld [vmem:[%s1976 + $0x24] sm:$0xf]
      %v1987 = vld [vmem:[%s1976 + $0x28] sm:$0xf]
      %v1988 = vld [vmem:[%s1976 + $0x2c] sm:$0xf]
      %v1989 = vld [vmem:[%s1976 + $0x30] sm:$0xf]
      %v1990 = vld [vmem:[%s1976 + $0x34] sm:$0xf]
      %v1991 = vld [vmem:[%s1976 + $0x38] sm:$0xf]
      %v1992 = vld [vmem:[%s1976 + $0x3c] sm:$0xf]
      %v1993 = vld [vmem:[%s1976 + $0x40] sm:$0xf]
      %v1994 = vld [vmem:[%s1976 + $0x44] sm:$0xf]
      %v1995 = vld [vmem:[%s1976 + $0x48] sm:$0xf]
      %v1996 = vld [vmem:[%s1976 + $0x4c] sm:$0xf]
      %v1997 = vld [vmem:[%s1976 + $0x50] sm:$0xf]
      %v1998 = vld [vmem:[%s1976 + $0x54] sm:$0xf]
      %v1999 = vld [vmem:[%s1976 + $0x58] sm:$0xf]
      %v2000 = vld [vmem:[%s1976 + $0x5c] sm:$0xf]
      %v2001 = vld [vmem:[%s1976 + $0x60] sm:$0xf]
      %v2002 = vld [vmem:[%s1976 + $0x64] sm:$0xf]
      %v2003 = vld [vmem:[%s1976 + $0x68] sm:$0xf]
      %v2004 = vld [vmem:[%s1976 + $0x6c] sm:$0xf]
      %v2005 = vld [vmem:[%s1976 + $0x70] sm:$0xf]
      %v2006 = vld [vmem:[%s1976 + $0x74] sm:$0xf]
      %v2007 = vld [vmem:[%s1976 + $0x78] sm:$0xf]
      %v2008 = vld [vmem:[%s1976 + $0x7c] sm:$0xf]
      %s2009 = scalar_lea.vmem %s4, 512
      %v2010 = vld [vmem:[%s2009] sm:$0xff]
      %v2011 = vld [vmem:[%s2009 + $0x8] sm:$0xff]
      %v2012 = vld [vmem:[%s2009 + $0x10] sm:$0xff]
      %v2013 = vld [vmem:[%s2009 + $0x18] sm:$0xff]
      %v2014 = vld [vmem:[%s2009 + $0x20] sm:$0xff]
      %v2015 = vld [vmem:[%s2009 + $0x28] sm:$0xff]
      %v2016 = vld [vmem:[%s2009 + $0x30] sm:$0xff]
      %v2017 = vld [vmem:[%s2009 + $0x38] sm:$0xff]
      %v2018 = vld [vmem:[%s2009 + $0x40] sm:$0xff]
      %v2019 = vld [vmem:[%s2009 + $0x48] sm:$0xff]
      %v2020 = vld [vmem:[%s2009 + $0x50] sm:$0xff]
      %v2021 = vld [vmem:[%s2009 + $0x58] sm:$0xff]
      %v2022 = vld [vmem:[%s2009 + $0x60] sm:$0xff]
      %v2023 = vld [vmem:[%s2009 + $0x68] sm:$0xff]
      %v2024 = vld [vmem:[%s2009 + $0x70] sm:$0xff]
      %v2025 = vld [vmem:[%s2009 + $0x78] sm:$0xff]
      %v2026 = vld [vmem:[%s2009 + $0x80] sm:$0xff]
      %v2027 = vld [vmem:[%s2009 + $0x88] sm:$0xff]
      %v2028 = vld [vmem:[%s2009 + $0x90] sm:$0xff]
      %v2029 = vld [vmem:[%s2009 + $0x98] sm:$0xff]
      %v2030 = vld [vmem:[%s2009 + $0xa0] sm:$0xff]
      %v2031 = vld [vmem:[%s2009 + $0xa8] sm:$0xff]
      %v2032 = vld [vmem:[%s2009 + $0xb0] sm:$0xff]
      %v2033 = vld [vmem:[%s2009 + $0xb8] sm:$0xff]
      %v2034 = vld [vmem:[%s2009 + $0xc0] sm:$0xff]
      %v2035 = vld [vmem:[%s2009 + $0xc8] sm:$0xff]
      %v2036 = vld [vmem:[%s2009 + $0xd0] sm:$0xff]
      %v2037 = vld [vmem:[%s2009 + $0xd8] sm:$0xff]
      %v2038 = vld [vmem:[%s2009 + $0xe0] sm:$0xff]
      %v2039 = vld [vmem:[%s2009 + $0xe8] sm:$0xff]
      %v2040 = vld [vmem:[%s2009 + $0xf0] sm:$0xff]
      %v2041 = vld [vmem:[%s2009 + $0xf8] sm:$0xff]
      %2043 = vset.pattern.permute.xlu0 0
      %2044 = vperm.xlu0 %2043, %v2010
      %v2045 = vpop.permute.xlu0 %2044
      %2048 = vset.pattern.permute.xlu0 0
      %2049 = vperm.xlu0 %2048, %v2011
      %v2050 = vpop.permute.xlu0 %2049
      %2053 = vset.pattern.permute.xlu0 0
      %2054 = vperm.xlu0 %2053, %v2012
      %v2055 = vpop.permute.xlu0 %2054
      %2058 = vset.pattern.permute.xlu0 0
      %2059 = vperm.xlu0 %2058, %v2013
      %v2060 = vpop.permute.xlu0 %2059
      %2063 = vset.pattern.permute.xlu0 0
      %2064 = vperm.xlu0 %2063, %v2014
      %v2065 = vpop.permute.xlu0 %2064
      %2068 = vset.pattern.permute.xlu0 0
      %2069 = vperm.xlu0 %2068, %v2015
      %v2070 = vpop.permute.xlu0 %2069
      %2073 = vset.pattern.permute.xlu0 0
      %2074 = vperm.xlu0 %2073, %v2016
      %v2075 = vpop.permute.xlu0 %2074
      %2078 = vset.pattern.permute.xlu0 0
      %2079 = vperm.xlu0 %2078, %v2017
      %v2080 = vpop.permute.xlu0 %2079
      %2083 = vset.pattern.permute.xlu0 0
      %2084 = vperm.xlu0 %2083, %v2018
      %v2085 = vpop.permute.xlu0 %2084
      %2088 = vset.pattern.permute.xlu0 0
      %2089 = vperm.xlu0 %2088, %v2019
      %v2090 = vpop.permute.xlu0 %2089
      %2093 = vset.pattern.permute.xlu0 0
      %2094 = vperm.xlu0 %2093, %v2020
      %v2095 = vpop.permute.xlu0 %2094
      %2098 = vset.pattern.permute.xlu0 0
      %2099 = vperm.xlu0 %2098, %v2021
      %v2100 = vpop.permute.xlu0 %2099
      %2103 = vset.pattern.permute.xlu0 0
      %2104 = vperm.xlu0 %2103, %v2022
      %v2105 = vpop.permute.xlu0 %2104
      %2108 = vset.pattern.permute.xlu0 0
      %2109 = vperm.xlu0 %2108, %v2023
      %v2110 = vpop.permute.xlu0 %2109
      %2113 = vset.pattern.permute.xlu0 0
      %2114 = vperm.xlu0 %2113, %v2024
      %v2115 = vpop.permute.xlu0 %2114
      %2118 = vset.pattern.permute.xlu0 0
      %2119 = vperm.xlu0 %2118, %v2025
      %v2120 = vpop.permute.xlu0 %2119
      %2123 = vset.pattern.permute.xlu0 0
      %2124 = vperm.xlu0 %2123, %v2026
      %v2125 = vpop.permute.xlu0 %2124
      %2128 = vset.pattern.permute.xlu0 0
      %2129 = vperm.xlu0 %2128, %v2027
      %v2130 = vpop.permute.xlu0 %2129
      %2133 = vset.pattern.permute.xlu0 0
      %2134 = vperm.xlu0 %2133, %v2028
      %v2135 = vpop.permute.xlu0 %2134
      %2138 = vset.pattern.permute.xlu0 0
      %2139 = vperm.xlu0 %2138, %v2029
      %v2140 = vpop.permute.xlu0 %2139
      %2143 = vset.pattern.permute.xlu0 0
      %2144 = vperm.xlu0 %2143, %v2030
      %v2145 = vpop.permute.xlu0 %2144
      %2148 = vset.pattern.permute.xlu0 0
      %2149 = vperm.xlu0 %2148, %v2031
      %v2150 = vpop.permute.xlu0 %2149
      %2153 = vset.pattern.permute.xlu0 0
      %2154 = vperm.xlu0 %2153, %v2032
      %v2155 = vpop.permute.xlu0 %2154
      %2158 = vset.pattern.permute.xlu0 0
      %2159 = vperm.xlu0 %2158, %v2033
      %v2160 = vpop.permute.xlu0 %2159
      %2163 = vset.pattern.permute.xlu0 0
      %2164 = vperm.xlu0 %2163, %v2034
      %v2165 = vpop.permute.xlu0 %2164
      %2168 = vset.pattern.permute.xlu0 0
      %2169 = vperm.xlu0 %2168, %v2035
      %v2170 = vpop.permute.xlu0 %2169
      %2173 = vset.pattern.permute.xlu0 0
      %2174 = vperm.xlu0 %2173, %v2036
      %v2175 = vpop.permute.xlu0 %2174
      %2178 = vset.pattern.permute.xlu0 0
      %2179 = vperm.xlu0 %2178, %v2037
      %v2180 = vpop.permute.xlu0 %2179
      %2183 = vset.pattern.permute.xlu0 0
      %2184 = vperm.xlu0 %2183, %v2038
      %v2185 = vpop.permute.xlu0 %2184
      %2188 = vset.pattern.permute.xlu0 0
      %2189 = vperm.xlu0 %2188, %v2039
      %v2190 = vpop.permute.xlu0 %2189
      %2193 = vset.pattern.permute.xlu0 0
      %2194 = vperm.xlu0 %2193, %v2040
      %v2195 = vpop.permute.xlu0 %2194
      %2198 = vset.pattern.permute.xlu0 0
      %2199 = vperm.xlu0 %2198, %v2041
      %v2200 = vpop.permute.xlu0 %2199
      %v2234 = vunpack.c.l.b16 %v1977
      %v2235 = vunpack.c.l.b16 %v1978
      %v2236 = vunpack.c.l.b16 %v1979
      %v2237 = vunpack.c.l.b16 %v1980
      %v2238 = vunpack.c.l.b16 %v1981
      %v2239 = vunpack.c.l.b16 %v1982
      %v2240 = vunpack.c.l.b16 %v1983
      %v2241 = vunpack.c.l.b16 %v1984
      %v2242 = vunpack.c.l.b16 %v1985
      %v2243 = vunpack.c.l.b16 %v1986
      %v2244 = vunpack.c.l.b16 %v1987
      %v2245 = vunpack.c.l.b16 %v1988
      %v2246 = vunpack.c.l.b16 %v1989
      %v2247 = vunpack.c.l.b16 %v1990
      %v2248 = vunpack.c.l.b16 %v1991
      %v2249 = vunpack.c.l.b16 %v1992
      %v2250 = vunpack.c.l.b16 %v1993
      %v2251 = vunpack.c.l.b16 %v1994
      %v2252 = vunpack.c.l.b16 %v1995
      %v2253 = vunpack.c.l.b16 %v1996
      %v2254 = vunpack.c.l.b16 %v1997
      %v2255 = vunpack.c.l.b16 %v1998
      %v2256 = vunpack.c.l.b16 %v1999
      %v2257 = vunpack.c.l.b16 %v2000
      %v2258 = vunpack.c.l.b16 %v2001
      %v2259 = vunpack.c.l.b16 %v2002
      %v2260 = vunpack.c.l.b16 %v2003
      %v2261 = vunpack.c.l.b16 %v2004
      %v2262 = vunpack.c.l.b16 %v2005
      %v2263 = vunpack.c.l.b16 %v2006
      %v2264 = vunpack.c.l.b16 %v2007
      %v2265 = vunpack.c.l.b16 %v2008
      %v2266 = vpack.c.b16 %v2235, %v2234
      %v2267 = vpack.c.b16 %v2237, %v2236
      %v2268 = vpack.c.b16 %v2239, %v2238
      %v2269 = vpack.c.b16 %v2241, %v2240
      %v2270 = vpack.c.b16 %v2243, %v2242
      %v2271 = vpack.c.b16 %v2245, %v2244
      %v2272 = vpack.c.b16 %v2247, %v2246
      %v2273 = vpack.c.b16 %v2249, %v2248
      %v2274 = vpack.c.b16 %v2251, %v2250
      %v2275 = vpack.c.b16 %v2253, %v2252
      %v2276 = vpack.c.b16 %v2255, %v2254
      %v2277 = vpack.c.b16 %v2257, %v2256
      %v2278 = vpack.c.b16 %v2259, %v2258
      %v2279 = vpack.c.b16 %v2261, %v2260
      %v2280 = vpack.c.b16 %v2263, %v2262
      %v2281 = vpack.c.b16 %v2265, %v2264
      %v2283 = vsel %vm840, %v2266, 0
      %v2286 = vsel %vm840, %v2267, 0
      %v2289 = vsel %vm840, %v2268, 0
      %v2292 = vsel %vm840, %v2269, 0
      %v2295 = vsel %vm840, %v2270, 0
      %v2298 = vsel %vm840, %v2271, 0
      %v2301 = vsel %vm840, %v2272, 0
      %v2304 = vsel %vm840, %v2273, 0
      %v2307 = vsel %vm840, %v2274, 0
      %v2310 = vsel %vm840, %v2275, 0
      %v2313 = vsel %vm840, %v2276, 0
      %v2316 = vsel %vm840, %v2277, 0
      %v2319 = vsel %vm840, %v2278, 0
      %v2322 = vsel %vm840, %v2279, 0
      %v2325 = vsel %vm840, %v2280, 0
      %v2328 = vsel %vm840, %v2281, 0
      %2330 = vmatprep.subr.bf16.mxu0 0
      %2331 = vmatpush1.bf16.msra.mxu0 0
      %2332 = vmatprep.subr.bf16.mxu0 0
      %2333 = vmatpush1.bf16.msra.mxu0 0
      %2334 = vmatprep.subr.bf16.mxu0 0
      %2335 = vmatpush1.bf16.msra.mxu0 0
      %2336 = vmatprep.subr.bf16.mxu0 0
      %2337 = vmatpush1.bf16.msra.mxu0 0
      %2338 = vmatprep.subr.bf16.mxu0 %v535
      %2339 = vmatpush1.bf16.msra.mxu0 %v534
      %2340 = vmatprep.subr.bf16.mxu0 %v533
      %2341 = vmatpush1.bf16.msra.mxu0 %v532
      %2342 = vmatprep.subr.bf16.mxu0 %v531
      %2343 = vmatpush1.bf16.msra.mxu0 %v530
      %2344 = vmatprep.subr.bf16.mxu0 %v529
      %2345 = vmatpush1.bf16.msra.mxu0 %v528
      %2346 = vmatprep.subr.bf16.mxu0 0
      %2347 = vmatpush2.bf16.msra.mxu0 0
      %2348 = vmatprep.subr.bf16.mxu0 0
      %2349 = vmatpush2.bf16.msra.mxu0 0
      %2350 = vmatprep.subr.bf16.mxu0 0
      %2351 = vmatpush2.bf16.msra.mxu0 0
      %2352 = vmatprep.subr.bf16.mxu0 0
      %2353 = vmatpush2.bf16.msra.mxu0 0
      %2354 = vmatprep.subr.bf16.mxu0 0
      %2355 = vmatpush2.bf16.msra.mxu0 0
      %2356 = vmatprep.subr.bf16.mxu0 0
      %2357 = vmatpush2.bf16.msra.mxu0 0
      %2358 = vmatprep.subr.bf16.mxu0 0
      %2359 = vmatpush2.bf16.msra.mxu0 0
      %2360 = vmatprep.subr.bf16.mxu0 0
      %2361 = vmatpush2.bf16.msra.mxu0 0
      %2362 = vmatprep.mubr.bf16.mxu0 0
      %2363 = vmatmul.mubr.bf16.gmra.mxu0 %v2283
      %v2364 = vpop.f32.mrf.mxu0
      %v2365 = vadd.f32 %v2045, %v2364
      %v2366 = vpop.f32.mrf.mxu0
      %v2367 = vadd.f32 %v2045, %v2366
      %v2368 = vpop.f32.mrf.mxu0
      %v2369 = vadd.f32 %v2050, %v2368
      %v2370 = vpop.f32.mrf.mxu0
      %v2371 = vadd.f32 %v2050, %v2370
      %2372 = vmatprep.mubr.bf16.mxu0 0
      %2373 = vmatmul.mubr.bf16.gmra.mxu0 %v2286
      %v2374 = vpop.f32.mrf.mxu0
      %v2375 = vadd.f32 %v2055, %v2374
      %v2376 = vpop.f32.mrf.mxu0
      %v2377 = vadd.f32 %v2055, %v2376
      %v2378 = vpop.f32.mrf.mxu0
      %v2379 = vadd.f32 %v2060, %v2378
      %v2380 = vpop.f32.mrf.mxu0
      %v2381 = vadd.f32 %v2060, %v2380
      %2382 = vmatprep.mubr.bf16.mxu0 0
      %2383 = vmatmul.mubr.bf16.gmra.mxu0 %v2289
      %v2384 = vpop.f32.mrf.mxu0
      %v2385 = vadd.f32 %v2065, %v2384
      %v2386 = vpop.f32.mrf.mxu0
      %v2387 = vadd.f32 %v2065, %v2386
      %v2388 = vpop.f32.mrf.mxu0
      %v2389 = vadd.f32 %v2070, %v2388
      %v2390 = vpop.f32.mrf.mxu0
      %v2391 = vadd.f32 %v2070, %v2390
      %2392 = vmatprep.mubr.bf16.mxu0 0
      %2393 = vmatmul.mubr.bf16.gmra.mxu0 %v2292
      %v2394 = vpop.f32.mrf.mxu0
      %v2395 = vadd.f32 %v2075, %v2394
      %v2396 = vpop.f32.mrf.mxu0
      %v2397 = vadd.f32 %v2075, %v2396
      %v2398 = vpop.f32.mrf.mxu0
      %v2399 = vadd.f32 %v2080, %v2398
      %v2400 = vpop.f32.mrf.mxu0
      %v2401 = vadd.f32 %v2080, %v2400
      %2402 = vmatprep.mubr.bf16.mxu0 0
      %2403 = vmatmul.mubr.bf16.gmra.mxu0 %v2295
      %v2404 = vpop.f32.mrf.mxu0
      %v2405 = vadd.f32 %v2085, %v2404
      %v2406 = vpop.f32.mrf.mxu0
      %v2407 = vadd.f32 %v2085, %v2406
      %v2408 = vpop.f32.mrf.mxu0
      %v2409 = vadd.f32 %v2090, %v2408
      %v2410 = vpop.f32.mrf.mxu0
      %v2411 = vadd.f32 %v2090, %v2410
      %2412 = vmatprep.mubr.bf16.mxu0 0
      %2413 = vmatmul.mubr.bf16.gmra.mxu0 %v2298
      %v2414 = vpop.f32.mrf.mxu0
      %v2415 = vadd.f32 %v2095, %v2414
      %v2416 = vpop.f32.mrf.mxu0
      %v2417 = vadd.f32 %v2095, %v2416
      %v2418 = vpop.f32.mrf.mxu0
      %v2419 = vadd.f32 %v2100, %v2418
      %v2420 = vpop.f32.mrf.mxu0
      %v2421 = vadd.f32 %v2100, %v2420
      %2422 = vmatprep.mubr.bf16.mxu0 0
      %2423 = vmatmul.mubr.bf16.gmra.mxu0 %v2301
      %v2424 = vpop.f32.mrf.mxu0
      %v2425 = vadd.f32 %v2105, %v2424
      %v2426 = vpop.f32.mrf.mxu0
      %v2427 = vadd.f32 %v2105, %v2426
      %v2428 = vpop.f32.mrf.mxu0
      %v2429 = vadd.f32 %v2110, %v2428
      %v2430 = vpop.f32.mrf.mxu0
      %v2431 = vadd.f32 %v2110, %v2430
      %2432 = vmatprep.mubr.bf16.mxu0 0
      %2433 = vmatmul.mubr.bf16.gmra.mxu0 %v2304
      %v2434 = vpop.f32.mrf.mxu0
      %v2435 = vadd.f32 %v2115, %v2434
      %v2436 = vpop.f32.mrf.mxu0
      %v2437 = vadd.f32 %v2115, %v2436
      %v2438 = vpop.f32.mrf.mxu0
      %v2439 = vadd.f32 %v2120, %v2438
      %v2440 = vpop.f32.mrf.mxu0
      %v2441 = vadd.f32 %v2120, %v2440
      %2442 = vmatprep.mubr.bf16.mxu0 0
      %2443 = vmatmul.mubr.bf16.gmra.mxu0 %v2307
      %v2444 = vpop.f32.mrf.mxu0
      %v2445 = vadd.f32 %v2125, %v2444
      %v2446 = vpop.f32.mrf.mxu0
      %v2447 = vadd.f32 %v2125, %v2446
      %v2448 = vpop.f32.mrf.mxu0
      %v2449 = vadd.f32 %v2130, %v2448
      %v2450 = vpop.f32.mrf.mxu0
      %v2451 = vadd.f32 %v2130, %v2450
      %2452 = vmatprep.mubr.bf16.mxu0 0
      %2453 = vmatmul.mubr.bf16.gmra.mxu0 %v2310
      %v2454 = vpop.f32.mrf.mxu0
      %v2455 = vadd.f32 %v2135, %v2454
      %v2456 = vpop.f32.mrf.mxu0
      %v2457 = vadd.f32 %v2135, %v2456
      %v2458 = vpop.f32.mrf.mxu0
      %v2459 = vadd.f32 %v2140, %v2458
      %v2460 = vpop.f32.mrf.mxu0
      %v2461 = vadd.f32 %v2140, %v2460
      %2462 = vmatprep.mubr.bf16.mxu0 0
      %2463 = vmatmul.mubr.bf16.gmra.mxu0 %v2313
      %v2464 = vpop.f32.mrf.mxu0
      %v2465 = vadd.f32 %v2145, %v2464
      %v2466 = vpop.f32.mrf.mxu0
      %v2467 = vadd.f32 %v2145, %v2466
      %v2468 = vpop.f32.mrf.mxu0
      %v2469 = vadd.f32 %v2150, %v2468
      %v2470 = vpop.f32.mrf.mxu0
      %v2471 = vadd.f32 %v2150, %v2470
      %2472 = vmatprep.mubr.bf16.mxu0 0
      %2473 = vmatmul.mubr.bf16.gmra.mxu0 %v2316
      %v2474 = vpop.f32.mrf.mxu0
      %v2475 = vadd.f32 %v2155, %v2474
      %v2476 = vpop.f32.mrf.mxu0
      %v2477 = vadd.f32 %v2155, %v2476
      %v2478 = vpop.f32.mrf.mxu0
      %v2479 = vadd.f32 %v2160, %v2478
      %v2480 = vpop.f32.mrf.mxu0
      %v2481 = vadd.f32 %v2160, %v2480
      %2482 = vmatprep.mubr.bf16.mxu0 0
      %2483 = vmatmul.mubr.bf16.gmra.mxu0 %v2319
      %v2484 = vpop.f32.mrf.mxu0
      %v2485 = vadd.f32 %v2165, %v2484
      %v2486 = vpop.f32.mrf.mxu0
      %v2487 = vadd.f32 %v2165, %v2486
      %v2488 = vpop.f32.mrf.mxu0
      %v2489 = vadd.f32 %v2170, %v2488
      %v2490 = vpop.f32.mrf.mxu0
      %v2491 = vadd.f32 %v2170, %v2490
      %2492 = vmatprep.mubr.bf16.mxu0 0
      %2493 = vmatmul.mubr.bf16.gmra.mxu0 %v2322
      %v2494 = vpop.f32.mrf.mxu0
      %v2495 = vadd.f32 %v2175, %v2494
      %v2496 = vpop.f32.mrf.mxu0
      %v2497 = vadd.f32 %v2175, %v2496
      %v2498 = vpop.f32.mrf.mxu0
      %v2499 = vadd.f32 %v2180, %v2498
      %v2500 = vpop.f32.mrf.mxu0
      %v2501 = vadd.f32 %v2180, %v2500
      %2502 = vmatprep.mubr.bf16.mxu0 0
      %2503 = vmatmul.mubr.bf16.gmra.mxu0 %v2325
      %v2504 = vpop.f32.mrf.mxu0
      %v2505 = vadd.f32 %v2185, %v2504
      %v2506 = vpop.f32.mrf.mxu0
      %v2507 = vadd.f32 %v2185, %v2506
      %v2508 = vpop.f32.mrf.mxu0
      %v2509 = vadd.f32 %v2190, %v2508
      %v2510 = vpop.f32.mrf.mxu0
      %v2511 = vadd.f32 %v2190, %v2510
      %2512 = vmatprep.mubr.bf16.mxu0 0
      %2513 = vmatmul.mubr.bf16.gmra.mxu0 %v2328
      %v2514 = vpop.f32.mrf.mxu0
      %v2515 = vadd.f32 %v2195, %v2514
      %v2516 = vpop.f32.mrf.mxu0
      %v2517 = vadd.f32 %v2195, %v2516
      %v2518 = vpop.f32.mrf.mxu0
      %v2519 = vadd.f32 %v2200, %v2518
      %v2520 = vpop.f32.mrf.mxu0
      %v2521 = vadd.f32 %v2200, %v2520
      %2522 = vdwg.mxu0
      %v2523 = vmax.f32 %v2365, 0.0
      %v2524 = vmax.f32 %v2367, 0.0
      %v2525 = vmax.f32 %v2369, 0.0
      %v2526 = vmax.f32 %v2371, 0.0
      %v2527 = vmax.f32 %v2375, 0.0
      %v2528 = vmax.f32 %v2377, 0.0
      %v2529 = vmax.f32 %v2379, 0.0
      %v2530 = vmax.f32 %v2381, 0.0
      %v2531 = vmax.f32 %v2385, 0.0
      %v2532 = vmax.f32 %v2387, 0.0
      %v2533 = vmax.f32 %v2389, 0.0
      %v2534 = vmax.f32 %v2391, 0.0
      %v2535 = vmax.f32 %v2395, 0.0
      %v2536 = vmax.f32 %v2397, 0.0
      %v2537 = vmax.f32 %v2399, 0.0
      %v2538 = vmax.f32 %v2401, 0.0
      %v2539 = vmax.f32 %v2405, 0.0
      %v2540 = vmax.f32 %v2407, 0.0
      %v2541 = vmax.f32 %v2409, 0.0
      %v2542 = vmax.f32 %v2411, 0.0
      %v2543 = vmax.f32 %v2415, 0.0
      %v2544 = vmax.f32 %v2417, 0.0
      %v2545 = vmax.f32 %v2419, 0.0
      %v2546 = vmax.f32 %v2421, 0.0
      %v2547 = vmax.f32 %v2425, 0.0
      %v2548 = vmax.f32 %v2427, 0.0
      %v2549 = vmax.f32 %v2429, 0.0
      %v2550 = vmax.f32 %v2431, 0.0
      %v2551 = vmax.f32 %v2435, 0.0
      %v2552 = vmax.f32 %v2437, 0.0
      %v2553 = vmax.f32 %v2439, 0.0
      %v2554 = vmax.f32 %v2441, 0.0
      %v2555 = vmax.f32 %v2445, 0.0
      %v2556 = vmax.f32 %v2447, 0.0
      %v2557 = vmax.f32 %v2449, 0.0
      %v2558 = vmax.f32 %v2451, 0.0
      %v2559 = vmax.f32 %v2455, 0.0
      %v2560 = vmax.f32 %v2457, 0.0
      %v2561 = vmax.f32 %v2459, 0.0
      %v2562 = vmax.f32 %v2461, 0.0
      %v2563 = vmax.f32 %v2465, 0.0
      %v2564 = vmax.f32 %v2467, 0.0
      %v2565 = vmax.f32 %v2469, 0.0
      %v2566 = vmax.f32 %v2471, 0.0
      %v2567 = vmax.f32 %v2475, 0.0
      %v2568 = vmax.f32 %v2477, 0.0
      %v2569 = vmax.f32 %v2479, 0.0
      %v2570 = vmax.f32 %v2481, 0.0
      %v2571 = vmax.f32 %v2485, 0.0
      %v2572 = vmax.f32 %v2487, 0.0
      %v2573 = vmax.f32 %v2489, 0.0
      %v2574 = vmax.f32 %v2491, 0.0
      %v2575 = vmax.f32 %v2495, 0.0
      %v2576 = vmax.f32 %v2497, 0.0
      %v2577 = vmax.f32 %v2499, 0.0
      %v2578 = vmax.f32 %v2501, 0.0
      %v2579 = vmax.f32 %v2505, 0.0
      %v2580 = vmax.f32 %v2507, 0.0
      %v2581 = vmax.f32 %v2509, 0.0
      %v2582 = vmax.f32 %v2511, 0.0
      %v2583 = vmax.f32 %v2515, 0.0
      %v2584 = vmax.f32 %v2517, 0.0
      %v2585 = vmax.f32 %v2519, 0.0
      %v2586 = vmax.f32 %v2521, 0.0
      %v2587 = vpack.c.bf16 %v2525, %v2523
      %v2588 = vpack.c.bf16 %v2526, %v2524
      %v2589 = vpack.c.bf16 %v2529, %v2527
      %v2590 = vpack.c.bf16 %v2530, %v2528
      %v2591 = vpack.c.bf16 %v2533, %v2531
      %v2592 = vpack.c.bf16 %v2534, %v2532
      %v2593 = vpack.c.bf16 %v2537, %v2535
      %v2594 = vpack.c.bf16 %v2538, %v2536
      %v2595 = vpack.c.bf16 %v2541, %v2539
      %v2596 = vpack.c.bf16 %v2542, %v2540
      %v2597 = vpack.c.bf16 %v2545, %v2543
      %v2598 = vpack.c.bf16 %v2546, %v2544
      %v2599 = vpack.c.bf16 %v2549, %v2547
      %v2600 = vpack.c.bf16 %v2550, %v2548
      %v2601 = vpack.c.bf16 %v2553, %v2551
      %v2602 = vpack.c.bf16 %v2554, %v2552
      %v2603 = vpack.c.bf16 %v2557, %v2555
      %v2604 = vpack.c.bf16 %v2558, %v2556
      %v2605 = vpack.c.bf16 %v2561, %v2559
      %v2606 = vpack.c.bf16 %v2562, %v2560
      %v2607 = vpack.c.bf16 %v2565, %v2563
      %v2608 = vpack.c.bf16 %v2566, %v2564
      %v2609 = vpack.c.bf16 %v2569, %v2567
      %v2610 = vpack.c.bf16 %v2570, %v2568
      %v2611 = vpack.c.bf16 %v2573, %v2571
      %v2612 = vpack.c.bf16 %v2574, %v2572
      %v2613 = vpack.c.bf16 %v2577, %v2575
      %v2614 = vpack.c.bf16 %v2578, %v2576
      %v2615 = vpack.c.bf16 %v2581, %v2579
      %v2616 = vpack.c.bf16 %v2582, %v2580
      %v2617 = vpack.c.bf16 %v2585, %v2583
      %v2618 = vpack.c.bf16 %v2586, %v2584
      %s2619 = scalar_lea.vmem %s5, 64
      %v2620 = vld [vmem:[%s2619] sm:$0xff]
      %v2621 = vld [vmem:[%s2619 + $0x8] sm:$0xff]
      %v2622 = vld [vmem:[%s2619 + $0x10] sm:$0xff]
      %v2623 = vld [vmem:[%s2619 + $0x18] sm:$0xff]
      %v2628 = vunpack.c.l.b16 %v2620
      %v2629 = vunpack.c.h.b16 %v2620
      %v2630 = vunpack.c.l.b16 %v2621
      %v2631 = vunpack.c.h.b16 %v2621
      %v2632 = vunpack.c.l.b16 %v2622
      %v2633 = vunpack.c.h.b16 %v2622
      %v2634 = vunpack.c.l.b16 %v2623
      %v2635 = vunpack.c.h.b16 %v2623
      %v2636 = vpack.c.b16 %v2630, %v2628
      %v2637 = vpack.c.b16 %v2631, %v2629
      %v2638 = vpack.c.b16 %v2634, %v2632
      %v2639 = vpack.c.b16 %v2635, %v2633
      %2644 = vmatprep.subr.bf16.mxu0 %v2602
      %2645 = vmatpush1.bf16.msra.mxu0 %v2601
      %2646 = vmatprep.subr.bf16.mxu0 %v2600
      %2647 = vmatpush1.bf16.msra.mxu0 %v2599
      %2648 = vmatprep.subr.bf16.mxu0 %v2598
      %2649 = vmatpush1.bf16.msra.mxu0 %v2597
      %2650 = vmatprep.subr.bf16.mxu0 %v2596
      %2651 = vmatpush1.bf16.msra.mxu0 %v2595
      %2652 = vmatprep.subr.bf16.mxu0 %v2594
      %2653 = vmatpush1.bf16.msra.mxu0 %v2593
      %2654 = vmatprep.subr.bf16.mxu0 %v2592
      %2655 = vmatpush1.bf16.msra.mxu0 %v2591
      %2656 = vmatprep.subr.bf16.mxu0 %v2590
      %2657 = vmatpush1.bf16.msra.mxu0 %v2589
      %2658 = vmatprep.subr.bf16.mxu0 %v2588
      %2659 = vmatpush1.bf16.msra.mxu0 %v2587
      %2660 = vmatprep.subr.bf16.mxu0 %v2618
      %2661 = vmatpush2.bf16.msra.mxu0 %v2617
      %2662 = vmatprep.subr.bf16.mxu0 %v2616
      %2663 = vmatpush2.bf16.msra.mxu0 %v2615
      %2664 = vmatprep.subr.bf16.mxu0 %v2614
      %2665 = vmatpush2.bf16.msra.mxu0 %v2613
      %2666 = vmatprep.subr.bf16.mxu0 %v2612
      %2667 = vmatpush2.bf16.msra.mxu0 %v2611
      %2668 = vmatprep.subr.bf16.mxu0 %v2610
      %2669 = vmatpush2.bf16.msra.mxu0 %v2609
      %2670 = vmatprep.subr.bf16.mxu0 %v2608
      %2671 = vmatpush2.bf16.msra.mxu0 %v2607
      %2672 = vmatprep.subr.bf16.mxu0 %v2606
      %2673 = vmatpush2.bf16.msra.mxu0 %v2605
      %2674 = vmatprep.subr.bf16.mxu0 %v2604
      %2675 = vmatpush2.bf16.msra.mxu0 %v2603
      %2676 = vmatprep.mubr.bf16.mxu0 %v2637
      %2677 = vmatmul.mubr.bf16.gmra.mxu0 %v2636
      %v2678 = vpop.f32.mrf.mxu0
      %v2679 = vadd.f32 0.0, %v2678
      %v2680 = vpop.f32.mrf.mxu0
      %v2681 = vadd.f32 0.0, %v2680
      %v2682 = vpop.f32.mrf.mxu0
      %v2683 = vadd.f32 0.0, %v2682
      %v2684 = vpop.f32.mrf.mxu0
      %v2685 = vadd.f32 0.0, %v2684
      %2686 = vmatprep.mubr.bf16.mxu0 %v2639
      %2687 = vmatmul.mubr.bf16.gmra.mxu0 %v2638
      %v2688 = vpop.f32.mrf.mxu0
      %v2689 = vadd.f32 0.0, %v2688
      %v2690 = vpop.f32.mrf.mxu0
      %v2691 = vadd.f32 0.0, %v2690
      %v2692 = vpop.f32.mrf.mxu0
      %v2693 = vadd.f32 0.0, %v2692
      %v2694 = vpop.f32.mrf.mxu0
      %v2695 = vadd.f32 0.0, %v2694
      %2696 = vdwg.mxu0
      %v2697 = vadd.f32 %v1958, %v2679
      %v2698 = vadd.f32 %v1960, %v2681
      %v2699 = vadd.f32 %v1962, %v2683
      %v2700 = vadd.f32 %v1964, %v2685
      %v2701 = vadd.f32 %v1968, %v2689
      %v2702 = vadd.f32 %v1970, %v2691
      %v2703 = vadd.f32 %v1972, %v2693
      %v2704 = vadd.f32 %v1974, %v2695
      %s2705 = scalar_lea.vmem %s3, 384
      %v2706 = vld [vmem:[%s2705] sm:$0xf]
      %v2707 = vld [vmem:[%s2705 + $0x4] sm:$0xf]
      %v2708 = vld [vmem:[%s2705 + $0x8] sm:$0xf]
      %v2709 = vld [vmem:[%s2705 + $0xc] sm:$0xf]
      %v2710 = vld [vmem:[%s2705 + $0x10] sm:$0xf]
      %v2711 = vld [vmem:[%s2705 + $0x14] sm:$0xf]
      %v2712 = vld [vmem:[%s2705 + $0x18] sm:$0xf]
      %v2713 = vld [vmem:[%s2705 + $0x1c] sm:$0xf]
      %v2714 = vld [vmem:[%s2705 + $0x20] sm:$0xf]
      %v2715 = vld [vmem:[%s2705 + $0x24] sm:$0xf]
      %v2716 = vld [vmem:[%s2705 + $0x28] sm:$0xf]
      %v2717 = vld [vmem:[%s2705 + $0x2c] sm:$0xf]
      %v2718 = vld [vmem:[%s2705 + $0x30] sm:$0xf]
      %v2719 = vld [vmem:[%s2705 + $0x34] sm:$0xf]
      %v2720 = vld [vmem:[%s2705 + $0x38] sm:$0xf]
      %v2721 = vld [vmem:[%s2705 + $0x3c] sm:$0xf]
      %v2722 = vld [vmem:[%s2705 + $0x40] sm:$0xf]
      %v2723 = vld [vmem:[%s2705 + $0x44] sm:$0xf]
      %v2724 = vld [vmem:[%s2705 + $0x48] sm:$0xf]
      %v2725 = vld [vmem:[%s2705 + $0x4c] sm:$0xf]
      %v2726 = vld [vmem:[%s2705 + $0x50] sm:$0xf]
      %v2727 = vld [vmem:[%s2705 + $0x54] sm:$0xf]
      %v2728 = vld [vmem:[%s2705 + $0x58] sm:$0xf]
      %v2729 = vld [vmem:[%s2705 + $0x5c] sm:$0xf]
      %v2730 = vld [vmem:[%s2705 + $0x60] sm:$0xf]
      %v2731 = vld [vmem:[%s2705 + $0x64] sm:$0xf]
      %v2732 = vld [vmem:[%s2705 + $0x68] sm:$0xf]
      %v2733 = vld [vmem:[%s2705 + $0x6c] sm:$0xf]
      %v2734 = vld [vmem:[%s2705 + $0x70] sm:$0xf]
      %v2735 = vld [vmem:[%s2705 + $0x74] sm:$0xf]
      %v2736 = vld [vmem:[%s2705 + $0x78] sm:$0xf]
      %v2737 = vld [vmem:[%s2705 + $0x7c] sm:$0xf]
      %s2738 = scalar_lea.vmem %s4, 768
      %v2739 = vld [vmem:[%s2738] sm:$0xff]
      %v2740 = vld [vmem:[%s2738 + $0x8] sm:$0xff]
      %v2741 = vld [vmem:[%s2738 + $0x10] sm:$0xff]
      %v2742 = vld [vmem:[%s2738 + $0x18] sm:$0xff]
      %v2743 = vld [vmem:[%s2738 + $0x20] sm:$0xff]
      %v2744 = vld [vmem:[%s2738 + $0x28] sm:$0xff]
      %v2745 = vld [vmem:[%s2738 + $0x30] sm:$0xff]
      %v2746 = vld [vmem:[%s2738 + $0x38] sm:$0xff]
      %v2747 = vld [vmem:[%s2738 + $0x40] sm:$0xff]
      %v2748 = vld [vmem:[%s2738 + $0x48] sm:$0xff]
      %v2749 = vld [vmem:[%s2738 + $0x50] sm:$0xff]
      %v2750 = vld [vmem:[%s2738 + $0x58] sm:$0xff]
      %v2751 = vld [vmem:[%s2738 + $0x60] sm:$0xff]
      %v2752 = vld [vmem:[%s2738 + $0x68] sm:$0xff]
      %v2753 = vld [vmem:[%s2738 + $0x70] sm:$0xff]
      %v2754 = vld [vmem:[%s2738 + $0x78] sm:$0xff]
      %v2755 = vld [vmem:[%s2738 + $0x80] sm:$0xff]
      %v2756 = vld [vmem:[%s2738 + $0x88] sm:$0xff]
      %v2757 = vld [vmem:[%s2738 + $0x90] sm:$0xff]
      %v2758 = vld [vmem:[%s2738 + $0x98] sm:$0xff]
      %v2759 = vld [vmem:[%s2738 + $0xa0] sm:$0xff]
      %v2760 = vld [vmem:[%s2738 + $0xa8] sm:$0xff]
      %v2761 = vld [vmem:[%s2738 + $0xb0] sm:$0xff]
      %v2762 = vld [vmem:[%s2738 + $0xb8] sm:$0xff]
      %v2763 = vld [vmem:[%s2738 + $0xc0] sm:$0xff]
      %v2764 = vld [vmem:[%s2738 + $0xc8] sm:$0xff]
      %v2765 = vld [vmem:[%s2738 + $0xd0] sm:$0xff]
      %v2766 = vld [vmem:[%s2738 + $0xd8] sm:$0xff]
      %v2767 = vld [vmem:[%s2738 + $0xe0] sm:$0xff]
      %v2768 = vld [vmem:[%s2738 + $0xe8] sm:$0xff]
      %v2769 = vld [vmem:[%s2738 + $0xf0] sm:$0xff]
      %v2770 = vld [vmem:[%s2738 + $0xf8] sm:$0xff]
      %2772 = vset.pattern.permute.xlu0 0
      %2773 = vperm.xlu0 %2772, %v2739
      %v2774 = vpop.permute.xlu0 %2773
      %2777 = vset.pattern.permute.xlu0 0
      %2778 = vperm.xlu0 %2777, %v2740
      %v2779 = vpop.permute.xlu0 %2778
      %2782 = vset.pattern.permute.xlu0 0
      %2783 = vperm.xlu0 %2782, %v2741
      %v2784 = vpop.permute.xlu0 %2783
      %2787 = vset.pattern.permute.xlu0 0
      %2788 = vperm.xlu0 %2787, %v2742
      %v2789 = vpop.permute.xlu0 %2788
      %2792 = vset.pattern.permute.xlu0 0
      %2793 = vperm.xlu0 %2792, %v2743
      %v2794 = vpop.permute.xlu0 %2793
      %2797 = vset.pattern.permute.xlu0 0
      %2798 = vperm.xlu0 %2797, %v2744
      %v2799 = vpop.permute.xlu0 %2798
      %2802 = vset.pattern.permute.xlu0 0
      %2803 = vperm.xlu0 %2802, %v2745
      %v2804 = vpop.permute.xlu0 %2803
      %2807 = vset.pattern.permute.xlu0 0
      %2808 = vperm.xlu0 %2807, %v2746
      %v2809 = vpop.permute.xlu0 %2808
      %2812 = vset.pattern.permute.xlu0 0
      %2813 = vperm.xlu0 %2812, %v2747
      %v2814 = vpop.permute.xlu0 %2813
      %2817 = vset.pattern.permute.xlu0 0
      %2818 = vperm.xlu0 %2817, %v2748
      %v2819 = vpop.permute.xlu0 %2818
      %2822 = vset.pattern.permute.xlu0 0
      %2823 = vperm.xlu0 %2822, %v2749
      %v2824 = vpop.permute.xlu0 %2823
      %2827 = vset.pattern.permute.xlu0 0
      %2828 = vperm.xlu0 %2827, %v2750
      %v2829 = vpop.permute.xlu0 %2828
      %2832 = vset.pattern.permute.xlu0 0
      %2833 = vperm.xlu0 %2832, %v2751
      %v2834 = vpop.permute.xlu0 %2833
      %2837 = vset.pattern.permute.xlu0 0
      %2838 = vperm.xlu0 %2837, %v2752
      %v2839 = vpop.permute.xlu0 %2838
      %2842 = vset.pattern.permute.xlu0 0
      %2843 = vperm.xlu0 %2842, %v2753
      %v2844 = vpop.permute.xlu0 %2843
      %2847 = vset.pattern.permute.xlu0 0
      %2848 = vperm.xlu0 %2847, %v2754
      %v2849 = vpop.permute.xlu0 %2848
      %2852 = vset.pattern.permute.xlu0 0
      %2853 = vperm.xlu0 %2852, %v2755
      %v2854 = vpop.permute.xlu0 %2853
      %2857 = vset.pattern.permute.xlu0 0
      %2858 = vperm.xlu0 %2857, %v2756
      %v2859 = vpop.permute.xlu0 %2858
      %2862 = vset.pattern.permute.xlu0 0
      %2863 = vperm.xlu0 %2862, %v2757
      %v2864 = vpop.permute.xlu0 %2863
      %2867 = vset.pattern.permute.xlu0 0
      %2868 = vperm.xlu0 %2867, %v2758
      %v2869 = vpop.permute.xlu0 %2868
      %2872 = vset.pattern.permute.xlu0 0
      %2873 = vperm.xlu0 %2872, %v2759
      %v2874 = vpop.permute.xlu0 %2873
      %2877 = vset.pattern.permute.xlu0 0
      %2878 = vperm.xlu0 %2877, %v2760
      %v2879 = vpop.permute.xlu0 %2878
      %2882 = vset.pattern.permute.xlu0 0
      %2883 = vperm.xlu0 %2882, %v2761
      %v2884 = vpop.permute.xlu0 %2883
      %2887 = vset.pattern.permute.xlu0 0
      %2888 = vperm.xlu0 %2887, %v2762
      %v2889 = vpop.permute.xlu0 %2888
      %2892 = vset.pattern.permute.xlu0 0
      %2893 = vperm.xlu0 %2892, %v2763
      %v2894 = vpop.permute.xlu0 %2893
      %2897 = vset.pattern.permute.xlu0 0
      %2898 = vperm.xlu0 %2897, %v2764
      %v2899 = vpop.permute.xlu0 %2898
      %2902 = vset.pattern.permute.xlu0 0
      %2903 = vperm.xlu0 %2902, %v2765
      %v2904 = vpop.permute.xlu0 %2903
      %2907 = vset.pattern.permute.xlu0 0
      %2908 = vperm.xlu0 %2907, %v2766
      %v2909 = vpop.permute.xlu0 %2908
      %2912 = vset.pattern.permute.xlu0 0
      %2913 = vperm.xlu0 %2912, %v2767
      %v2914 = vpop.permute.xlu0 %2913
      %2917 = vset.pattern.permute.xlu0 0
      %2918 = vperm.xlu0 %2917, %v2768
      %v2919 = vpop.permute.xlu0 %2918
      %2922 = vset.pattern.permute.xlu0 0
      %2923 = vperm.xlu0 %2922, %v2769
      %v2924 = vpop.permute.xlu0 %2923
      %2927 = vset.pattern.permute.xlu0 0
      %2928 = vperm.xlu0 %2927, %v2770
      %v2929 = vpop.permute.xlu0 %2928
      %v2963 = vunpack.c.l.b16 %v2706
      %v2964 = vunpack.c.l.b16 %v2707
      %v2965 = vunpack.c.l.b16 %v2708
      %v2966 = vunpack.c.l.b16 %v2709
      %v2967 = vunpack.c.l.b16 %v2710
      %v2968 = vunpack.c.l.b16 %v2711
      %v2969 = vunpack.c.l.b16 %v2712
      %v2970 = vunpack.c.l.b16 %v2713
      %v2971 = vunpack.c.l.b16 %v2714
      %v2972 = vunpack.c.l.b16 %v2715
      %v2973 = vunpack.c.l.b16 %v2716
      %v2974 = vunpack.c.l.b16 %v2717
      %v2975 = vunpack.c.l.b16 %v2718
      %v2976 = vunpack.c.l.b16 %v2719
      %v2977 = vunpack.c.l.b16 %v2720
      %v2978 = vunpack.c.l.b16 %v2721
      %v2979 = vunpack.c.l.b16 %v2722
      %v2980 = vunpack.c.l.b16 %v2723
      %v2981 = vunpack.c.l.b16 %v2724
      %v2982 = vunpack.c.l.b16 %v2725
      %v2983 = vunpack.c.l.b16 %v2726
      %v2984 = vunpack.c.l.b16 %v2727
      %v2985 = vunpack.c.l.b16 %v2728
      %v2986 = vunpack.c.l.b16 %v2729
      %v2987 = vunpack.c.l.b16 %v2730
      %v2988 = vunpack.c.l.b16 %v2731
      %v2989 = vunpack.c.l.b16 %v2732
      %v2990 = vunpack.c.l.b16 %v2733
      %v2991 = vunpack.c.l.b16 %v2734
      %v2992 = vunpack.c.l.b16 %v2735
      %v2993 = vunpack.c.l.b16 %v2736
      %v2994 = vunpack.c.l.b16 %v2737
      %v2995 = vpack.c.b16 %v2964, %v2963
      %v2996 = vpack.c.b16 %v2966, %v2965
      %v2997 = vpack.c.b16 %v2968, %v2967
      %v2998 = vpack.c.b16 %v2970, %v2969
      %v2999 = vpack.c.b16 %v2972, %v2971
      %v3000 = vpack.c.b16 %v2974, %v2973
      %v3001 = vpack.c.b16 %v2976, %v2975
      %v3002 = vpack.c.b16 %v2978, %v2977
      %v3003 = vpack.c.b16 %v2980, %v2979
      %v3004 = vpack.c.b16 %v2982, %v2981
      %v3005 = vpack.c.b16 %v2984, %v2983
      %v3006 = vpack.c.b16 %v2986, %v2985
      %v3007 = vpack.c.b16 %v2988, %v2987
      %v3008 = vpack.c.b16 %v2990, %v2989
      %v3009 = vpack.c.b16 %v2992, %v2991
      %v3010 = vpack.c.b16 %v2994, %v2993
      %v3012 = vsel %vm840, %v2995, 0
      %v3015 = vsel %vm840, %v2996, 0
      %v3018 = vsel %vm840, %v2997, 0
      %v3021 = vsel %vm840, %v2998, 0
      %v3024 = vsel %vm840, %v2999, 0
      %v3027 = vsel %vm840, %v3000, 0
      %v3030 = vsel %vm840, %v3001, 0
      %v3033 = vsel %vm840, %v3002, 0
      %v3036 = vsel %vm840, %v3003, 0
      %v3039 = vsel %vm840, %v3004, 0
      %v3042 = vsel %vm840, %v3005, 0
      %v3045 = vsel %vm840, %v3006, 0
      %v3048 = vsel %vm840, %v3007, 0
      %v3051 = vsel %vm840, %v3008, 0
      %v3054 = vsel %vm840, %v3009, 0
      %v3057 = vsel %vm840, %v3010, 0
      %3059 = vmatprep.subr.bf16.mxu0 0
      %3060 = vmatpush1.bf16.msra.mxu0 0
      %3061 = vmatprep.subr.bf16.mxu0 0
      %3062 = vmatpush1.bf16.msra.mxu0 0
      %3063 = vmatprep.subr.bf16.mxu0 0
      %3064 = vmatpush1.bf16.msra.mxu0 0
      %3065 = vmatprep.subr.bf16.mxu0 0
      %3066 = vmatpush1.bf16.msra.mxu0 0
      %3067 = vmatprep.subr.bf16.mxu0 %v535
      %3068 = vmatpush1.bf16.msra.mxu0 %v534
      %3069 = vmatprep.subr.bf16.mxu0 %v533
      %3070 = vmatpush1.bf16.msra.mxu0 %v532
      %3071 = vmatprep.subr.bf16.mxu0 %v531
      %3072 = vmatpush1.bf16.msra.mxu0 %v530
      %3073 = vmatprep.subr.bf16.mxu0 %v529
      %3074 = vmatpush1.bf16.msra.mxu0 %v528
      %3075 = vmatprep.subr.bf16.mxu0 0
      %3076 = vmatpush2.bf16.msra.mxu0 0
      %3077 = vmatprep.subr.bf16.mxu0 0
      %3078 = vmatpush2.bf16.msra.mxu0 0
      %3079 = vmatprep.subr.bf16.mxu0 0
      %3080 = vmatpush2.bf16.msra.mxu0 0
      %3081 = vmatprep.subr.bf16.mxu0 0
      %3082 = vmatpush2.bf16.msra.mxu0 0
      %3083 = vmatprep.subr.bf16.mxu0 0
      %3084 = vmatpush2.bf16.msra.mxu0 0
      %3085 = vmatprep.subr.bf16.mxu0 0
      %3086 = vmatpush2.bf16.msra.mxu0 0
      %3087 = vmatprep.subr.bf16.mxu0 0
      %3088 = vmatpush2.bf16.msra.mxu0 0
      %3089 = vmatprep.subr.bf16.mxu0 0
      %3090 = vmatpush2.bf16.msra.mxu0 0
      %3091 = vmatprep.mubr.bf16.mxu0 0
      %3092 = vmatmul.mubr.bf16.gmra.mxu0 %v3012
      %v3093 = vpop.f32.mrf.mxu0
      %v3094 = vadd.f32 %v2774, %v3093
      %v3095 = vpop.f32.mrf.mxu0
      %v3096 = vadd.f32 %v2774, %v3095
      %v3097 = vpop.f32.mrf.mxu0
      %v3098 = vadd.f32 %v2779, %v3097
      %v3099 = vpop.f32.mrf.mxu0
      %v3100 = vadd.f32 %v2779, %v3099
      %3101 = vmatprep.mubr.bf16.mxu0 0
      %3102 = vmatmul.mubr.bf16.gmra.mxu0 %v3015
      %v3103 = vpop.f32.mrf.mxu0
      %v3104 = vadd.f32 %v2784, %v3103
      %v3105 = vpop.f32.mrf.mxu0
      %v3106 = vadd.f32 %v2784, %v3105
      %v3107 = vpop.f32.mrf.mxu0
      %v3108 = vadd.f32 %v2789, %v3107
      %v3109 = vpop.f32.mrf.mxu0
      %v3110 = vadd.f32 %v2789, %v3109
      %3111 = vmatprep.mubr.bf16.mxu0 0
      %3112 = vmatmul.mubr.bf16.gmra.mxu0 %v3018
      %v3113 = vpop.f32.mrf.mxu0
      %v3114 = vadd.f32 %v2794, %v3113
      %v3115 = vpop.f32.mrf.mxu0
      %v3116 = vadd.f32 %v2794, %v3115
      %v3117 = vpop.f32.mrf.mxu0
      %v3118 = vadd.f32 %v2799, %v3117
      %v3119 = vpop.f32.mrf.mxu0
      %v3120 = vadd.f32 %v2799, %v3119
      %3121 = vmatprep.mubr.bf16.mxu0 0
      %3122 = vmatmul.mubr.bf16.gmra.mxu0 %v3021
      %v3123 = vpop.f32.mrf.mxu0
      %v3124 = vadd.f32 %v2804, %v3123
      %v3125 = vpop.f32.mrf.mxu0
      %v3126 = vadd.f32 %v2804, %v3125
      %v3127 = vpop.f32.mrf.mxu0
      %v3128 = vadd.f32 %v2809, %v3127
      %v3129 = vpop.f32.mrf.mxu0
      %v3130 = vadd.f32 %v2809, %v3129
      %3131 = vmatprep.mubr.bf16.mxu0 0
      %3132 = vmatmul.mubr.bf16.gmra.mxu0 %v3024
      %v3133 = vpop.f32.mrf.mxu0
      %v3134 = vadd.f32 %v2814, %v3133
      %v3135 = vpop.f32.mrf.mxu0
      %v3136 = vadd.f32 %v2814, %v3135
      %v3137 = vpop.f32.mrf.mxu0
      %v3138 = vadd.f32 %v2819, %v3137
      %v3139 = vpop.f32.mrf.mxu0
      %v3140 = vadd.f32 %v2819, %v3139
      %3141 = vmatprep.mubr.bf16.mxu0 0
      %3142 = vmatmul.mubr.bf16.gmra.mxu0 %v3027
      %v3143 = vpop.f32.mrf.mxu0
      %v3144 = vadd.f32 %v2824, %v3143
      %v3145 = vpop.f32.mrf.mxu0
      %v3146 = vadd.f32 %v2824, %v3145
      %v3147 = vpop.f32.mrf.mxu0
      %v3148 = vadd.f32 %v2829, %v3147
      %v3149 = vpop.f32.mrf.mxu0
      %v3150 = vadd.f32 %v2829, %v3149
      %3151 = vmatprep.mubr.bf16.mxu0 0
      %3152 = vmatmul.mubr.bf16.gmra.mxu0 %v3030
      %v3153 = vpop.f32.mrf.mxu0
      %v3154 = vadd.f32 %v2834, %v3153
      %v3155 = vpop.f32.mrf.mxu0
      %v3156 = vadd.f32 %v2834, %v3155
      %v3157 = vpop.f32.mrf.mxu0
      %v3158 = vadd.f32 %v2839, %v3157
      %v3159 = vpop.f32.mrf.mxu0
      %v3160 = vadd.f32 %v2839, %v3159
      %3161 = vmatprep.mubr.bf16.mxu0 0
      %3162 = vmatmul.mubr.bf16.gmra.mxu0 %v3033
      %v3163 = vpop.f32.mrf.mxu0
      %v3164 = vadd.f32 %v2844, %v3163
      %v3165 = vpop.f32.mrf.mxu0
      %v3166 = vadd.f32 %v2844, %v3165
      %v3167 = vpop.f32.mrf.mxu0
      %v3168 = vadd.f32 %v2849, %v3167
      %v3169 = vpop.f32.mrf.mxu0
      %v3170 = vadd.f32 %v2849, %v3169
      %3171 = vmatprep.mubr.bf16.mxu0 0
      %3172 = vmatmul.mubr.bf16.gmra.mxu0 %v3036
      %v3173 = vpop.f32.mrf.mxu0
      %v3174 = vadd.f32 %v2854, %v3173
      %v3175 = vpop.f32.mrf.mxu0
      %v3176 = vadd.f32 %v2854, %v3175
      %v3177 = vpop.f32.mrf.mxu0
      %v3178 = vadd.f32 %v2859, %v3177
      %v3179 = vpop.f32.mrf.mxu0
      %v3180 = vadd.f32 %v2859, %v3179
      %3181 = vmatprep.mubr.bf16.mxu0 0
      %3182 = vmatmul.mubr.bf16.gmra.mxu0 %v3039
      %v3183 = vpop.f32.mrf.mxu0
      %v3184 = vadd.f32 %v2864, %v3183
      %v3185 = vpop.f32.mrf.mxu0
      %v3186 = vadd.f32 %v2864, %v3185
      %v3187 = vpop.f32.mrf.mxu0
      %v3188 = vadd.f32 %v2869, %v3187
      %v3189 = vpop.f32.mrf.mxu0
      %v3190 = vadd.f32 %v2869, %v3189
      %3191 = vmatprep.mubr.bf16.mxu0 0
      %3192 = vmatmul.mubr.bf16.gmra.mxu0 %v3042
      %v3193 = vpop.f32.mrf.mxu0
      %v3194 = vadd.f32 %v2874, %v3193
      %v3195 = vpop.f32.mrf.mxu0
      %v3196 = vadd.f32 %v2874, %v3195
      %v3197 = vpop.f32.mrf.mxu0
      %v3198 = vadd.f32 %v2879, %v3197
      %v3199 = vpop.f32.mrf.mxu0
      %v3200 = vadd.f32 %v2879, %v3199
      %3201 = vmatprep.mubr.bf16.mxu0 0
      %3202 = vmatmul.mubr.bf16.gmra.mxu0 %v3045
      %v3203 = vpop.f32.mrf.mxu0
      %v3204 = vadd.f32 %v2884, %v3203
      %v3205 = vpop.f32.mrf.mxu0
      %v3206 = vadd.f32 %v2884, %v3205
      %v3207 = vpop.f32.mrf.mxu0
      %v3208 = vadd.f32 %v2889, %v3207
      %v3209 = vpop.f32.mrf.mxu0
      %v3210 = vadd.f32 %v2889, %v3209
      %3211 = vmatprep.mubr.bf16.mxu0 0
      %3212 = vmatmul.mubr.bf16.gmra.mxu0 %v3048
      %v3213 = vpop.f32.mrf.mxu0
      %v3214 = vadd.f32 %v2894, %v3213
      %v3215 = vpop.f32.mrf.mxu0
      %v3216 = vadd.f32 %v2894, %v3215
      %v3217 = vpop.f32.mrf.mxu0
      %v3218 = vadd.f32 %v2899, %v3217
      %v3219 = vpop.f32.mrf.mxu0
      %v3220 = vadd.f32 %v2899, %v3219
      %3221 = vmatprep.mubr.bf16.mxu0 0
      %3222 = vmatmul.mubr.bf16.gmra.mxu0 %v3051
      %v3223 = vpop.f32.mrf.mxu0
      %v3224 = vadd.f32 %v2904, %v3223
      %v3225 = vpop.f32.mrf.mxu0
      %v3226 = vadd.f32 %v2904, %v3225
      %v3227 = vpop.f32.mrf.mxu0
      %v3228 = vadd.f32 %v2909, %v3227
      %v3229 = vpop.f32.mrf.mxu0
      %v3230 = vadd.f32 %v2909, %v3229
      %3231 = vmatprep.mubr.bf16.mxu0 0
      %3232 = vmatmul.mubr.bf16.gmra.mxu0 %v3054
      %v3233 = vpop.f32.mrf.mxu0
      %v3234 = vadd.f32 %v2914, %v3233
      %v3235 = vpop.f32.mrf.mxu0
      %v3236 = vadd.f32 %v2914, %v3235
      %v3237 = vpop.f32.mrf.mxu0
      %v3238 = vadd.f32 %v2919, %v3237
      %v3239 = vpop.f32.mrf.mxu0
      %v3240 = vadd.f32 %v2919, %v3239
      %3241 = vmatprep.mubr.bf16.mxu0 0
      %3242 = vmatmul.mubr.bf16.gmra.mxu0 %v3057
      %v3243 = vpop.f32.mrf.mxu0
      %v3244 = vadd.f32 %v2924, %v3243
      %v3245 = vpop.f32.mrf.mxu0
      %v3246 = vadd.f32 %v2924, %v3245
      %v3247 = vpop.f32.mrf.mxu0
      %v3248 = vadd.f32 %v2929, %v3247
      %v3249 = vpop.f32.mrf.mxu0
      %v3250 = vadd.f32 %v2929, %v3249
      %3251 = vdwg.mxu0
      %v3252 = vmax.f32 %v3094, 0.0
      %v3253 = vmax.f32 %v3096, 0.0
      %v3254 = vmax.f32 %v3098, 0.0
      %v3255 = vmax.f32 %v3100, 0.0
      %v3256 = vmax.f32 %v3104, 0.0
      %v3257 = vmax.f32 %v3106, 0.0
      %v3258 = vmax.f32 %v3108, 0.0
      %v3259 = vmax.f32 %v3110, 0.0
      %v3260 = vmax.f32 %v3114, 0.0
      %v3261 = vmax.f32 %v3116, 0.0
      %v3262 = vmax.f32 %v3118, 0.0
      %v3263 = vmax.f32 %v3120, 0.0
      %v3264 = vmax.f32 %v3124, 0.0
      %v3265 = vmax.f32 %v3126, 0.0
      %v3266 = vmax.f32 %v3128, 0.0
      %v3267 = vmax.f32 %v3130, 0.0
      %v3268 = vmax.f32 %v3134, 0.0
      %v3269 = vmax.f32 %v3136, 0.0
      %v3270 = vmax.f32 %v3138, 0.0
      %v3271 = vmax.f32 %v3140, 0.0
      %v3272 = vmax.f32 %v3144, 0.0
      %v3273 = vmax.f32 %v3146, 0.0
      %v3274 = vmax.f32 %v3148, 0.0
      %v3275 = vmax.f32 %v3150, 0.0
      %v3276 = vmax.f32 %v3154, 0.0
      %v3277 = vmax.f32 %v3156, 0.0
      %v3278 = vmax.f32 %v3158, 0.0
      %v3279 = vmax.f32 %v3160, 0.0
      %v3280 = vmax.f32 %v3164, 0.0
      %v3281 = vmax.f32 %v3166, 0.0
      %v3282 = vmax.f32 %v3168, 0.0
      %v3283 = vmax.f32 %v3170, 0.0
      %v3284 = vmax.f32 %v3174, 0.0
      %v3285 = vmax.f32 %v3176, 0.0
      %v3286 = vmax.f32 %v3178, 0.0
      %v3287 = vmax.f32 %v3180, 0.0
      %v3288 = vmax.f32 %v3184, 0.0
      %v3289 = vmax.f32 %v3186, 0.0
      %v3290 = vmax.f32 %v3188, 0.0
      %v3291 = vmax.f32 %v3190, 0.0
      %v3292 = vmax.f32 %v3194, 0.0
      %v3293 = vmax.f32 %v3196, 0.0
      %v3294 = vmax.f32 %v3198, 0.0
      %v3295 = vmax.f32 %v3200, 0.0
      %v3296 = vmax.f32 %v3204, 0.0
      %v3297 = vmax.f32 %v3206, 0.0
      %v3298 = vmax.f32 %v3208, 0.0
      %v3299 = vmax.f32 %v3210, 0.0
      %v3300 = vmax.f32 %v3214, 0.0
      %v3301 = vmax.f32 %v3216, 0.0
      %v3302 = vmax.f32 %v3218, 0.0
      %v3303 = vmax.f32 %v3220, 0.0
      %v3304 = vmax.f32 %v3224, 0.0
      %v3305 = vmax.f32 %v3226, 0.0
      %v3306 = vmax.f32 %v3228, 0.0
      %v3307 = vmax.f32 %v3230, 0.0
      %v3308 = vmax.f32 %v3234, 0.0
      %v3309 = vmax.f32 %v3236, 0.0
      %v3310 = vmax.f32 %v3238, 0.0
      %v3311 = vmax.f32 %v3240, 0.0
      %v3312 = vmax.f32 %v3244, 0.0
      %v3313 = vmax.f32 %v3246, 0.0
      %v3314 = vmax.f32 %v3248, 0.0
      %v3315 = vmax.f32 %v3250, 0.0
      %v3316 = vpack.c.bf16 %v3254, %v3252
      %v3317 = vpack.c.bf16 %v3255, %v3253
      %v3318 = vpack.c.bf16 %v3258, %v3256
      %v3319 = vpack.c.bf16 %v3259, %v3257
      %v3320 = vpack.c.bf16 %v3262, %v3260
      %v3321 = vpack.c.bf16 %v3263, %v3261
      %v3322 = vpack.c.bf16 %v3266, %v3264
      %v3323 = vpack.c.bf16 %v3267, %v3265
      %v3324 = vpack.c.bf16 %v3270, %v3268
      %v3325 = vpack.c.bf16 %v3271, %v3269
      %v3326 = vpack.c.bf16 %v3274, %v3272
      %v3327 = vpack.c.bf16 %v3275, %v3273
      %v3328 = vpack.c.bf16 %v3278, %v3276
      %v3329 = vpack.c.bf16 %v3279, %v3277
      %v3330 = vpack.c.bf16 %v3282, %v3280
      %v3331 = vpack.c.bf16 %v3283, %v3281
      %v3332 = vpack.c.bf16 %v3286, %v3284
      %v3333 = vpack.c.bf16 %v3287, %v3285
      %v3334 = vpack.c.bf16 %v3290, %v3288
      %v3335 = vpack.c.bf16 %v3291, %v3289
      %v3336 = vpack.c.bf16 %v3294, %v3292
      %v3337 = vpack.c.bf16 %v3295, %v3293
      %v3338 = vpack.c.bf16 %v3298, %v3296
      %v3339 = vpack.c.bf16 %v3299, %v3297
      %v3340 = vpack.c.bf16 %v3302, %v3300
      %v3341 = vpack.c.bf16 %v3303, %v3301
      %v3342 = vpack.c.bf16 %v3306, %v3304
      %v3343 = vpack.c.bf16 %v3307, %v3305
      %v3344 = vpack.c.bf16 %v3310, %v3308
      %v3345 = vpack.c.bf16 %v3311, %v3309
      %v3346 = vpack.c.bf16 %v3314, %v3312
      %v3347 = vpack.c.bf16 %v3315, %v3313
      %s3348 = scalar_lea.vmem %s5, 96
      %v3349 = vld [vmem:[%s3348] sm:$0xff]
      %v3350 = vld [vmem:[%s3348 + $0x8] sm:$0xff]
      %v3351 = vld [vmem:[%s3348 + $0x10] sm:$0xff]
      %v3352 = vld [vmem:[%s3348 + $0x18] sm:$0xff]
      %v3357 = vunpack.c.l.b16 %v3349
      %v3358 = vunpack.c.h.b16 %v3349
      %v3359 = vunpack.c.l.b16 %v3350
      %v3360 = vunpack.c.h.b16 %v3350
      %v3361 = vunpack.c.l.b16 %v3351
      %v3362 = vunpack.c.h.b16 %v3351
      %v3363 = vunpack.c.l.b16 %v3352
      %v3364 = vunpack.c.h.b16 %v3352
      %v3365 = vpack.c.b16 %v3359, %v3357
      %v3366 = vpack.c.b16 %v3360, %v3358
      %v3367 = vpack.c.b16 %v3363, %v3361
      %v3368 = vpack.c.b16 %v3364, %v3362
      %3373 = vmatprep.subr.bf16.mxu0 %v3331
      %3374 = vmatpush1.bf16.msra.mxu0 %v3330
      %3375 = vmatprep.subr.bf16.mxu0 %v3329
      %3376 = vmatpush1.bf16.msra.mxu0 %v3328
      %3377 = vmatprep.subr.bf16.mxu0 %v3327
      %3378 = vmatpush1.bf16.msra.mxu0 %v3326
      %3379 = vmatprep.subr.bf16.mxu0 %v3325
      %3380 = vmatpush1.bf16.msra.mxu0 %v3324
      %3381 = vmatprep.subr.bf16.mxu0 %v3323
      %3382 = vmatpush1.bf16.msra.mxu0 %v3322
      %3383 = vmatprep.subr.bf16.mxu0 %v3321
      %3384 = vmatpush1.bf16.msra.mxu0 %v3320
      %3385 = vmatprep.subr.bf16.mxu0 %v3319
      %3386 = vmatpush1.bf16.msra.mxu0 %v3318
      %3387 = vmatprep.subr.bf16.mxu0 %v3317
      %3388 = vmatpush1.bf16.msra.mxu0 %v3316
      %3389 = vmatprep.subr.bf16.mxu0 %v3347
      %3390 = vmatpush2.bf16.msra.mxu0 %v3346
      %3391 = vmatprep.subr.bf16.mxu0 %v3345
      %3392 = vmatpush2.bf16.msra.mxu0 %v3344
      %3393 = vmatprep.subr.bf16.mxu0 %v3343
      %3394 = vmatpush2.bf16.msra.mxu0 %v3342
      %3395 = vmatprep.subr.bf16.mxu0 %v3341
      %3396 = vmatpush2.bf16.msra.mxu0 %v3340
      %3397 = vmatprep.subr.bf16.mxu0 %v3339
      %3398 = vmatpush2.bf16.msra.mxu0 %v3338
      %3399 = vmatprep.subr.bf16.mxu0 %v3337
      %3400 = vmatpush2.bf16.msra.mxu0 %v3336
      %3401 = vmatprep.subr.bf16.mxu0 %v3335
      %3402 = vmatpush2.bf16.msra.mxu0 %v3334
      %3403 = vmatprep.subr.bf16.mxu0 %v3333
      %3404 = vmatpush2.bf16.msra.mxu0 %v3332
      %3405 = vmatprep.mubr.bf16.mxu0 %v3366
      %3406 = vmatmul.mubr.bf16.gmra.mxu0 %v3365
      %v3407 = vpop.f32.mrf.mxu0
      %v3408 = vadd.f32 0.0, %v3407
      %v3409 = vpop.f32.mrf.mxu0
      %v3410 = vadd.f32 0.0, %v3409
      %v3411 = vpop.f32.mrf.mxu0
      %v3412 = vadd.f32 0.0, %v3411
      %v3413 = vpop.f32.mrf.mxu0
      %v3414 = vadd.f32 0.0, %v3413
      %3415 = vmatprep.mubr.bf16.mxu0 %v3368
      %3416 = vmatmul.mubr.bf16.gmra.mxu0 %v3367
      %v3417 = vpop.f32.mrf.mxu0
      %v3418 = vadd.f32 0.0, %v3417
      %v3419 = vpop.f32.mrf.mxu0
      %v3420 = vadd.f32 0.0, %v3419
      %v3421 = vpop.f32.mrf.mxu0
      %v3422 = vadd.f32 0.0, %v3421
      %v3423 = vpop.f32.mrf.mxu0
      %v3424 = vadd.f32 0.0, %v3423
      %3425 = vdwg.mxu0
      %v3426 = vadd.f32 %v2697, %v3408
      %v3427 = vadd.f32 %v2698, %v3410
      %v3428 = vadd.f32 %v2699, %v3412
      %v3429 = vadd.f32 %v2700, %v3414
      %v3430 = vadd.f32 %v2701, %v3418
      %v3431 = vadd.f32 %v2702, %v3420
      %v3432 = vadd.f32 %v2703, %v3422
      %v3433 = vadd.f32 %v2704, %v3424
      %s3434 = scalar_lea.vmem %s3, 512
      %v3435 = vld [vmem:[%s3434] sm:$0xf]
      %v3436 = vld [vmem:[%s3434 + $0x4] sm:$0xf]
      %v3437 = vld [vmem:[%s3434 + $0x8] sm:$0xf]
      %v3438 = vld [vmem:[%s3434 + $0xc] sm:$0xf]
      %v3439 = vld [vmem:[%s3434 + $0x10] sm:$0xf]
      %v3440 = vld [vmem:[%s3434 + $0x14] sm:$0xf]
      %v3441 = vld [vmem:[%s3434 + $0x18] sm:$0xf]
      %v3442 = vld [vmem:[%s3434 + $0x1c] sm:$0xf]
      %v3443 = vld [vmem:[%s3434 + $0x20] sm:$0xf]
      %v3444 = vld [vmem:[%s3434 + $0x24] sm:$0xf]
      %v3445 = vld [vmem:[%s3434 + $0x28] sm:$0xf]
      %v3446 = vld [vmem:[%s3434 + $0x2c] sm:$0xf]
      %v3447 = vld [vmem:[%s3434 + $0x30] sm:$0xf]
      %v3448 = vld [vmem:[%s3434 + $0x34] sm:$0xf]
      %v3449 = vld [vmem:[%s3434 + $0x38] sm:$0xf]
      %v3450 = vld [vmem:[%s3434 + $0x3c] sm:$0xf]
      %v3451 = vld [vmem:[%s3434 + $0x40] sm:$0xf]
      %v3452 = vld [vmem:[%s3434 + $0x44] sm:$0xf]
      %v3453 = vld [vmem:[%s3434 + $0x48] sm:$0xf]
      %v3454 = vld [vmem:[%s3434 + $0x4c] sm:$0xf]
      %v3455 = vld [vmem:[%s3434 + $0x50] sm:$0xf]
      %v3456 = vld [vmem:[%s3434 + $0x54] sm:$0xf]
      %v3457 = vld [vmem:[%s3434 + $0x58] sm:$0xf]
      %v3458 = vld [vmem:[%s3434 + $0x5c] sm:$0xf]
      %v3459 = vld [vmem:[%s3434 + $0x60] sm:$0xf]
      %v3460 = vld [vmem:[%s3434 + $0x64] sm:$0xf]
      %v3461 = vld [vmem:[%s3434 + $0x68] sm:$0xf]
      %v3462 = vld [vmem:[%s3434 + $0x6c] sm:$0xf]
      %v3463 = vld [vmem:[%s3434 + $0x70] sm:$0xf]
      %v3464 = vld [vmem:[%s3434 + $0x74] sm:$0xf]
      %v3465 = vld [vmem:[%s3434 + $0x78] sm:$0xf]
      %v3466 = vld [vmem:[%s3434 + $0x7c] sm:$0xf]
      %s3467 = scalar_lea.vmem %s4, 1024
      %v3468 = vld [vmem:[%s3467] sm:$0xff]
      %v3469 = vld [vmem:[%s3467 + $0x8] sm:$0xff]
      %v3470 = vld [vmem:[%s3467 + $0x10] sm:$0xff]
      %v3471 = vld [vmem:[%s3467 + $0x18] sm:$0xff]
      %v3472 = vld [vmem:[%s3467 + $0x20] sm:$0xff]
      %v3473 = vld [vmem:[%s3467 + $0x28] sm:$0xff]
      %v3474 = vld [vmem:[%s3467 + $0x30] sm:$0xff]
      %v3475 = vld [vmem:[%s3467 + $0x38] sm:$0xff]
      %v3476 = vld [vmem:[%s3467 + $0x40] sm:$0xff]
      %v3477 = vld [vmem:[%s3467 + $0x48] sm:$0xff]
      %v3478 = vld [vmem:[%s3467 + $0x50] sm:$0xff]
      %v3479 = vld [vmem:[%s3467 + $0x58] sm:$0xff]
      %v3480 = vld [vmem:[%s3467 + $0x60] sm:$0xff]
      %v3481 = vld [vmem:[%s3467 + $0x68] sm:$0xff]
      %v3482 = vld [vmem:[%s3467 + $0x70] sm:$0xff]
      %v3483 = vld [vmem:[%s3467 + $0x78] sm:$0xff]
      %v3484 = vld [vmem:[%s3467 + $0x80] sm:$0xff]
      %v3485 = vld [vmem:[%s3467 + $0x88] sm:$0xff]
      %v3486 = vld [vmem:[%s3467 + $0x90] sm:$0xff]
      %v3487 = vld [vmem:[%s3467 + $0x98] sm:$0xff]
      %v3488 = vld [vmem:[%s3467 + $0xa0] sm:$0xff]
      %v3489 = vld [vmem:[%s3467 + $0xa8] sm:$0xff]
      %v3490 = vld [vmem:[%s3467 + $0xb0] sm:$0xff]
      %v3491 = vld [vmem:[%s3467 + $0xb8] sm:$0xff]
      %v3492 = vld [vmem:[%s3467 + $0xc0] sm:$0xff]
      %v3493 = vld [vmem:[%s3467 + $0xc8] sm:$0xff]
      %v3494 = vld [vmem:[%s3467 + $0xd0] sm:$0xff]
      %v3495 = vld [vmem:[%s3467 + $0xd8] sm:$0xff]
      %v3496 = vld [vmem:[%s3467 + $0xe0] sm:$0xff]
      %v3497 = vld [vmem:[%s3467 + $0xe8] sm:$0xff]
      %v3498 = vld [vmem:[%s3467 + $0xf0] sm:$0xff]
      %v3499 = vld [vmem:[%s3467 + $0xf8] sm:$0xff]
      %3501 = vset.pattern.permute.xlu0 0
      %3502 = vperm.xlu0 %3501, %v3468
      %v3503 = vpop.permute.xlu0 %3502
      %3506 = vset.pattern.permute.xlu0 0
      %3507 = vperm.xlu0 %3506, %v3469
      %v3508 = vpop.permute.xlu0 %3507
      %3511 = vset.pattern.permute.xlu0 0
      %3512 = vperm.xlu0 %3511, %v3470
      %v3513 = vpop.permute.xlu0 %3512
      %3516 = vset.pattern.permute.xlu0 0
      %3517 = vperm.xlu0 %3516, %v3471
      %v3518 = vpop.permute.xlu0 %3517
      %3521 = vset.pattern.permute.xlu0 0
      %3522 = vperm.xlu0 %3521, %v3472
      %v3523 = vpop.permute.xlu0 %3522
      %3526 = vset.pattern.permute.xlu0 0
      %3527 = vperm.xlu0 %3526, %v3473
      %v3528 = vpop.permute.xlu0 %3527
      %3531 = vset.pattern.permute.xlu0 0
      %3532 = vperm.xlu0 %3531, %v3474
      %v3533 = vpop.permute.xlu0 %3532
      %3536 = vset.pattern.permute.xlu0 0
      %3537 = vperm.xlu0 %3536, %v3475
      %v3538 = vpop.permute.xlu0 %3537
      %3541 = vset.pattern.permute.xlu0 0
      %3542 = vperm.xlu0 %3541, %v3476
      %v3543 = vpop.permute.xlu0 %3542
      %3546 = vset.pattern.permute.xlu0 0
      %3547 = vperm.xlu0 %3546, %v3477
      %v3548 = vpop.permute.xlu0 %3547
      %3551 = vset.pattern.permute.xlu0 0
      %3552 = vperm.xlu0 %3551, %v3478
      %v3553 = vpop.permute.xlu0 %3552
      %3556 = vset.pattern.permute.xlu0 0
      %3557 = vperm.xlu0 %3556, %v3479
      %v3558 = vpop.permute.xlu0 %3557
      %3561 = vset.pattern.permute.xlu0 0
      %3562 = vperm.xlu0 %3561, %v3480
      %v3563 = vpop.permute.xlu0 %3562
      %3566 = vset.pattern.permute.xlu0 0
      %3567 = vperm.xlu0 %3566, %v3481
      %v3568 = vpop.permute.xlu0 %3567
      %3571 = vset.pattern.permute.xlu0 0
      %3572 = vperm.xlu0 %3571, %v3482
      %v3573 = vpop.permute.xlu0 %3572
      %3576 = vset.pattern.permute.xlu0 0
      %3577 = vperm.xlu0 %3576, %v3483
      %v3578 = vpop.permute.xlu0 %3577
      %3581 = vset.pattern.permute.xlu0 0
      %3582 = vperm.xlu0 %3581, %v3484
      %v3583 = vpop.permute.xlu0 %3582
      %3586 = vset.pattern.permute.xlu0 0
      %3587 = vperm.xlu0 %3586, %v3485
      %v3588 = vpop.permute.xlu0 %3587
      %3591 = vset.pattern.permute.xlu0 0
      %3592 = vperm.xlu0 %3591, %v3486
      %v3593 = vpop.permute.xlu0 %3592
      %3596 = vset.pattern.permute.xlu0 0
      %3597 = vperm.xlu0 %3596, %v3487
      %v3598 = vpop.permute.xlu0 %3597
      %3601 = vset.pattern.permute.xlu0 0
      %3602 = vperm.xlu0 %3601, %v3488
      %v3603 = vpop.permute.xlu0 %3602
      %3606 = vset.pattern.permute.xlu0 0
      %3607 = vperm.xlu0 %3606, %v3489
      %v3608 = vpop.permute.xlu0 %3607
      %3611 = vset.pattern.permute.xlu0 0
      %3612 = vperm.xlu0 %3611, %v3490
      %v3613 = vpop.permute.xlu0 %3612
      %3616 = vset.pattern.permute.xlu0 0
      %3617 = vperm.xlu0 %3616, %v3491
      %v3618 = vpop.permute.xlu0 %3617
      %3621 = vset.pattern.permute.xlu0 0
      %3622 = vperm.xlu0 %3621, %v3492
      %v3623 = vpop.permute.xlu0 %3622
      %3626 = vset.pattern.permute.xlu0 0
      %3627 = vperm.xlu0 %3626, %v3493
      %v3628 = vpop.permute.xlu0 %3627
      %3631 = vset.pattern.permute.xlu0 0
      %3632 = vperm.xlu0 %3631, %v3494
      %v3633 = vpop.permute.xlu0 %3632
      %3636 = vset.pattern.permute.xlu0 0
      %3637 = vperm.xlu0 %3636, %v3495
      %v3638 = vpop.permute.xlu0 %3637
      %3641 = vset.pattern.permute.xlu0 0
      %3642 = vperm.xlu0 %3641, %v3496
      %v3643 = vpop.permute.xlu0 %3642
      %3646 = vset.pattern.permute.xlu0 0
      %3647 = vperm.xlu0 %3646, %v3497
      %v3648 = vpop.permute.xlu0 %3647
      %3651 = vset.pattern.permute.xlu0 0
      %3652 = vperm.xlu0 %3651, %v3498
      %v3653 = vpop.permute.xlu0 %3652
      %3656 = vset.pattern.permute.xlu0 0
      %3657 = vperm.xlu0 %3656, %v3499
      %v3658 = vpop.permute.xlu0 %3657
      %v3692 = vunpack.c.l.b16 %v3435
      %v3693 = vunpack.c.l.b16 %v3436
      %v3694 = vunpack.c.l.b16 %v3437
      %v3695 = vunpack.c.l.b16 %v3438
      %v3696 = vunpack.c.l.b16 %v3439
      %v3697 = vunpack.c.l.b16 %v3440
      %v3698 = vunpack.c.l.b16 %v3441
      %v3699 = vunpack.c.l.b16 %v3442
      %v3700 = vunpack.c.l.b16 %v3443
      %v3701 = vunpack.c.l.b16 %v3444
      %v3702 = vunpack.c.l.b16 %v3445
      %v3703 = vunpack.c.l.b16 %v3446
      %v3704 = vunpack.c.l.b16 %v3447
      %v3705 = vunpack.c.l.b16 %v3448
      %v3706 = vunpack.c.l.b16 %v3449
      %v3707 = vunpack.c.l.b16 %v3450
      %v3708 = vunpack.c.l.b16 %v3451
      %v3709 = vunpack.c.l.b16 %v3452
      %v3710 = vunpack.c.l.b16 %v3453
      %v3711 = vunpack.c.l.b16 %v3454
      %v3712 = vunpack.c.l.b16 %v3455
      %v3713 = vunpack.c.l.b16 %v3456
      %v3714 = vunpack.c.l.b16 %v3457
      %v3715 = vunpack.c.l.b16 %v3458
      %v3716 = vunpack.c.l.b16 %v3459
      %v3717 = vunpack.c.l.b16 %v3460
      %v3718 = vunpack.c.l.b16 %v3461
      %v3719 = vunpack.c.l.b16 %v3462
      %v3720 = vunpack.c.l.b16 %v3463
      %v3721 = vunpack.c.l.b16 %v3464
      %v3722 = vunpack.c.l.b16 %v3465
      %v3723 = vunpack.c.l.b16 %v3466
      %v3724 = vpack.c.b16 %v3693, %v3692
      %v3725 = vpack.c.b16 %v3695, %v3694
      %v3726 = vpack.c.b16 %v3697, %v3696
      %v3727 = vpack.c.b16 %v3699, %v3698
      %v3728 = vpack.c.b16 %v3701, %v3700
      %v3729 = vpack.c.b16 %v3703, %v3702
      %v3730 = vpack.c.b16 %v3705, %v3704
      %v3731 = vpack.c.b16 %v3707, %v3706
      %v3732 = vpack.c.b16 %v3709, %v3708
      %v3733 = vpack.c.b16 %v3711, %v3710
      %v3734 = vpack.c.b16 %v3713, %v3712
      %v3735 = vpack.c.b16 %v3715, %v3714
      %v3736 = vpack.c.b16 %v3717, %v3716
      %v3737 = vpack.c.b16 %v3719, %v3718
      %v3738 = vpack.c.b16 %v3721, %v3720
      %v3739 = vpack.c.b16 %v3723, %v3722
      %v3741 = vsel %vm840, %v3724, 0
      %v3744 = vsel %vm840, %v3725, 0
      %v3747 = vsel %vm840, %v3726, 0
      %v3750 = vsel %vm840, %v3727, 0
      %v3753 = vsel %vm840, %v3728, 0
      %v3756 = vsel %vm840, %v3729, 0
      %v3759 = vsel %vm840, %v3730, 0
      %v3762 = vsel %vm840, %v3731, 0
      %v3765 = vsel %vm840, %v3732, 0
      %v3768 = vsel %vm840, %v3733, 0
      %v3771 = vsel %vm840, %v3734, 0
      %v3774 = vsel %vm840, %v3735, 0
      %v3777 = vsel %vm840, %v3736, 0
      %v3780 = vsel %vm840, %v3737, 0
      %v3783 = vsel %vm840, %v3738, 0
      %v3786 = vsel %vm840, %v3739, 0
      %3788 = vmatprep.subr.bf16.mxu0 0
      %3789 = vmatpush1.bf16.msra.mxu0 0
      %3790 = vmatprep.subr.bf16.mxu0 0
      %3791 = vmatpush1.bf16.msra.mxu0 0
      %3792 = vmatprep.subr.bf16.mxu0 0
      %3793 = vmatpush1.bf16.msra.mxu0 0
      %3794 = vmatprep.subr.bf16.mxu0 0
      %3795 = vmatpush1.bf16.msra.mxu0 0
      %3796 = vmatprep.subr.bf16.mxu0 %v535
      %3797 = vmatpush1.bf16.msra.mxu0 %v534
      %3798 = vmatprep.subr.bf16.mxu0 %v533
      %3799 = vmatpush1.bf16.msra.mxu0 %v532
      %3800 = vmatprep.subr.bf16.mxu0 %v531
      %3801 = vmatpush1.bf16.msra.mxu0 %v530
      %3802 = vmatprep.subr.bf16.mxu0 %v529
      %3803 = vmatpush1.bf16.msra.mxu0 %v528
      %3804 = vmatprep.subr.bf16.mxu0 0
      %3805 = vmatpush2.bf16.msra.mxu0 0
      %3806 = vmatprep.subr.bf16.mxu0 0
      %3807 = vmatpush2.bf16.msra.mxu0 0
      %3808 = vmatprep.subr.bf16.mxu0 0
      %3809 = vmatpush2.bf16.msra.mxu0 0
      %3810 = vmatprep.subr.bf16.mxu0 0
      %3811 = vmatpush2.bf16.msra.mxu0 0
      %3812 = vmatprep.subr.bf16.mxu0 0
      %3813 = vmatpush2.bf16.msra.mxu0 0
      %3814 = vmatprep.subr.bf16.mxu0 0
      %3815 = vmatpush2.bf16.msra.mxu0 0
      %3816 = vmatprep.subr.bf16.mxu0 0
      %3817 = vmatpush2.bf16.msra.mxu0 0
      %3818 = vmatprep.subr.bf16.mxu0 0
      %3819 = vmatpush2.bf16.msra.mxu0 0
      %3820 = vmatprep.mubr.bf16.mxu0 0
      %3821 = vmatmul.mubr.bf16.gmra.mxu0 %v3741
      %v3822 = vpop.f32.mrf.mxu0
      %v3823 = vadd.f32 %v3503, %v3822
      %v3824 = vpop.f32.mrf.mxu0
      %v3825 = vadd.f32 %v3503, %v3824
      %v3826 = vpop.f32.mrf.mxu0
      %v3827 = vadd.f32 %v3508, %v3826
      %v3828 = vpop.f32.mrf.mxu0
      %v3829 = vadd.f32 %v3508, %v3828
      %3830 = vmatprep.mubr.bf16.mxu0 0
      %3831 = vmatmul.mubr.bf16.gmra.mxu0 %v3744
      %v3832 = vpop.f32.mrf.mxu0
      %v3833 = vadd.f32 %v3513, %v3832
      %v3834 = vpop.f32.mrf.mxu0
      %v3835 = vadd.f32 %v3513, %v3834
      %v3836 = vpop.f32.mrf.mxu0
      %v3837 = vadd.f32 %v3518, %v3836
      %v3838 = vpop.f32.mrf.mxu0
      %v3839 = vadd.f32 %v3518, %v3838
      %3840 = vmatprep.mubr.bf16.mxu0 0
      %3841 = vmatmul.mubr.bf16.gmra.mxu0 %v3747
      %v3842 = vpop.f32.mrf.mxu0
      %v3843 = vadd.f32 %v3523, %v3842
      %v3844 = vpop.f32.mrf.mxu0
      %v3845 = vadd.f32 %v3523, %v3844
      %v3846 = vpop.f32.mrf.mxu0
      %v3847 = vadd.f32 %v3528, %v3846
      %v3848 = vpop.f32.mrf.mxu0
      %v3849 = vadd.f32 %v3528, %v3848
      %3850 = vmatprep.mubr.bf16.mxu0 0
      %3851 = vmatmul.mubr.bf16.gmra.mxu0 %v3750
      %v3852 = vpop.f32.mrf.mxu0
      %v3853 = vadd.f32 %v3533, %v3852
      %v3854 = vpop.f32.mrf.mxu0
      %v3855 = vadd.f32 %v3533, %v3854
      %v3856 = vpop.f32.mrf.mxu0
      %v3857 = vadd.f32 %v3538, %v3856
      %v3858 = vpop.f32.mrf.mxu0
      %v3859 = vadd.f32 %v3538, %v3858
      %3860 = vmatprep.mubr.bf16.mxu0 0
      %3861 = vmatmul.mubr.bf16.gmra.mxu0 %v3753
      %v3862 = vpop.f32.mrf.mxu0
      %v3863 = vadd.f32 %v3543, %v3862
      %v3864 = vpop.f32.mrf.mxu0
      %v3865 = vadd.f32 %v3543, %v3864
      %v3866 = vpop.f32.mrf.mxu0
      %v3867 = vadd.f32 %v3548, %v3866
      %v3868 = vpop.f32.mrf.mxu0
      %v3869 = vadd.f32 %v3548, %v3868
      %3870 = vmatprep.mubr.bf16.mxu0 0
      %3871 = vmatmul.mubr.bf16.gmra.mxu0 %v3756
      %v3872 = vpop.f32.mrf.mxu0
      %v3873 = vadd.f32 %v3553, %v3872
      %v3874 = vpop.f32.mrf.mxu0
      %v3875 = vadd.f32 %v3553, %v3874
      %v3876 = vpop.f32.mrf.mxu0
      %v3877 = vadd.f32 %v3558, %v3876
      %v3878 = vpop.f32.mrf.mxu0
      %v3879 = vadd.f32 %v3558, %v3878
      %3880 = vmatprep.mubr.bf16.mxu0 0
      %3881 = vmatmul.mubr.bf16.gmra.mxu0 %v3759
      %v3882 = vpop.f32.mrf.mxu0
      %v3883 = vadd.f32 %v3563, %v3882
      %v3884 = vpop.f32.mrf.mxu0
      %v3885 = vadd.f32 %v3563, %v3884
      %v3886 = vpop.f32.mrf.mxu0
      %v3887 = vadd.f32 %v3568, %v3886
      %v3888 = vpop.f32.mrf.mxu0
      %v3889 = vadd.f32 %v3568, %v3888
      %3890 = vmatprep.mubr.bf16.mxu0 0
      %3891 = vmatmul.mubr.bf16.gmra.mxu0 %v3762
      %v3892 = vpop.f32.mrf.mxu0
      %v3893 = vadd.f32 %v3573, %v3892
      %v3894 = vpop.f32.mrf.mxu0
      %v3895 = vadd.f32 %v3573, %v3894
      %v3896 = vpop.f32.mrf.mxu0
      %v3897 = vadd.f32 %v3578, %v3896
      %v3898 = vpop.f32.mrf.mxu0
      %v3899 = vadd.f32 %v3578, %v3898
      %3900 = vmatprep.mubr.bf16.mxu0 0
      %3901 = vmatmul.mubr.bf16.gmra.mxu0 %v3765
      %v3902 = vpop.f32.mrf.mxu0
      %v3903 = vadd.f32 %v3583, %v3902
      %v3904 = vpop.f32.mrf.mxu0
      %v3905 = vadd.f32 %v3583, %v3904
      %v3906 = vpop.f32.mrf.mxu0
      %v3907 = vadd.f32 %v3588, %v3906
      %v3908 = vpop.f32.mrf.mxu0
      %v3909 = vadd.f32 %v3588, %v3908
      %3910 = vmatprep.mubr.bf16.mxu0 0
      %3911 = vmatmul.mubr.bf16.gmra.mxu0 %v3768
      %v3912 = vpop.f32.mrf.mxu0
      %v3913 = vadd.f32 %v3593, %v3912
      %v3914 = vpop.f32.mrf.mxu0
      %v3915 = vadd.f32 %v3593, %v3914
      %v3916 = vpop.f32.mrf.mxu0
      %v3917 = vadd.f32 %v3598, %v3916
      %v3918 = vpop.f32.mrf.mxu0
      %v3919 = vadd.f32 %v3598, %v3918
      %3920 = vmatprep.mubr.bf16.mxu0 0
      %3921 = vmatmul.mubr.bf16.gmra.mxu0 %v3771
      %v3922 = vpop.f32.mrf.mxu0
      %v3923 = vadd.f32 %v3603, %v3922
      %v3924 = vpop.f32.mrf.mxu0
      %v3925 = vadd.f32 %v3603, %v3924
      %v3926 = vpop.f32.mrf.mxu0
      %v3927 = vadd.f32 %v3608, %v3926
      %v3928 = vpop.f32.mrf.mxu0
      %v3929 = vadd.f32 %v3608, %v3928
      %3930 = vmatprep.mubr.bf16.mxu0 0
      %3931 = vmatmul.mubr.bf16.gmra.mxu0 %v3774
      %v3932 = vpop.f32.mrf.mxu0
      %v3933 = vadd.f32 %v3613, %v3932
      %v3934 = vpop.f32.mrf.mxu0
      %v3935 = vadd.f32 %v3613, %v3934
      %v3936 = vpop.f32.mrf.mxu0
      %v3937 = vadd.f32 %v3618, %v3936
      %v3938 = vpop.f32.mrf.mxu0
      %v3939 = vadd.f32 %v3618, %v3938
      %3940 = vmatprep.mubr.bf16.mxu0 0
      %3941 = vmatmul.mubr.bf16.gmra.mxu0 %v3777
      %v3942 = vpop.f32.mrf.mxu0
      %v3943 = vadd.f32 %v3623, %v3942
      %v3944 = vpop.f32.mrf.mxu0
      %v3945 = vadd.f32 %v3623, %v3944
      %v3946 = vpop.f32.mrf.mxu0
      %v3947 = vadd.f32 %v3628, %v3946
      %v3948 = vpop.f32.mrf.mxu0
      %v3949 = vadd.f32 %v3628, %v3948
      %3950 = vmatprep.mubr.bf16.mxu0 0
      %3951 = vmatmul.mubr.bf16.gmra.mxu0 %v3780
      %v3952 = vpop.f32.mrf.mxu0
      %v3953 = vadd.f32 %v3633, %v3952
      %v3954 = vpop.f32.mrf.mxu0
      %v3955 = vadd.f32 %v3633, %v3954
      %v3956 = vpop.f32.mrf.mxu0
      %v3957 = vadd.f32 %v3638, %v3956
      %v3958 = vpop.f32.mrf.mxu0
      %v3959 = vadd.f32 %v3638, %v3958
      %3960 = vmatprep.mubr.bf16.mxu0 0
      %3961 = vmatmul.mubr.bf16.gmra.mxu0 %v3783
      %v3962 = vpop.f32.mrf.mxu0
      %v3963 = vadd.f32 %v3643, %v3962
      %v3964 = vpop.f32.mrf.mxu0
      %v3965 = vadd.f32 %v3643, %v3964
      %v3966 = vpop.f32.mrf.mxu0
      %v3967 = vadd.f32 %v3648, %v3966
      %v3968 = vpop.f32.mrf.mxu0
      %v3969 = vadd.f32 %v3648, %v3968
      %3970 = vmatprep.mubr.bf16.mxu0 0
      %3971 = vmatmul.mubr.bf16.gmra.mxu0 %v3786
      %v3972 = vpop.f32.mrf.mxu0
      %v3973 = vadd.f32 %v3653, %v3972
      %v3974 = vpop.f32.mrf.mxu0
      %v3975 = vadd.f32 %v3653, %v3974
      %v3976 = vpop.f32.mrf.mxu0
      %v3977 = vadd.f32 %v3658, %v3976
      %v3978 = vpop.f32.mrf.mxu0
      %v3979 = vadd.f32 %v3658, %v3978
      %3980 = vdwg.mxu0
      %v3981 = vmax.f32 %v3823, 0.0
      %v3982 = vmax.f32 %v3825, 0.0
      %v3983 = vmax.f32 %v3827, 0.0
      %v3984 = vmax.f32 %v3829, 0.0
      %v3985 = vmax.f32 %v3833, 0.0
      %v3986 = vmax.f32 %v3835, 0.0
      %v3987 = vmax.f32 %v3837, 0.0
      %v3988 = vmax.f32 %v3839, 0.0
      %v3989 = vmax.f32 %v3843, 0.0
      %v3990 = vmax.f32 %v3845, 0.0
      %v3991 = vmax.f32 %v3847, 0.0
      %v3992 = vmax.f32 %v3849, 0.0
      %v3993 = vmax.f32 %v3853, 0.0
      %v3994 = vmax.f32 %v3855, 0.0
      %v3995 = vmax.f32 %v3857, 0.0
      %v3996 = vmax.f32 %v3859, 0.0
      %v3997 = vmax.f32 %v3863, 0.0
      %v3998 = vmax.f32 %v3865, 0.0
      %v3999 = vmax.f32 %v3867, 0.0
      %v4000 = vmax.f32 %v3869, 0.0
      %v4001 = vmax.f32 %v3873, 0.0
      %v4002 = vmax.f32 %v3875, 0.0
      %v4003 = vmax.f32 %v3877, 0.0
      %v4004 = vmax.f32 %v3879, 0.0
      %v4005 = vmax.f32 %v3883, 0.0
      %v4006 = vmax.f32 %v3885, 0.0
      %v4007 = vmax.f32 %v3887, 0.0
      %v4008 = vmax.f32 %v3889, 0.0
      %v4009 = vmax.f32 %v3893, 0.0
      %v4010 = vmax.f32 %v3895, 0.0
      %v4011 = vmax.f32 %v3897, 0.0
      %v4012 = vmax.f32 %v3899, 0.0
      %v4013 = vmax.f32 %v3903, 0.0
      %v4014 = vmax.f32 %v3905, 0.0
      %v4015 = vmax.f32 %v3907, 0.0
      %v4016 = vmax.f32 %v3909, 0.0
      %v4017 = vmax.f32 %v3913, 0.0
      %v4018 = vmax.f32 %v3915, 0.0
      %v4019 = vmax.f32 %v3917, 0.0
      %v4020 = vmax.f32 %v3919, 0.0
      %v4021 = vmax.f32 %v3923, 0.0
      %v4022 = vmax.f32 %v3925, 0.0
      %v4023 = vmax.f32 %v3927, 0.0
      %v4024 = vmax.f32 %v3929, 0.0
      %v4025 = vmax.f32 %v3933, 0.0
      %v4026 = vmax.f32 %v3935, 0.0
      %v4027 = vmax.f32 %v3937, 0.0
      %v4028 = vmax.f32 %v3939, 0.0
      %v4029 = vmax.f32 %v3943, 0.0
      %v4030 = vmax.f32 %v3945, 0.0
      %v4031 = vmax.f32 %v3947, 0.0
      %v4032 = vmax.f32 %v3949, 0.0
      %v4033 = vmax.f32 %v3953, 0.0
      %v4034 = vmax.f32 %v3955, 0.0
      %v4035 = vmax.f32 %v3957, 0.0
      %v4036 = vmax.f32 %v3959, 0.0
      %v4037 = vmax.f32 %v3963, 0.0
      %v4038 = vmax.f32 %v3965, 0.0
      %v4039 = vmax.f32 %v3967, 0.0
      %v4040 = vmax.f32 %v3969, 0.0
      %v4041 = vmax.f32 %v3973, 0.0
      %v4042 = vmax.f32 %v3975, 0.0
      %v4043 = vmax.f32 %v3977, 0.0
      %v4044 = vmax.f32 %v3979, 0.0
      %v4045 = vpack.c.bf16 %v3983, %v3981
      %v4046 = vpack.c.bf16 %v3984, %v3982
      %v4047 = vpack.c.bf16 %v3987, %v3985
      %v4048 = vpack.c.bf16 %v3988, %v3986
      %v4049 = vpack.c.bf16 %v3991, %v3989
      %v4050 = vpack.c.bf16 %v3992, %v3990
      %v4051 = vpack.c.bf16 %v3995, %v3993
      %v4052 = vpack.c.bf16 %v3996, %v3994
      %v4053 = vpack.c.bf16 %v3999, %v3997
      %v4054 = vpack.c.bf16 %v4000, %v3998
      %v4055 = vpack.c.bf16 %v4003, %v4001
      %v4056 = vpack.c.bf16 %v4004, %v4002
      %v4057 = vpack.c.bf16 %v4007, %v4005
      %v4058 = vpack.c.bf16 %v4008, %v4006
      %v4059 = vpack.c.bf16 %v4011, %v4009
      %v4060 = vpack.c.bf16 %v4012, %v4010
      %v4061 = vpack.c.bf16 %v4015, %v4013
      %v4062 = vpack.c.bf16 %v4016, %v4014
      %v4063 = vpack.c.bf16 %v4019, %v4017
      %v4064 = vpack.c.bf16 %v4020, %v4018
      %v4065 = vpack.c.bf16 %v4023, %v4021
      %v4066 = vpack.c.bf16 %v4024, %v4022
      %v4067 = vpack.c.bf16 %v4027, %v4025
      %v4068 = vpack.c.bf16 %v4028, %v4026
      %v4069 = vpack.c.bf16 %v4031, %v4029
      %v4070 = vpack.c.bf16 %v4032, %v4030
      %v4071 = vpack.c.bf16 %v4035, %v4033
      %v4072 = vpack.c.bf16 %v4036, %v4034
      %v4073 = vpack.c.bf16 %v4039, %v4037
      %v4074 = vpack.c.bf16 %v4040, %v4038
      %v4075 = vpack.c.bf16 %v4043, %v4041
      %v4076 = vpack.c.bf16 %v4044, %v4042
      %s4077 = scalar_lea.vmem %s5, 128
      %v4078 = vld [vmem:[%s4077] sm:$0xff]
      %v4079 = vld [vmem:[%s4077 + $0x8] sm:$0xff]
      %v4080 = vld [vmem:[%s4077 + $0x10] sm:$0xff]
      %v4081 = vld [vmem:[%s4077 + $0x18] sm:$0xff]
      %v4086 = vunpack.c.l.b16 %v4078
      %v4087 = vunpack.c.h.b16 %v4078
      %v4088 = vunpack.c.l.b16 %v4079
      %v4089 = vunpack.c.h.b16 %v4079
      %v4090 = vunpack.c.l.b16 %v4080
      %v4091 = vunpack.c.h.b16 %v4080
      %v4092 = vunpack.c.l.b16 %v4081
      %v4093 = vunpack.c.h.b16 %v4081
      %v4094 = vpack.c.b16 %v4088, %v4086
      %v4095 = vpack.c.b16 %v4089, %v4087
      %v4096 = vpack.c.b16 %v4092, %v4090
      %v4097 = vpack.c.b16 %v4093, %v4091
      %4102 = vmatprep.subr.bf16.mxu0 %v4060
      %4103 = vmatpush1.bf16.msra.mxu0 %v4059
      %4104 = vmatprep.subr.bf16.mxu0 %v4058
      %4105 = vmatpush1.bf16.msra.mxu0 %v4057
      %4106 = vmatprep.subr.bf16.mxu0 %v4056
      %4107 = vmatpush1.bf16.msra.mxu0 %v4055
      %4108 = vmatprep.subr.bf16.mxu0 %v4054
      %4109 = vmatpush1.bf16.msra.mxu0 %v4053
      %4110 = vmatprep.subr.bf16.mxu0 %v4052
      %4111 = vmatpush1.bf16.msra.mxu0 %v4051
      %4112 = vmatprep.subr.bf16.mxu0 %v4050
      %4113 = vmatpush1.bf16.msra.mxu0 %v4049
      %4114 = vmatprep.subr.bf16.mxu0 %v4048
      %4115 = vmatpush1.bf16.msra.mxu0 %v4047
      %4116 = vmatprep.subr.bf16.mxu0 %v4046
      %4117 = vmatpush1.bf16.msra.mxu0 %v4045
      %4118 = vmatprep.subr.bf16.mxu0 %v4076
      %4119 = vmatpush2.bf16.msra.mxu0 %v4075
      %4120 = vmatprep.subr.bf16.mxu0 %v4074
      %4121 = vmatpush2.bf16.msra.mxu0 %v4073
      %4122 = vmatprep.subr.bf16.mxu0 %v4072
      %4123 = vmatpush2.bf16.msra.mxu0 %v4071
      %4124 = vmatprep.subr.bf16.mxu0 %v4070
      %4125 = vmatpush2.bf16.msra.mxu0 %v4069
      %4126 = vmatprep.subr.bf16.mxu0 %v4068
      %4127 = vmatpush2.bf16.msra.mxu0 %v4067
      %4128 = vmatprep.subr.bf16.mxu0 %v4066
      %4129 = vmatpush2.bf16.msra.mxu0 %v4065
      %4130 = vmatprep.subr.bf16.mxu0 %v4064
      %4131 = vmatpush2.bf16.msra.mxu0 %v4063
      %4132 = vmatprep.subr.bf16.mxu0 %v4062
      %4133 = vmatpush2.bf16.msra.mxu0 %v4061
      %4134 = vmatprep.mubr.bf16.mxu0 %v4095
      %4135 = vmatmul.mubr.bf16.gmra.mxu0 %v4094
      %v4136 = vpop.f32.mrf.mxu0
      %v4137 = vadd.f32 0.0, %v4136
      %v4138 = vpop.f32.mrf.mxu0
      %v4139 = vadd.f32 0.0, %v4138
      %v4140 = vpop.f32.mrf.mxu0
      %v4141 = vadd.f32 0.0, %v4140
      %v4142 = vpop.f32.mrf.mxu0
      %v4143 = vadd.f32 0.0, %v4142
      %4144 = vmatprep.mubr.bf16.mxu0 %v4097
      %4145 = vmatmul.mubr.bf16.gmra.mxu0 %v4096
      %v4146 = vpop.f32.mrf.mxu0
      %v4147 = vadd.f32 0.0, %v4146
      %v4148 = vpop.f32.mrf.mxu0
      %v4149 = vadd.f32 0.0, %v4148
      %v4150 = vpop.f32.mrf.mxu0
      %v4151 = vadd.f32 0.0, %v4150
      %v4152 = vpop.f32.mrf.mxu0
      %v4153 = vadd.f32 0.0, %v4152
      %4154 = vdwg.mxu0
      %v4155 = vadd.f32 %v3426, %v4137
      %v4156 = vadd.f32 %v3427, %v4139
      %v4157 = vadd.f32 %v3428, %v4141
      %v4158 = vadd.f32 %v3429, %v4143
      %v4159 = vadd.f32 %v3430, %v4147
      %v4160 = vadd.f32 %v3431, %v4149
      %v4161 = vadd.f32 %v3432, %v4151
      %v4162 = vadd.f32 %v3433, %v4153
      %s4163 = scalar_lea.vmem %s3, 640
      %v4164 = vld [vmem:[%s4163] sm:$0xf]
      %v4165 = vld [vmem:[%s4163 + $0x4] sm:$0xf]
      %v4166 = vld [vmem:[%s4163 + $0x8] sm:$0xf]
      %v4167 = vld [vmem:[%s4163 + $0xc] sm:$0xf]
      %v4168 = vld [vmem:[%s4163 + $0x10] sm:$0xf]
      %v4169 = vld [vmem:[%s4163 + $0x14] sm:$0xf]
      %v4170 = vld [vmem:[%s4163 + $0x18] sm:$0xf]
      %v4171 = vld [vmem:[%s4163 + $0x1c] sm:$0xf]
      %v4172 = vld [vmem:[%s4163 + $0x20] sm:$0xf]
      %v4173 = vld [vmem:[%s4163 + $0x24] sm:$0xf]
      %v4174 = vld [vmem:[%s4163 + $0x28] sm:$0xf]
      %v4175 = vld [vmem:[%s4163 + $0x2c] sm:$0xf]
      %v4176 = vld [vmem:[%s4163 + $0x30] sm:$0xf]
      %v4177 = vld [vmem:[%s4163 + $0x34] sm:$0xf]
      %v4178 = vld [vmem:[%s4163 + $0x38] sm:$0xf]
      %v4179 = vld [vmem:[%s4163 + $0x3c] sm:$0xf]
      %v4180 = vld [vmem:[%s4163 + $0x40] sm:$0xf]
      %v4181 = vld [vmem:[%s4163 + $0x44] sm:$0xf]
      %v4182 = vld [vmem:[%s4163 + $0x48] sm:$0xf]
      %v4183 = vld [vmem:[%s4163 + $0x4c] sm:$0xf]
      %v4184 = vld [vmem:[%s4163 + $0x50] sm:$0xf]
      %v4185 = vld [vmem:[%s4163 + $0x54] sm:$0xf]
      %v4186 = vld [vmem:[%s4163 + $0x58] sm:$0xf]
      %v4187 = vld [vmem:[%s4163 + $0x5c] sm:$0xf]
      %v4188 = vld [vmem:[%s4163 + $0x60] sm:$0xf]
      %v4189 = vld [vmem:[%s4163 + $0x64] sm:$0xf]
      %v4190 = vld [vmem:[%s4163 + $0x68] sm:$0xf]
      %v4191 = vld [vmem:[%s4163 + $0x6c] sm:$0xf]
      %v4192 = vld [vmem:[%s4163 + $0x70] sm:$0xf]
      %v4193 = vld [vmem:[%s4163 + $0x74] sm:$0xf]
      %v4194 = vld [vmem:[%s4163 + $0x78] sm:$0xf]
      %v4195 = vld [vmem:[%s4163 + $0x7c] sm:$0xf]
      %s4196 = scalar_lea.vmem %s4, 1280
      %v4197 = vld [vmem:[%s4196] sm:$0xff]
      %v4198 = vld [vmem:[%s4196 + $0x8] sm:$0xff]
      %v4199 = vld [vmem:[%s4196 + $0x10] sm:$0xff]
      %v4200 = vld [vmem:[%s4196 + $0x18] sm:$0xff]
      %v4201 = vld [vmem:[%s4196 + $0x20] sm:$0xff]
      %v4202 = vld [vmem:[%s4196 + $0x28] sm:$0xff]
      %v4203 = vld [vmem:[%s4196 + $0x30] sm:$0xff]
      %v4204 = vld [vmem:[%s4196 + $0x38] sm:$0xff]
      %v4205 = vld [vmem:[%s4196 + $0x40] sm:$0xff]
      %v4206 = vld [vmem:[%s4196 + $0x48] sm:$0xff]
      %v4207 = vld [vmem:[%s4196 + $0x50] sm:$0xff]
      %v4208 = vld [vmem:[%s4196 + $0x58] sm:$0xff]
      %v4209 = vld [vmem:[%s4196 + $0x60] sm:$0xff]
      %v4210 = vld [vmem:[%s4196 + $0x68] sm:$0xff]
      %v4211 = vld [vmem:[%s4196 + $0x70] sm:$0xff]
      %v4212 = vld [vmem:[%s4196 + $0x78] sm:$0xff]
      %v4213 = vld [vmem:[%s4196 + $0x80] sm:$0xff]
      %v4214 = vld [vmem:[%s4196 + $0x88] sm:$0xff]
      %v4215 = vld [vmem:[%s4196 + $0x90] sm:$0xff]
      %v4216 = vld [vmem:[%s4196 + $0x98] sm:$0xff]
      %v4217 = vld [vmem:[%s4196 + $0xa0] sm:$0xff]
      %v4218 = vld [vmem:[%s4196 + $0xa8] sm:$0xff]
      %v4219 = vld [vmem:[%s4196 + $0xb0] sm:$0xff]
      %v4220 = vld [vmem:[%s4196 + $0xb8] sm:$0xff]
      %v4221 = vld [vmem:[%s4196 + $0xc0] sm:$0xff]
      %v4222 = vld [vmem:[%s4196 + $0xc8] sm:$0xff]
      %v4223 = vld [vmem:[%s4196 + $0xd0] sm:$0xff]
      %v4224 = vld [vmem:[%s4196 + $0xd8] sm:$0xff]
      %v4225 = vld [vmem:[%s4196 + $0xe0] sm:$0xff]
      %v4226 = vld [vmem:[%s4196 + $0xe8] sm:$0xff]
      %v4227 = vld [vmem:[%s4196 + $0xf0] sm:$0xff]
      %v4228 = vld [vmem:[%s4196 + $0xf8] sm:$0xff]
      %4230 = vset.pattern.permute.xlu0 0
      %4231 = vperm.xlu0 %4230, %v4197
      %v4232 = vpop.permute.xlu0 %4231
      %4235 = vset.pattern.permute.xlu0 0
      %4236 = vperm.xlu0 %4235, %v4198
      %v4237 = vpop.permute.xlu0 %4236
      %4240 = vset.pattern.permute.xlu0 0
      %4241 = vperm.xlu0 %4240, %v4199
      %v4242 = vpop.permute.xlu0 %4241
      %4245 = vset.pattern.permute.xlu0 0
      %4246 = vperm.xlu0 %4245, %v4200
      %v4247 = vpop.permute.xlu0 %4246
      %4250 = vset.pattern.permute.xlu0 0
      %4251 = vperm.xlu0 %4250, %v4201
      %v4252 = vpop.permute.xlu0 %4251
      %4255 = vset.pattern.permute.xlu0 0
      %4256 = vperm.xlu0 %4255, %v4202
      %v4257 = vpop.permute.xlu0 %4256
      %4260 = vset.pattern.permute.xlu0 0
      %4261 = vperm.xlu0 %4260, %v4203
      %v4262 = vpop.permute.xlu0 %4261
      %4265 = vset.pattern.permute.xlu0 0
      %4266 = vperm.xlu0 %4265, %v4204
      %v4267 = vpop.permute.xlu0 %4266
      %4270 = vset.pattern.permute.xlu0 0
      %4271 = vperm.xlu0 %4270, %v4205
      %v4272 = vpop.permute.xlu0 %4271
      %4275 = vset.pattern.permute.xlu0 0
      %4276 = vperm.xlu0 %4275, %v4206
      %v4277 = vpop.permute.xlu0 %4276
      %4280 = vset.pattern.permute.xlu0 0
      %4281 = vperm.xlu0 %4280, %v4207
      %v4282 = vpop.permute.xlu0 %4281
      %4285 = vset.pattern.permute.xlu0 0
      %4286 = vperm.xlu0 %4285, %v4208
      %v4287 = vpop.permute.xlu0 %4286
      %4290 = vset.pattern.permute.xlu0 0
      %4291 = vperm.xlu0 %4290, %v4209
      %v4292 = vpop.permute.xlu0 %4291
      %4295 = vset.pattern.permute.xlu0 0
      %4296 = vperm.xlu0 %4295, %v4210
      %v4297 = vpop.permute.xlu0 %4296
      %4300 = vset.pattern.permute.xlu0 0
      %4301 = vperm.xlu0 %4300, %v4211
      %v4302 = vpop.permute.xlu0 %4301
      %4305 = vset.pattern.permute.xlu0 0
      %4306 = vperm.xlu0 %4305, %v4212
      %v4307 = vpop.permute.xlu0 %4306
      %4310 = vset.pattern.permute.xlu0 0
      %4311 = vperm.xlu0 %4310, %v4213
      %v4312 = vpop.permute.xlu0 %4311
      %4315 = vset.pattern.permute.xlu0 0
      %4316 = vperm.xlu0 %4315, %v4214
      %v4317 = vpop.permute.xlu0 %4316
      %4320 = vset.pattern.permute.xlu0 0
      %4321 = vperm.xlu0 %4320, %v4215
      %v4322 = vpop.permute.xlu0 %4321
      %4325 = vset.pattern.permute.xlu0 0
      %4326 = vperm.xlu0 %4325, %v4216
      %v4327 = vpop.permute.xlu0 %4326
      %4330 = vset.pattern.permute.xlu0 0
      %4331 = vperm.xlu0 %4330, %v4217
      %v4332 = vpop.permute.xlu0 %4331
      %4335 = vset.pattern.permute.xlu0 0
      %4336 = vperm.xlu0 %4335, %v4218
      %v4337 = vpop.permute.xlu0 %4336
      %4340 = vset.pattern.permute.xlu0 0
      %4341 = vperm.xlu0 %4340, %v4219
      %v4342 = vpop.permute.xlu0 %4341
      %4345 = vset.pattern.permute.xlu0 0
      %4346 = vperm.xlu0 %4345, %v4220
      %v4347 = vpop.permute.xlu0 %4346
      %4350 = vset.pattern.permute.xlu0 0
      %4351 = vperm.xlu0 %4350, %v4221
      %v4352 = vpop.permute.xlu0 %4351
      %4355 = vset.pattern.permute.xlu0 0
      %4356 = vperm.xlu0 %4355, %v4222
      %v4357 = vpop.permute.xlu0 %4356
      %4360 = vset.pattern.permute.xlu0 0
      %4361 = vperm.xlu0 %4360, %v4223
      %v4362 = vpop.permute.xlu0 %4361
      %4365 = vset.pattern.permute.xlu0 0
      %4366 = vperm.xlu0 %4365, %v4224
      %v4367 = vpop.permute.xlu0 %4366
      %4370 = vset.pattern.permute.xlu0 0
      %4371 = vperm.xlu0 %4370, %v4225
      %v4372 = vpop.permute.xlu0 %4371
      %4375 = vset.pattern.permute.xlu0 0
      %4376 = vperm.xlu0 %4375, %v4226
      %v4377 = vpop.permute.xlu0 %4376
      %4380 = vset.pattern.permute.xlu0 0
      %4381 = vperm.xlu0 %4380, %v4227
      %v4382 = vpop.permute.xlu0 %4381
      %4385 = vset.pattern.permute.xlu0 0
      %4386 = vperm.xlu0 %4385, %v4228
      %v4387 = vpop.permute.xlu0 %4386
      %v4421 = vunpack.c.l.b16 %v4164
      %v4422 = vunpack.c.l.b16 %v4165
      %v4423 = vunpack.c.l.b16 %v4166
      %v4424 = vunpack.c.l.b16 %v4167
      %v4425 = vunpack.c.l.b16 %v4168
      %v4426 = vunpack.c.l.b16 %v4169
      %v4427 = vunpack.c.l.b16 %v4170
      %v4428 = vunpack.c.l.b16 %v4171
      %v4429 = vunpack.c.l.b16 %v4172
      %v4430 = vunpack.c.l.b16 %v4173
      %v4431 = vunpack.c.l.b16 %v4174
      %v4432 = vunpack.c.l.b16 %v4175
      %v4433 = vunpack.c.l.b16 %v4176
      %v4434 = vunpack.c.l.b16 %v4177
      %v4435 = vunpack.c.l.b16 %v4178
      %v4436 = vunpack.c.l.b16 %v4179
      %v4437 = vunpack.c.l.b16 %v4180
      %v4438 = vunpack.c.l.b16 %v4181
      %v4439 = vunpack.c.l.b16 %v4182
      %v4440 = vunpack.c.l.b16 %v4183
      %v4441 = vunpack.c.l.b16 %v4184
      %v4442 = vunpack.c.l.b16 %v4185
      %v4443 = vunpack.c.l.b16 %v4186
      %v4444 = vunpack.c.l.b16 %v4187
      %v4445 = vunpack.c.l.b16 %v4188
      %v4446 = vunpack.c.l.b16 %v4189
      %v4447 = vunpack.c.l.b16 %v4190
      %v4448 = vunpack.c.l.b16 %v4191
      %v4449 = vunpack.c.l.b16 %v4192
      %v4450 = vunpack.c.l.b16 %v4193
      %v4451 = vunpack.c.l.b16 %v4194
      %v4452 = vunpack.c.l.b16 %v4195
      %v4453 = vpack.c.b16 %v4422, %v4421
      %v4454 = vpack.c.b16 %v4424, %v4423
      %v4455 = vpack.c.b16 %v4426, %v4425
      %v4456 = vpack.c.b16 %v4428, %v4427
      %v4457 = vpack.c.b16 %v4430, %v4429
      %v4458 = vpack.c.b16 %v4432, %v4431
      %v4459 = vpack.c.b16 %v4434, %v4433
      %v4460 = vpack.c.b16 %v4436, %v4435
      %v4461 = vpack.c.b16 %v4438, %v4437
      %v4462 = vpack.c.b16 %v4440, %v4439
      %v4463 = vpack.c.b16 %v4442, %v4441
      %v4464 = vpack.c.b16 %v4444, %v4443
      %v4465 = vpack.c.b16 %v4446, %v4445
      %v4466 = vpack.c.b16 %v4448, %v4447
      %v4467 = vpack.c.b16 %v4450, %v4449
      %v4468 = vpack.c.b16 %v4452, %v4451
      %v4470 = vsel %vm840, %v4453, 0
      %v4473 = vsel %vm840, %v4454, 0
      %v4476 = vsel %vm840, %v4455, 0
      %v4479 = vsel %vm840, %v4456, 0
      %v4482 = vsel %vm840, %v4457, 0
      %v4485 = vsel %vm840, %v4458, 0
      %v4488 = vsel %vm840, %v4459, 0
      %v4491 = vsel %vm840, %v4460, 0
      %v4494 = vsel %vm840, %v4461, 0
      %v4497 = vsel %vm840, %v4462, 0
      %v4500 = vsel %vm840, %v4463, 0
      %v4503 = vsel %vm840, %v4464, 0
      %v4506 = vsel %vm840, %v4465, 0
      %v4509 = vsel %vm840, %v4466, 0
      %v4512 = vsel %vm840, %v4467, 0
      %v4515 = vsel %vm840, %v4468, 0
      %4517 = vmatprep.subr.bf16.mxu0 0
      %4518 = vmatpush1.bf16.msra.mxu0 0
      %4519 = vmatprep.subr.bf16.mxu0 0
      %4520 = vmatpush1.bf16.msra.mxu0 0
      %4521 = vmatprep.subr.bf16.mxu0 0
      %4522 = vmatpush1.bf16.msra.mxu0 0
      %4523 = vmatprep.subr.bf16.mxu0 0
      %4524 = vmatpush1.bf16.msra.mxu0 0
      %4525 = vmatprep.subr.bf16.mxu0 %v535
      %4526 = vmatpush1.bf16.msra.mxu0 %v534
      %4527 = vmatprep.subr.bf16.mxu0 %v533
      %4528 = vmatpush1.bf16.msra.mxu0 %v532
      %4529 = vmatprep.subr.bf16.mxu0 %v531
      %4530 = vmatpush1.bf16.msra.mxu0 %v530
      %4531 = vmatprep.subr.bf16.mxu0 %v529
      %4532 = vmatpush1.bf16.msra.mxu0 %v528
      %4533 = vmatprep.subr.bf16.mxu0 0
      %4534 = vmatpush2.bf16.msra.mxu0 0
      %4535 = vmatprep.subr.bf16.mxu0 0
      %4536 = vmatpush2.bf16.msra.mxu0 0
      %4537 = vmatprep.subr.bf16.mxu0 0
      %4538 = vmatpush2.bf16.msra.mxu0 0
      %4539 = vmatprep.subr.bf16.mxu0 0
      %4540 = vmatpush2.bf16.msra.mxu0 0
      %4541 = vmatprep.subr.bf16.mxu0 0
      %4542 = vmatpush2.bf16.msra.mxu0 0
      %4543 = vmatprep.subr.bf16.mxu0 0
      %4544 = vmatpush2.bf16.msra.mxu0 0
      %4545 = vmatprep.subr.bf16.mxu0 0
      %4546 = vmatpush2.bf16.msra.mxu0 0
      %4547 = vmatprep.subr.bf16.mxu0 0
      %4548 = vmatpush2.bf16.msra.mxu0 0
      %4549 = vmatprep.mubr.bf16.mxu0 0
      %4550 = vmatmul.mubr.bf16.gmra.mxu0 %v4470
      %v4551 = vpop.f32.mrf.mxu0
      %v4552 = vadd.f32 %v4232, %v4551
      %v4553 = vpop.f32.mrf.mxu0
      %v4554 = vadd.f32 %v4232, %v4553
      %v4555 = vpop.f32.mrf.mxu0
      %v4556 = vadd.f32 %v4237, %v4555
      %v4557 = vpop.f32.mrf.mxu0
      %v4558 = vadd.f32 %v4237, %v4557
      %4559 = vmatprep.mubr.bf16.mxu0 0
      %4560 = vmatmul.mubr.bf16.gmra.mxu0 %v4473
      %v4561 = vpop.f32.mrf.mxu0
      %v4562 = vadd.f32 %v4242, %v4561
      %v4563 = vpop.f32.mrf.mxu0
      %v4564 = vadd.f32 %v4242, %v4563
      %v4565 = vpop.f32.mrf.mxu0
      %v4566 = vadd.f32 %v4247, %v4565
      %v4567 = vpop.f32.mrf.mxu0
      %v4568 = vadd.f32 %v4247, %v4567
      %4569 = vmatprep.mubr.bf16.mxu0 0
      %4570 = vmatmul.mubr.bf16.gmra.mxu0 %v4476
      %v4571 = vpop.f32.mrf.mxu0
      %v4572 = vadd.f32 %v4252, %v4571
      %v4573 = vpop.f32.mrf.mxu0
      %v4574 = vadd.f32 %v4252, %v4573
      %v4575 = vpop.f32.mrf.mxu0
      %v4576 = vadd.f32 %v4257, %v4575
      %v4577 = vpop.f32.mrf.mxu0
      %v4578 = vadd.f32 %v4257, %v4577
      %4579 = vmatprep.mubr.bf16.mxu0 0
      %4580 = vmatmul.mubr.bf16.gmra.mxu0 %v4479
      %v4581 = vpop.f32.mrf.mxu0
      %v4582 = vadd.f32 %v4262, %v4581
      %v4583 = vpop.f32.mrf.mxu0
      %v4584 = vadd.f32 %v4262, %v4583
      %v4585 = vpop.f32.mrf.mxu0
      %v4586 = vadd.f32 %v4267, %v4585
      %v4587 = vpop.f32.mrf.mxu0
      %v4588 = vadd.f32 %v4267, %v4587
      %4589 = vmatprep.mubr.bf16.mxu0 0
      %4590 = vmatmul.mubr.bf16.gmra.mxu0 %v4482
      %v4591 = vpop.f32.mrf.mxu0
      %v4592 = vadd.f32 %v4272, %v4591
      %v4593 = vpop.f32.mrf.mxu0
      %v4594 = vadd.f32 %v4272, %v4593
      %v4595 = vpop.f32.mrf.mxu0
      %v4596 = vadd.f32 %v4277, %v4595
      %v4597 = vpop.f32.mrf.mxu0
      %v4598 = vadd.f32 %v4277, %v4597
      %4599 = vmatprep.mubr.bf16.mxu0 0
      %4600 = vmatmul.mubr.bf16.gmra.mxu0 %v4485
      %v4601 = vpop.f32.mrf.mxu0
      %v4602 = vadd.f32 %v4282, %v4601
      %v4603 = vpop.f32.mrf.mxu0
      %v4604 = vadd.f32 %v4282, %v4603
      %v4605 = vpop.f32.mrf.mxu0
      %v4606 = vadd.f32 %v4287, %v4605
      %v4607 = vpop.f32.mrf.mxu0
      %v4608 = vadd.f32 %v4287, %v4607
      %4609 = vmatprep.mubr.bf16.mxu0 0
      %4610 = vmatmul.mubr.bf16.gmra.mxu0 %v4488
      %v4611 = vpop.f32.mrf.mxu0
      %v4612 = vadd.f32 %v4292, %v4611
      %v4613 = vpop.f32.mrf.mxu0
      %v4614 = vadd.f32 %v4292, %v4613
      %v4615 = vpop.f32.mrf.mxu0
      %v4616 = vadd.f32 %v4297, %v4615
      %v4617 = vpop.f32.mrf.mxu0
      %v4618 = vadd.f32 %v4297, %v4617
      %4619 = vmatprep.mubr.bf16.mxu0 0
      %4620 = vmatmul.mubr.bf16.gmra.mxu0 %v4491
      %v4621 = vpop.f32.mrf.mxu0
      %v4622 = vadd.f32 %v4302, %v4621
      %v4623 = vpop.f32.mrf.mxu0
      %v4624 = vadd.f32 %v4302, %v4623
      %v4625 = vpop.f32.mrf.mxu0
      %v4626 = vadd.f32 %v4307, %v4625
      %v4627 = vpop.f32.mrf.mxu0
      %v4628 = vadd.f32 %v4307, %v4627
      %4629 = vmatprep.mubr.bf16.mxu0 0
      %4630 = vmatmul.mubr.bf16.gmra.mxu0 %v4494
      %v4631 = vpop.f32.mrf.mxu0
      %v4632 = vadd.f32 %v4312, %v4631
      %v4633 = vpop.f32.mrf.mxu0
      %v4634 = vadd.f32 %v4312, %v4633
      %v4635 = vpop.f32.mrf.mxu0
      %v4636 = vadd.f32 %v4317, %v4635
      %v4637 = vpop.f32.mrf.mxu0
      %v4638 = vadd.f32 %v4317, %v4637
      %4639 = vmatprep.mubr.bf16.mxu0 0
      %4640 = vmatmul.mubr.bf16.gmra.mxu0 %v4497
      %v4641 = vpop.f32.mrf.mxu0
      %v4642 = vadd.f32 %v4322, %v4641
      %v4643 = vpop.f32.mrf.mxu0
      %v4644 = vadd.f32 %v4322, %v4643
      %v4645 = vpop.f32.mrf.mxu0
      %v4646 = vadd.f32 %v4327, %v4645
      %v4647 = vpop.f32.mrf.mxu0
      %v4648 = vadd.f32 %v4327, %v4647
      %4649 = vmatprep.mubr.bf16.mxu0 0
      %4650 = vmatmul.mubr.bf16.gmra.mxu0 %v4500
      %v4651 = vpop.f32.mrf.mxu0
      %v4652 = vadd.f32 %v4332, %v4651
      %v4653 = vpop.f32.mrf.mxu0
      %v4654 = vadd.f32 %v4332, %v4653
      %v4655 = vpop.f32.mrf.mxu0
      %v4656 = vadd.f32 %v4337, %v4655
      %v4657 = vpop.f32.mrf.mxu0
      %v4658 = vadd.f32 %v4337, %v4657
      %4659 = vmatprep.mubr.bf16.mxu0 0
      %4660 = vmatmul.mubr.bf16.gmra.mxu0 %v4503
      %v4661 = vpop.f32.mrf.mxu0
      %v4662 = vadd.f32 %v4342, %v4661
      %v4663 = vpop.f32.mrf.mxu0
      %v4664 = vadd.f32 %v4342, %v4663
      %v4665 = vpop.f32.mrf.mxu0
      %v4666 = vadd.f32 %v4347, %v4665
      %v4667 = vpop.f32.mrf.mxu0
      %v4668 = vadd.f32 %v4347, %v4667
      %4669 = vmatprep.mubr.bf16.mxu0 0
      %4670 = vmatmul.mubr.bf16.gmra.mxu0 %v4506
      %v4671 = vpop.f32.mrf.mxu0
      %v4672 = vadd.f32 %v4352, %v4671
      %v4673 = vpop.f32.mrf.mxu0
      %v4674 = vadd.f32 %v4352, %v4673
      %v4675 = vpop.f32.mrf.mxu0
      %v4676 = vadd.f32 %v4357, %v4675
      %v4677 = vpop.f32.mrf.mxu0
      %v4678 = vadd.f32 %v4357, %v4677
      %4679 = vmatprep.mubr.bf16.mxu0 0
      %4680 = vmatmul.mubr.bf16.gmra.mxu0 %v4509
      %v4681 = vpop.f32.mrf.mxu0
      %v4682 = vadd.f32 %v4362, %v4681
      %v4683 = vpop.f32.mrf.mxu0
      %v4684 = vadd.f32 %v4362, %v4683
      %v4685 = vpop.f32.mrf.mxu0
      %v4686 = vadd.f32 %v4367, %v4685
      %v4687 = vpop.f32.mrf.mxu0
      %v4688 = vadd.f32 %v4367, %v4687
      %4689 = vmatprep.mubr.bf16.mxu0 0
      %4690 = vmatmul.mubr.bf16.gmra.mxu0 %v4512
      %v4691 = vpop.f32.mrf.mxu0
      %v4692 = vadd.f32 %v4372, %v4691
      %v4693 = vpop.f32.mrf.mxu0
      %v4694 = vadd.f32 %v4372, %v4693
      %v4695 = vpop.f32.mrf.mxu0
      %v4696 = vadd.f32 %v4377, %v4695
      %v4697 = vpop.f32.mrf.mxu0
      %v4698 = vadd.f32 %v4377, %v4697
      %4699 = vmatprep.mubr.bf16.mxu0 0
      %4700 = vmatmul.mubr.bf16.gmra.mxu0 %v4515
      %v4701 = vpop.f32.mrf.mxu0
      %v4702 = vadd.f32 %v4382, %v4701
      %v4703 = vpop.f32.mrf.mxu0
      %v4704 = vadd.f32 %v4382, %v4703
      %v4705 = vpop.f32.mrf.mxu0
      %v4706 = vadd.f32 %v4387, %v4705
      %v4707 = vpop.f32.mrf.mxu0
      %v4708 = vadd.f32 %v4387, %v4707
      %4709 = vdwg.mxu0
      %v4710 = vmax.f32 %v4552, 0.0
      %v4711 = vmax.f32 %v4554, 0.0
      %v4712 = vmax.f32 %v4556, 0.0
      %v4713 = vmax.f32 %v4558, 0.0
      %v4714 = vmax.f32 %v4562, 0.0
      %v4715 = vmax.f32 %v4564, 0.0
      %v4716 = vmax.f32 %v4566, 0.0
      %v4717 = vmax.f32 %v4568, 0.0
      %v4718 = vmax.f32 %v4572, 0.0
      %v4719 = vmax.f32 %v4574, 0.0
      %v4720 = vmax.f32 %v4576, 0.0
      %v4721 = vmax.f32 %v4578, 0.0
      %v4722 = vmax.f32 %v4582, 0.0
      %v4723 = vmax.f32 %v4584, 0.0
      %v4724 = vmax.f32 %v4586, 0.0
      %v4725 = vmax.f32 %v4588, 0.0
      %v4726 = vmax.f32 %v4592, 0.0
      %v4727 = vmax.f32 %v4594, 0.0
      %v4728 = vmax.f32 %v4596, 0.0
      %v4729 = vmax.f32 %v4598, 0.0
      %v4730 = vmax.f32 %v4602, 0.0
      %v4731 = vmax.f32 %v4604, 0.0
      %v4732 = vmax.f32 %v4606, 0.0
      %v4733 = vmax.f32 %v4608, 0.0
      %v4734 = vmax.f32 %v4612, 0.0
      %v4735 = vmax.f32 %v4614, 0.0
      %v4736 = vmax.f32 %v4616, 0.0
      %v4737 = vmax.f32 %v4618, 0.0
      %v4738 = vmax.f32 %v4622, 0.0
      %v4739 = vmax.f32 %v4624, 0.0
      %v4740 = vmax.f32 %v4626, 0.0
      %v4741 = vmax.f32 %v4628, 0.0
      %v4742 = vmax.f32 %v4632, 0.0
      %v4743 = vmax.f32 %v4634, 0.0
      %v4744 = vmax.f32 %v4636, 0.0
      %v4745 = vmax.f32 %v4638, 0.0
      %v4746 = vmax.f32 %v4642, 0.0
      %v4747 = vmax.f32 %v4644, 0.0
      %v4748 = vmax.f32 %v4646, 0.0
      %v4749 = vmax.f32 %v4648, 0.0
      %v4750 = vmax.f32 %v4652, 0.0
      %v4751 = vmax.f32 %v4654, 0.0
      %v4752 = vmax.f32 %v4656, 0.0
      %v4753 = vmax.f32 %v4658, 0.0
      %v4754 = vmax.f32 %v4662, 0.0
      %v4755 = vmax.f32 %v4664, 0.0
      %v4756 = vmax.f32 %v4666, 0.0
      %v4757 = vmax.f32 %v4668, 0.0
      %v4758 = vmax.f32 %v4672, 0.0
      %v4759 = vmax.f32 %v4674, 0.0
      %v4760 = vmax.f32 %v4676, 0.0
      %v4761 = vmax.f32 %v4678, 0.0
      %v4762 = vmax.f32 %v4682, 0.0
      %v4763 = vmax.f32 %v4684, 0.0
      %v4764 = vmax.f32 %v4686, 0.0
      %v4765 = vmax.f32 %v4688, 0.0
      %v4766 = vmax.f32 %v4692, 0.0
      %v4767 = vmax.f32 %v4694, 0.0
      %v4768 = vmax.f32 %v4696, 0.0
      %v4769 = vmax.f32 %v4698, 0.0
      %v4770 = vmax.f32 %v4702, 0.0
      %v4771 = vmax.f32 %v4704, 0.0
      %v4772 = vmax.f32 %v4706, 0.0
      %v4773 = vmax.f32 %v4708, 0.0
      %v4774 = vpack.c.bf16 %v4712, %v4710
      %v4775 = vpack.c.bf16 %v4713, %v4711
      %v4776 = vpack.c.bf16 %v4716, %v4714
      %v4777 = vpack.c.bf16 %v4717, %v4715
      %v4778 = vpack.c.bf16 %v4720, %v4718
      %v4779 = vpack.c.bf16 %v4721, %v4719
      %v4780 = vpack.c.bf16 %v4724, %v4722
      %v4781 = vpack.c.bf16 %v4725, %v4723
      %v4782 = vpack.c.bf16 %v4728, %v4726
      %v4783 = vpack.c.bf16 %v4729, %v4727
      %v4784 = vpack.c.bf16 %v4732, %v4730
      %v4785 = vpack.c.bf16 %v4733, %v4731
      %v4786 = vpack.c.bf16 %v4736, %v4734
      %v4787 = vpack.c.bf16 %v4737, %v4735
      %v4788 = vpack.c.bf16 %v4740, %v4738
      %v4789 = vpack.c.bf16 %v4741, %v4739
      %v4790 = vpack.c.bf16 %v4744, %v4742
      %v4791 = vpack.c.bf16 %v4745, %v4743
      %v4792 = vpack.c.bf16 %v4748, %v4746
      %v4793 = vpack.c.bf16 %v4749, %v4747
      %v4794 = vpack.c.bf16 %v4752, %v4750
      %v4795 = vpack.c.bf16 %v4753, %v4751
      %v4796 = vpack.c.bf16 %v4756, %v4754
      %v4797 = vpack.c.bf16 %v4757, %v4755
      %v4798 = vpack.c.bf16 %v4760, %v4758
      %v4799 = vpack.c.bf16 %v4761, %v4759
      %v4800 = vpack.c.bf16 %v4764, %v4762
      %v4801 = vpack.c.bf16 %v4765, %v4763
      %v4802 = vpack.c.bf16 %v4768, %v4766
      %v4803 = vpack.c.bf16 %v4769, %v4767
      %v4804 = vpack.c.bf16 %v4772, %v4770
      %v4805 = vpack.c.bf16 %v4773, %v4771
      %s4806 = scalar_lea.vmem %s5, 160
      %v4807 = vld [vmem:[%s4806] sm:$0xff]
      %v4808 = vld [vmem:[%s4806 + $0x8] sm:$0xff]
      %v4809 = vld [vmem:[%s4806 + $0x10] sm:$0xff]
      %v4810 = vld [vmem:[%s4806 + $0x18] sm:$0xff]
      %v4815 = vunpack.c.l.b16 %v4807
      %v4816 = vunpack.c.h.b16 %v4807
      %v4817 = vunpack.c.l.b16 %v4808
      %v4818 = vunpack.c.h.b16 %v4808
      %v4819 = vunpack.c.l.b16 %v4809
      %v4820 = vunpack.c.h.b16 %v4809
      %v4821 = vunpack.c.l.b16 %v4810
      %v4822 = vunpack.c.h.b16 %v4810
      %v4823 = vpack.c.b16 %v4817, %v4815
      %v4824 = vpack.c.b16 %v4818, %v4816
      %v4825 = vpack.c.b16 %v4821, %v4819
      %v4826 = vpack.c.b16 %v4822, %v4820
      %4831 = vmatprep.subr.bf16.mxu0 %v4789
      %4832 = vmatpush1.bf16.msra.mxu0 %v4788
      %4833 = vmatprep.subr.bf16.mxu0 %v4787
      %4834 = vmatpush1.bf16.msra.mxu0 %v4786
      %4835 = vmatprep.subr.bf16.mxu0 %v4785
      %4836 = vmatpush1.bf16.msra.mxu0 %v4784
      %4837 = vmatprep.subr.bf16.mxu0 %v4783
      %4838 = vmatpush1.bf16.msra.mxu0 %v4782
      %4839 = vmatprep.subr.bf16.mxu0 %v4781
      %4840 = vmatpush1.bf16.msra.mxu0 %v4780
      %4841 = vmatprep.subr.bf16.mxu0 %v4779
      %4842 = vmatpush1.bf16.msra.mxu0 %v4778
      %4843 = vmatprep.subr.bf16.mxu0 %v4777
      %4844 = vmatpush1.bf16.msra.mxu0 %v4776
      %4845 = vmatprep.subr.bf16.mxu0 %v4775
      %4846 = vmatpush1.bf16.msra.mxu0 %v4774
      %4847 = vmatprep.subr.bf16.mxu0 %v4805
      %4848 = vmatpush2.bf16.msra.mxu0 %v4804
      %4849 = vmatprep.subr.bf16.mxu0 %v4803
      %4850 = vmatpush2.bf16.msra.mxu0 %v4802
      %4851 = vmatprep.subr.bf16.mxu0 %v4801
      %4852 = vmatpush2.bf16.msra.mxu0 %v4800
      %4853 = vmatprep.subr.bf16.mxu0 %v4799
      %4854 = vmatpush2.bf16.msra.mxu0 %v4798
      %4855 = vmatprep.subr.bf16.mxu0 %v4797
      %4856 = vmatpush2.bf16.msra.mxu0 %v4796
      %4857 = vmatprep.subr.bf16.mxu0 %v4795
      %4858 = vmatpush2.bf16.msra.mxu0 %v4794
      %4859 = vmatprep.subr.bf16.mxu0 %v4793
      %4860 = vmatpush2.bf16.msra.mxu0 %v4792
      %4861 = vmatprep.subr.bf16.mxu0 %v4791
      %4862 = vmatpush2.bf16.msra.mxu0 %v4790
      %4863 = vmatprep.mubr.bf16.mxu0 %v4824
      %4864 = vmatmul.mubr.bf16.gmra.mxu0 %v4823
      %v4865 = vpop.f32.mrf.mxu0
      %v4866 = vadd.f32 0.0, %v4865
      %v4867 = vpop.f32.mrf.mxu0
      %v4868 = vadd.f32 0.0, %v4867
      %v4869 = vpop.f32.mrf.mxu0
      %v4870 = vadd.f32 0.0, %v4869
      %v4871 = vpop.f32.mrf.mxu0
      %v4872 = vadd.f32 0.0, %v4871
      %4873 = vmatprep.mubr.bf16.mxu0 %v4826
      %4874 = vmatmul.mubr.bf16.gmra.mxu0 %v4825
      %v4875 = vpop.f32.mrf.mxu0
      %v4876 = vadd.f32 0.0, %v4875
      %v4877 = vpop.f32.mrf.mxu0
      %v4878 = vadd.f32 0.0, %v4877
      %v4879 = vpop.f32.mrf.mxu0
      %v4880 = vadd.f32 0.0, %v4879
      %v4881 = vpop.f32.mrf.mxu0
      %v4882 = vadd.f32 0.0, %v4881
      %4883 = vdwg.mxu0
      %v4884 = vadd.f32 %v4155, %v4866
      %v4885 = vadd.f32 %v4156, %v4868
      %v4886 = vadd.f32 %v4157, %v4870
      %v4887 = vadd.f32 %v4158, %v4872
      %v4888 = vadd.f32 %v4159, %v4876
      %v4889 = vadd.f32 %v4160, %v4878
      %v4890 = vadd.f32 %v4161, %v4880
      %v4891 = vadd.f32 %v4162, %v4882
      %s4892 = scalar_lea.vmem %s3, 768
      %v4893 = vld [vmem:[%s4892] sm:$0xf]
      %v4894 = vld [vmem:[%s4892 + $0x4] sm:$0xf]
      %v4895 = vld [vmem:[%s4892 + $0x8] sm:$0xf]
      %v4896 = vld [vmem:[%s4892 + $0xc] sm:$0xf]
      %v4897 = vld [vmem:[%s4892 + $0x10] sm:$0xf]
      %v4898 = vld [vmem:[%s4892 + $0x14] sm:$0xf]
      %v4899 = vld [vmem:[%s4892 + $0x18] sm:$0xf]
      %v4900 = vld [vmem:[%s4892 + $0x1c] sm:$0xf]
      %v4901 = vld [vmem:[%s4892 + $0x20] sm:$0xf]
      %v4902 = vld [vmem:[%s4892 + $0x24] sm:$0xf]
      %v4903 = vld [vmem:[%s4892 + $0x28] sm:$0xf]
      %v4904 = vld [vmem:[%s4892 + $0x2c] sm:$0xf]
      %v4905 = vld [vmem:[%s4892 + $0x30] sm:$0xf]
      %v4906 = vld [vmem:[%s4892 + $0x34] sm:$0xf]
      %v4907 = vld [vmem:[%s4892 + $0x38] sm:$0xf]
      %v4908 = vld [vmem:[%s4892 + $0x3c] sm:$0xf]
      %v4909 = vld [vmem:[%s4892 + $0x40] sm:$0xf]
      %v4910 = vld [vmem:[%s4892 + $0x44] sm:$0xf]
      %v4911 = vld [vmem:[%s4892 + $0x48] sm:$0xf]
      %v4912 = vld [vmem:[%s4892 + $0x4c] sm:$0xf]
      %v4913 = vld [vmem:[%s4892 + $0x50] sm:$0xf]
      %v4914 = vld [vmem:[%s4892 + $0x54] sm:$0xf]
      %v4915 = vld [vmem:[%s4892 + $0x58] sm:$0xf]
      %v4916 = vld [vmem:[%s4892 + $0x5c] sm:$0xf]
      %v4917 = vld [vmem:[%s4892 + $0x60] sm:$0xf]
      %v4918 = vld [vmem:[%s4892 + $0x64] sm:$0xf]
      %v4919 = vld [vmem:[%s4892 + $0x68] sm:$0xf]
      %v4920 = vld [vmem:[%s4892 + $0x6c] sm:$0xf]
      %v4921 = vld [vmem:[%s4892 + $0x70] sm:$0xf]
      %v4922 = vld [vmem:[%s4892 + $0x74] sm:$0xf]
      %v4923 = vld [vmem:[%s4892 + $0x78] sm:$0xf]
      %v4924 = vld [vmem:[%s4892 + $0x7c] sm:$0xf]
      %s4925 = scalar_lea.vmem %s4, 1536
      %v4926 = vld [vmem:[%s4925] sm:$0xff]
      %v4927 = vld [vmem:[%s4925 + $0x8] sm:$0xff]
      %v4928 = vld [vmem:[%s4925 + $0x10] sm:$0xff]
      %v4929 = vld [vmem:[%s4925 + $0x18] sm:$0xff]
      %v4930 = vld [vmem:[%s4925 + $0x20] sm:$0xff]
      %v4931 = vld [vmem:[%s4925 + $0x28] sm:$0xff]
      %v4932 = vld [vmem:[%s4925 + $0x30] sm:$0xff]
      %v4933 = vld [vmem:[%s4925 + $0x38] sm:$0xff]
      %v4934 = vld [vmem:[%s4925 + $0x40] sm:$0xff]
      %v4935 = vld [vmem:[%s4925 + $0x48] sm:$0xff]
      %v4936 = vld [vmem:[%s4925 + $0x50] sm:$0xff]
      %v4937 = vld [vmem:[%s4925 + $0x58] sm:$0xff]
      %v4938 = vld [vmem:[%s4925 + $0x60] sm:$0xff]
      %v4939 = vld [vmem:[%s4925 + $0x68] sm:$0xff]
      %v4940 = vld [vmem:[%s4925 + $0x70] sm:$0xff]
      %v4941 = vld [vmem:[%s4925 + $0x78] sm:$0xff]
      %v4942 = vld [vmem:[%s4925 + $0x80] sm:$0xff]
      %v4943 = vld [vmem:[%s4925 + $0x88] sm:$0xff]
      %v4944 = vld [vmem:[%s4925 + $0x90] sm:$0xff]
      %v4945 = vld [vmem:[%s4925 + $0x98] sm:$0xff]
      %v4946 = vld [vmem:[%s4925 + $0xa0] sm:$0xff]
      %v4947 = vld [vmem:[%s4925 + $0xa8] sm:$0xff]
      %v4948 = vld [vmem:[%s4925 + $0xb0] sm:$0xff]
      %v4949 = vld [vmem:[%s4925 + $0xb8] sm:$0xff]
      %v4950 = vld [vmem:[%s4925 + $0xc0] sm:$0xff]
      %v4951 = vld [vmem:[%s4925 + $0xc8] sm:$0xff]
      %v4952 = vld [vmem:[%s4925 + $0xd0] sm:$0xff]
      %v4953 = vld [vmem:[%s4925 + $0xd8] sm:$0xff]
      %v4954 = vld [vmem:[%s4925 + $0xe0] sm:$0xff]
      %v4955 = vld [vmem:[%s4925 + $0xe8] sm:$0xff]
      %v4956 = vld [vmem:[%s4925 + $0xf0] sm:$0xff]
      %v4957 = vld [vmem:[%s4925 + $0xf8] sm:$0xff]
      %4959 = vset.pattern.permute.xlu0 0
      %4960 = vperm.xlu0 %4959, %v4926
      %v4961 = vpop.permute.xlu0 %4960
      %4964 = vset.pattern.permute.xlu0 0
      %4965 = vperm.xlu0 %4964, %v4927
      %v4966 = vpop.permute.xlu0 %4965
      %4969 = vset.pattern.permute.xlu0 0
      %4970 = vperm.xlu0 %4969, %v4928
      %v4971 = vpop.permute.xlu0 %4970
      %4974 = vset.pattern.permute.xlu0 0
      %4975 = vperm.xlu0 %4974, %v4929
      %v4976 = vpop.permute.xlu0 %4975
      %4979 = vset.pattern.permute.xlu0 0
      %4980 = vperm.xlu0 %4979, %v4930
      %v4981 = vpop.permute.xlu0 %4980
      %4984 = vset.pattern.permute.xlu0 0
      %4985 = vperm.xlu0 %4984, %v4931
      %v4986 = vpop.permute.xlu0 %4985
      %4989 = vset.pattern.permute.xlu0 0
      %4990 = vperm.xlu0 %4989, %v4932
      %v4991 = vpop.permute.xlu0 %4990
      %4994 = vset.pattern.permute.xlu0 0
      %4995 = vperm.xlu0 %4994, %v4933
      %v4996 = vpop.permute.xlu0 %4995
      %4999 = vset.pattern.permute.xlu0 0
      %5000 = vperm.xlu0 %4999, %v4934
      %v5001 = vpop.permute.xlu0 %5000
      %5004 = vset.pattern.permute.xlu0 0
      %5005 = vperm.xlu0 %5004, %v4935
      %v5006 = vpop.permute.xlu0 %5005
      %5009 = vset.pattern.permute.xlu0 0
      %5010 = vperm.xlu0 %5009, %v4936
      %v5011 = vpop.permute.xlu0 %5010
      %5014 = vset.pattern.permute.xlu0 0
      %5015 = vperm.xlu0 %5014, %v4937
      %v5016 = vpop.permute.xlu0 %5015
      %5019 = vset.pattern.permute.xlu0 0
      %5020 = vperm.xlu0 %5019, %v4938
      %v5021 = vpop.permute.xlu0 %5020
      %5024 = vset.pattern.permute.xlu0 0
      %5025 = vperm.xlu0 %5024, %v4939
      %v5026 = vpop.permute.xlu0 %5025
      %5029 = vset.pattern.permute.xlu0 0
      %5030 = vperm.xlu0 %5029, %v4940
      %v5031 = vpop.permute.xlu0 %5030
      %5034 = vset.pattern.permute.xlu0 0
      %5035 = vperm.xlu0 %5034, %v4941
      %v5036 = vpop.permute.xlu0 %5035
      %5039 = vset.pattern.permute.xlu0 0
      %5040 = vperm.xlu0 %5039, %v4942
      %v5041 = vpop.permute.xlu0 %5040
      %5044 = vset.pattern.permute.xlu0 0
      %5045 = vperm.xlu0 %5044, %v4943
      %v5046 = vpop.permute.xlu0 %5045
      %5049 = vset.pattern.permute.xlu0 0
      %5050 = vperm.xlu0 %5049, %v4944
      %v5051 = vpop.permute.xlu0 %5050
      %5054 = vset.pattern.permute.xlu0 0
      %5055 = vperm.xlu0 %5054, %v4945
      %v5056 = vpop.permute.xlu0 %5055
      %5059 = vset.pattern.permute.xlu0 0
      %5060 = vperm.xlu0 %5059, %v4946
      %v5061 = vpop.permute.xlu0 %5060
      %5064 = vset.pattern.permute.xlu0 0
      %5065 = vperm.xlu0 %5064, %v4947
      %v5066 = vpop.permute.xlu0 %5065
      %5069 = vset.pattern.permute.xlu0 0
      %5070 = vperm.xlu0 %5069, %v4948
      %v5071 = vpop.permute.xlu0 %5070
      %5074 = vset.pattern.permute.xlu0 0
      %5075 = vperm.xlu0 %5074, %v4949
      %v5076 = vpop.permute.xlu0 %5075
      %5079 = vset.pattern.permute.xlu0 0
      %5080 = vperm.xlu0 %5079, %v4950
      %v5081 = vpop.permute.xlu0 %5080
      %5084 = vset.pattern.permute.xlu0 0
      %5085 = vperm.xlu0 %5084, %v4951
      %v5086 = vpop.permute.xlu0 %5085
      %5089 = vset.pattern.permute.xlu0 0
      %5090 = vperm.xlu0 %5089, %v4952
      %v5091 = vpop.permute.xlu0 %5090
      %5094 = vset.pattern.permute.xlu0 0
      %5095 = vperm.xlu0 %5094, %v4953
      %v5096 = vpop.permute.xlu0 %5095
      %5099 = vset.pattern.permute.xlu0 0
      %5100 = vperm.xlu0 %5099, %v4954
      %v5101 = vpop.permute.xlu0 %5100
      %5104 = vset.pattern.permute.xlu0 0
      %5105 = vperm.xlu0 %5104, %v4955
      %v5106 = vpop.permute.xlu0 %5105
      %5109 = vset.pattern.permute.xlu0 0
      %5110 = vperm.xlu0 %5109, %v4956
      %v5111 = vpop.permute.xlu0 %5110
      %5114 = vset.pattern.permute.xlu0 0
      %5115 = vperm.xlu0 %5114, %v4957
      %v5116 = vpop.permute.xlu0 %5115
      %v5150 = vunpack.c.l.b16 %v4893
      %v5151 = vunpack.c.l.b16 %v4894
      %v5152 = vunpack.c.l.b16 %v4895
      %v5153 = vunpack.c.l.b16 %v4896
      %v5154 = vunpack.c.l.b16 %v4897
      %v5155 = vunpack.c.l.b16 %v4898
      %v5156 = vunpack.c.l.b16 %v4899
      %v5157 = vunpack.c.l.b16 %v4900
      %v5158 = vunpack.c.l.b16 %v4901
      %v5159 = vunpack.c.l.b16 %v4902
      %v5160 = vunpack.c.l.b16 %v4903
      %v5161 = vunpack.c.l.b16 %v4904
      %v5162 = vunpack.c.l.b16 %v4905
      %v5163 = vunpack.c.l.b16 %v4906
      %v5164 = vunpack.c.l.b16 %v4907
      %v5165 = vunpack.c.l.b16 %v4908
      %v5166 = vunpack.c.l.b16 %v4909
      %v5167 = vunpack.c.l.b16 %v4910
      %v5168 = vunpack.c.l.b16 %v4911
      %v5169 = vunpack.c.l.b16 %v4912
      %v5170 = vunpack.c.l.b16 %v4913
      %v5171 = vunpack.c.l.b16 %v4914
      %v5172 = vunpack.c.l.b16 %v4915
      %v5173 = vunpack.c.l.b16 %v4916
      %v5174 = vunpack.c.l.b16 %v4917
      %v5175 = vunpack.c.l.b16 %v4918
      %v5176 = vunpack.c.l.b16 %v4919
      %v5177 = vunpack.c.l.b16 %v4920
      %v5178 = vunpack.c.l.b16 %v4921
      %v5179 = vunpack.c.l.b16 %v4922
      %v5180 = vunpack.c.l.b16 %v4923
      %v5181 = vunpack.c.l.b16 %v4924
      %v5182 = vpack.c.b16 %v5151, %v5150
      %v5183 = vpack.c.b16 %v5153, %v5152
      %v5184 = vpack.c.b16 %v5155, %v5154
      %v5185 = vpack.c.b16 %v5157, %v5156
      %v5186 = vpack.c.b16 %v5159, %v5158
      %v5187 = vpack.c.b16 %v5161, %v5160
      %v5188 = vpack.c.b16 %v5163, %v5162
      %v5189 = vpack.c.b16 %v5165, %v5164
      %v5190 = vpack.c.b16 %v5167, %v5166
      %v5191 = vpack.c.b16 %v5169, %v5168
      %v5192 = vpack.c.b16 %v5171, %v5170
      %v5193 = vpack.c.b16 %v5173, %v5172
      %v5194 = vpack.c.b16 %v5175, %v5174
      %v5195 = vpack.c.b16 %v5177, %v5176
      %v5196 = vpack.c.b16 %v5179, %v5178
      %v5197 = vpack.c.b16 %v5181, %v5180
      %v5199 = vsel %vm840, %v5182, 0
      %v5202 = vsel %vm840, %v5183, 0
      %v5205 = vsel %vm840, %v5184, 0
      %v5208 = vsel %vm840, %v5185, 0
      %v5211 = vsel %vm840, %v5186, 0
      %v5214 = vsel %vm840, %v5187, 0
      %v5217 = vsel %vm840, %v5188, 0
      %v5220 = vsel %vm840, %v5189, 0
      %v5223 = vsel %vm840, %v5190, 0
      %v5226 = vsel %vm840, %v5191, 0
      %v5229 = vsel %vm840, %v5192, 0
      %v5232 = vsel %vm840, %v5193, 0
      %v5235 = vsel %vm840, %v5194, 0
      %v5238 = vsel %vm840, %v5195, 0
      %v5241 = vsel %vm840, %v5196, 0
      %v5244 = vsel %vm840, %v5197, 0
      %5246 = vmatprep.subr.bf16.mxu0 0
      %5247 = vmatpush1.bf16.msra.mxu0 0
      %5248 = vmatprep.subr.bf16.mxu0 0
      %5249 = vmatpush1.bf16.msra.mxu0 0
      %5250 = vmatprep.subr.bf16.mxu0 0
      %5251 = vmatpush1.bf16.msra.mxu0 0
      %5252 = vmatprep.subr.bf16.mxu0 0
      %5253 = vmatpush1.bf16.msra.mxu0 0
      %5254 = vmatprep.subr.bf16.mxu0 %v535
      %5255 = vmatpush1.bf16.msra.mxu0 %v534
      %5256 = vmatprep.subr.bf16.mxu0 %v533
      %5257 = vmatpush1.bf16.msra.mxu0 %v532
      %5258 = vmatprep.subr.bf16.mxu0 %v531
      %5259 = vmatpush1.bf16.msra.mxu0 %v530
      %5260 = vmatprep.subr.bf16.mxu0 %v529
      %5261 = vmatpush1.bf16.msra.mxu0 %v528
      %5262 = vmatprep.subr.bf16.mxu0 0
      %5263 = vmatpush2.bf16.msra.mxu0 0
      %5264 = vmatprep.subr.bf16.mxu0 0
      %5265 = vmatpush2.bf16.msra.mxu0 0
      %5266 = vmatprep.subr.bf16.mxu0 0
      %5267 = vmatpush2.bf16.msra.mxu0 0
      %5268 = vmatprep.subr.bf16.mxu0 0
      %5269 = vmatpush2.bf16.msra.mxu0 0
      %5270 = vmatprep.subr.bf16.mxu0 0
      %5271 = vmatpush2.bf16.msra.mxu0 0
      %5272 = vmatprep.subr.bf16.mxu0 0
      %5273 = vmatpush2.bf16.msra.mxu0 0
      %5274 = vmatprep.subr.bf16.mxu0 0
      %5275 = vmatpush2.bf16.msra.mxu0 0
      %5276 = vmatprep.subr.bf16.mxu0 0
      %5277 = vmatpush2.bf16.msra.mxu0 0
      %5278 = vmatprep.mubr.bf16.mxu0 0
      %5279 = vmatmul.mubr.bf16.gmra.mxu0 %v5199
      %v5280 = vpop.f32.mrf.mxu0
      %v5281 = vadd.f32 %v4961, %v5280
      %v5282 = vpop.f32.mrf.mxu0
      %v5283 = vadd.f32 %v4961, %v5282
      %v5284 = vpop.f32.mrf.mxu0
      %v5285 = vadd.f32 %v4966, %v5284
      %v5286 = vpop.f32.mrf.mxu0
      %v5287 = vadd.f32 %v4966, %v5286
      %5288 = vmatprep.mubr.bf16.mxu0 0
      %5289 = vmatmul.mubr.bf16.gmra.mxu0 %v5202
      %v5290 = vpop.f32.mrf.mxu0
      %v5291 = vadd.f32 %v4971, %v5290
      %v5292 = vpop.f32.mrf.mxu0
      %v5293 = vadd.f32 %v4971, %v5292
      %v5294 = vpop.f32.mrf.mxu0
      %v5295 = vadd.f32 %v4976, %v5294
      %v5296 = vpop.f32.mrf.mxu0
      %v5297 = vadd.f32 %v4976, %v5296
      %5298 = vmatprep.mubr.bf16.mxu0 0
      %5299 = vmatmul.mubr.bf16.gmra.mxu0 %v5205
      %v5300 = vpop.f32.mrf.mxu0
      %v5301 = vadd.f32 %v4981, %v5300
      %v5302 = vpop.f32.mrf.mxu0
      %v5303 = vadd.f32 %v4981, %v5302
      %v5304 = vpop.f32.mrf.mxu0
      %v5305 = vadd.f32 %v4986, %v5304
      %v5306 = vpop.f32.mrf.mxu0
      %v5307 = vadd.f32 %v4986, %v5306
      %5308 = vmatprep.mubr.bf16.mxu0 0
      %5309 = vmatmul.mubr.bf16.gmra.mxu0 %v5208
      %v5310 = vpop.f32.mrf.mxu0
      %v5311 = vadd.f32 %v4991, %v5310
      %v5312 = vpop.f32.mrf.mxu0
      %v5313 = vadd.f32 %v4991, %v5312
      %v5314 = vpop.f32.mrf.mxu0
      %v5315 = vadd.f32 %v4996, %v5314
      %v5316 = vpop.f32.mrf.mxu0
      %v5317 = vadd.f32 %v4996, %v5316
      %5318 = vmatprep.mubr.bf16.mxu0 0
      %5319 = vmatmul.mubr.bf16.gmra.mxu0 %v5211
      %v5320 = vpop.f32.mrf.mxu0
      %v5321 = vadd.f32 %v5001, %v5320
      %v5322 = vpop.f32.mrf.mxu0
      %v5323 = vadd.f32 %v5001, %v5322
      %v5324 = vpop.f32.mrf.mxu0
      %v5325 = vadd.f32 %v5006, %v5324
      %v5326 = vpop.f32.mrf.mxu0
      %v5327 = vadd.f32 %v5006, %v5326
      %5328 = vmatprep.mubr.bf16.mxu0 0
      %5329 = vmatmul.mubr.bf16.gmra.mxu0 %v5214
      %v5330 = vpop.f32.mrf.mxu0
      %v5331 = vadd.f32 %v5011, %v5330
      %v5332 = vpop.f32.mrf.mxu0
      %v5333 = vadd.f32 %v5011, %v5332
      %v5334 = vpop.f32.mrf.mxu0
      %v5335 = vadd.f32 %v5016, %v5334
      %v5336 = vpop.f32.mrf.mxu0
      %v5337 = vadd.f32 %v5016, %v5336
      %5338 = vmatprep.mubr.bf16.mxu0 0
      %5339 = vmatmul.mubr.bf16.gmra.mxu0 %v5217
      %v5340 = vpop.f32.mrf.mxu0
      %v5341 = vadd.f32 %v5021, %v5340
      %v5342 = vpop.f32.mrf.mxu0
      %v5343 = vadd.f32 %v5021, %v5342
      %v5344 = vpop.f32.mrf.mxu0
      %v5345 = vadd.f32 %v5026, %v5344
      %v5346 = vpop.f32.mrf.mxu0
      %v5347 = vadd.f32 %v5026, %v5346
      %5348 = vmatprep.mubr.bf16.mxu0 0
      %5349 = vmatmul.mubr.bf16.gmra.mxu0 %v5220
      %v5350 = vpop.f32.mrf.mxu0
      %v5351 = vadd.f32 %v5031, %v5350
      %v5352 = vpop.f32.mrf.mxu0
      %v5353 = vadd.f32 %v5031, %v5352
      %v5354 = vpop.f32.mrf.mxu0
      %v5355 = vadd.f32 %v5036, %v5354
      %v5356 = vpop.f32.mrf.mxu0
      %v5357 = vadd.f32 %v5036, %v5356
      %5358 = vmatprep.mubr.bf16.mxu0 0
      %5359 = vmatmul.mubr.bf16.gmra.mxu0 %v5223
      %v5360 = vpop.f32.mrf.mxu0
      %v5361 = vadd.f32 %v5041, %v5360
      %v5362 = vpop.f32.mrf.mxu0
      %v5363 = vadd.f32 %v5041, %v5362
      %v5364 = vpop.f32.mrf.mxu0
      %v5365 = vadd.f32 %v5046, %v5364
      %v5366 = vpop.f32.mrf.mxu0
      %v5367 = vadd.f32 %v5046, %v5366
      %5368 = vmatprep.mubr.bf16.mxu0 0
      %5369 = vmatmul.mubr.bf16.gmra.mxu0 %v5226
      %v5370 = vpop.f32.mrf.mxu0
      %v5371 = vadd.f32 %v5051, %v5370
      %v5372 = vpop.f32.mrf.mxu0
      %v5373 = vadd.f32 %v5051, %v5372
      %v5374 = vpop.f32.mrf.mxu0
      %v5375 = vadd.f32 %v5056, %v5374
      %v5376 = vpop.f32.mrf.mxu0
      %v5377 = vadd.f32 %v5056, %v5376
      %5378 = vmatprep.mubr.bf16.mxu0 0
      %5379 = vmatmul.mubr.bf16.gmra.mxu0 %v5229
      %v5380 = vpop.f32.mrf.mxu0
      %v5381 = vadd.f32 %v5061, %v5380
      %v5382 = vpop.f32.mrf.mxu0
      %v5383 = vadd.f32 %v5061, %v5382
      %v5384 = vpop.f32.mrf.mxu0
      %v5385 = vadd.f32 %v5066, %v5384
      %v5386 = vpop.f32.mrf.mxu0
      %v5387 = vadd.f32 %v5066, %v5386
      %5388 = vmatprep.mubr.bf16.mxu0 0
      %5389 = vmatmul.mubr.bf16.gmra.mxu0 %v5232
      %v5390 = vpop.f32.mrf.mxu0
      %v5391 = vadd.f32 %v5071, %v5390
      %v5392 = vpop.f32.mrf.mxu0
      %v5393 = vadd.f32 %v5071, %v5392
      %v5394 = vpop.f32.mrf.mxu0
      %v5395 = vadd.f32 %v5076, %v5394
      %v5396 = vpop.f32.mrf.mxu0
      %v5397 = vadd.f32 %v5076, %v5396
      %5398 = vmatprep.mubr.bf16.mxu0 0
      %5399 = vmatmul.mubr.bf16.gmra.mxu0 %v5235
      %v5400 = vpop.f32.mrf.mxu0
      %v5401 = vadd.f32 %v5081, %v5400
      %v5402 = vpop.f32.mrf.mxu0
      %v5403 = vadd.f32 %v5081, %v5402
      %v5404 = vpop.f32.mrf.mxu0
      %v5405 = vadd.f32 %v5086, %v5404
      %v5406 = vpop.f32.mrf.mxu0
      %v5407 = vadd.f32 %v5086, %v5406
      %5408 = vmatprep.mubr.bf16.mxu0 0
      %5409 = vmatmul.mubr.bf16.gmra.mxu0 %v5238
      %v5410 = vpop.f32.mrf.mxu0
      %v5411 = vadd.f32 %v5091, %v5410
      %v5412 = vpop.f32.mrf.mxu0
      %v5413 = vadd.f32 %v5091, %v5412
      %v5414 = vpop.f32.mrf.mxu0
      %v5415 = vadd.f32 %v5096, %v5414
      %v5416 = vpop.f32.mrf.mxu0
      %v5417 = vadd.f32 %v5096, %v5416
      %5418 = vmatprep.mubr.bf16.mxu0 0
      %5419 = vmatmul.mubr.bf16.gmra.mxu0 %v5241
      %v5420 = vpop.f32.mrf.mxu0
      %v5421 = vadd.f32 %v5101, %v5420
      %v5422 = vpop.f32.mrf.mxu0
      %v5423 = vadd.f32 %v5101, %v5422
      %v5424 = vpop.f32.mrf.mxu0
      %v5425 = vadd.f32 %v5106, %v5424
      %v5426 = vpop.f32.mrf.mxu0
      %v5427 = vadd.f32 %v5106, %v5426
      %5428 = vmatprep.mubr.bf16.mxu0 0
      %5429 = vmatmul.mubr.bf16.gmra.mxu0 %v5244
      %v5430 = vpop.f32.mrf.mxu0
      %v5431 = vadd.f32 %v5111, %v5430
      %v5432 = vpop.f32.mrf.mxu0
      %v5433 = vadd.f32 %v5111, %v5432
      %v5434 = vpop.f32.mrf.mxu0
      %v5435 = vadd.f32 %v5116, %v5434
      %v5436 = vpop.f32.mrf.mxu0
      %v5437 = vadd.f32 %v5116, %v5436
      %5438 = vdwg.mxu0
      %v5439 = vmax.f32 %v5281, 0.0
      %v5440 = vmax.f32 %v5283, 0.0
      %v5441 = vmax.f32 %v5285, 0.0
      %v5442 = vmax.f32 %v5287, 0.0
      %v5443 = vmax.f32 %v5291, 0.0
      %v5444 = vmax.f32 %v5293, 0.0
      %v5445 = vmax.f32 %v5295, 0.0
      %v5446 = vmax.f32 %v5297, 0.0
      %v5447 = vmax.f32 %v5301, 0.0
      %v5448 = vmax.f32 %v5303, 0.0
      %v5449 = vmax.f32 %v5305, 0.0
      %v5450 = vmax.f32 %v5307, 0.0
      %v5451 = vmax.f32 %v5311, 0.0
      %v5452 = vmax.f32 %v5313, 0.0
      %v5453 = vmax.f32 %v5315, 0.0
      %v5454 = vmax.f32 %v5317, 0.0
      %v5455 = vmax.f32 %v5321, 0.0
      %v5456 = vmax.f32 %v5323, 0.0
      %v5457 = vmax.f32 %v5325, 0.0
      %v5458 = vmax.f32 %v5327, 0.0
      %v5459 = vmax.f32 %v5331, 0.0
      %v5460 = vmax.f32 %v5333, 0.0
      %v5461 = vmax.f32 %v5335, 0.0
      %v5462 = vmax.f32 %v5337, 0.0
      %v5463 = vmax.f32 %v5341, 0.0
      %v5464 = vmax.f32 %v5343, 0.0
      %v5465 = vmax.f32 %v5345, 0.0
      %v5466 = vmax.f32 %v5347, 0.0
      %v5467 = vmax.f32 %v5351, 0.0
      %v5468 = vmax.f32 %v5353, 0.0
      %v5469 = vmax.f32 %v5355, 0.0
      %v5470 = vmax.f32 %v5357, 0.0
      %v5471 = vmax.f32 %v5361, 0.0
      %v5472 = vmax.f32 %v5363, 0.0
      %v5473 = vmax.f32 %v5365, 0.0
      %v5474 = vmax.f32 %v5367, 0.0
      %v5475 = vmax.f32 %v5371, 0.0
      %v5476 = vmax.f32 %v5373, 0.0
      %v5477 = vmax.f32 %v5375, 0.0
      %v5478 = vmax.f32 %v5377, 0.0
      %v5479 = vmax.f32 %v5381, 0.0
      %v5480 = vmax.f32 %v5383, 0.0
      %v5481 = vmax.f32 %v5385, 0.0
      %v5482 = vmax.f32 %v5387, 0.0
      %v5483 = vmax.f32 %v5391, 0.0
      %v5484 = vmax.f32 %v5393, 0.0
      %v5485 = vmax.f32 %v5395, 0.0
      %v5486 = vmax.f32 %v5397, 0.0
      %v5487 = vmax.f32 %v5401, 0.0
      %v5488 = vmax.f32 %v5403, 0.0
      %v5489 = vmax.f32 %v5405, 0.0
      %v5490 = vmax.f32 %v5407, 0.0
      %v5491 = vmax.f32 %v5411, 0.0
      %v5492 = vmax.f32 %v5413, 0.0
      %v5493 = vmax.f32 %v5415, 0.0
      %v5494 = vmax.f32 %v5417, 0.0
      %v5495 = vmax.f32 %v5421, 0.0
      %v5496 = vmax.f32 %v5423, 0.0
      %v5497 = vmax.f32 %v5425, 0.0
      %v5498 = vmax.f32 %v5427, 0.0
      %v5499 = vmax.f32 %v5431, 0.0
      %v5500 = vmax.f32 %v5433, 0.0
      %v5501 = vmax.f32 %v5435, 0.0
      %v5502 = vmax.f32 %v5437, 0.0
      %v5503 = vpack.c.bf16 %v5441, %v5439
      %v5504 = vpack.c.bf16 %v5442, %v5440
      %v5505 = vpack.c.bf16 %v5445, %v5443
      %v5506 = vpack.c.bf16 %v5446, %v5444
      %v5507 = vpack.c.bf16 %v5449, %v5447
      %v5508 = vpack.c.bf16 %v5450, %v5448
      %v5509 = vpack.c.bf16 %v5453, %v5451
      %v5510 = vpack.c.bf16 %v5454, %v5452
      %v5511 = vpack.c.bf16 %v5457, %v5455
      %v5512 = vpack.c.bf16 %v5458, %v5456
      %v5513 = vpack.c.bf16 %v5461, %v5459
      %v5514 = vpack.c.bf16 %v5462, %v5460
      %v5515 = vpack.c.bf16 %v5465, %v5463
      %v5516 = vpack.c.bf16 %v5466, %v5464
      %v5517 = vpack.c.bf16 %v5469, %v5467
      %v5518 = vpack.c.bf16 %v5470, %v5468
      %v5519 = vpack.c.bf16 %v5473, %v5471
      %v5520 = vpack.c.bf16 %v5474, %v5472
      %v5521 = vpack.c.bf16 %v5477, %v5475
      %v5522 = vpack.c.bf16 %v5478, %v5476
      %v5523 = vpack.c.bf16 %v5481, %v5479
      %v5524 = vpack.c.bf16 %v5482, %v5480
      %v5525 = vpack.c.bf16 %v5485, %v5483
      %v5526 = vpack.c.bf16 %v5486, %v5484
      %v5527 = vpack.c.bf16 %v5489, %v5487
      %v5528 = vpack.c.bf16 %v5490, %v5488
      %v5529 = vpack.c.bf16 %v5493, %v5491
      %v5530 = vpack.c.bf16 %v5494, %v5492
      %v5531 = vpack.c.bf16 %v5497, %v5495
      %v5532 = vpack.c.bf16 %v5498, %v5496
      %v5533 = vpack.c.bf16 %v5501, %v5499
      %v5534 = vpack.c.bf16 %v5502, %v5500
      %s5535 = scalar_lea.vmem %s5, 192
      %v5536 = vld [vmem:[%s5535] sm:$0xff]
      %v5537 = vld [vmem:[%s5535 + $0x8] sm:$0xff]
      %v5538 = vld [vmem:[%s5535 + $0x10] sm:$0xff]
      %v5539 = vld [vmem:[%s5535 + $0x18] sm:$0xff]
      %v5544 = vunpack.c.l.b16 %v5536
      %v5545 = vunpack.c.h.b16 %v5536
      %v5546 = vunpack.c.l.b16 %v5537
      %v5547 = vunpack.c.h.b16 %v5537
      %v5548 = vunpack.c.l.b16 %v5538
      %v5549 = vunpack.c.h.b16 %v5538
      %v5550 = vunpack.c.l.b16 %v5539
      %v5551 = vunpack.c.h.b16 %v5539
      %v5552 = vpack.c.b16 %v5546, %v5544
      %v5553 = vpack.c.b16 %v5547, %v5545
      %v5554 = vpack.c.b16 %v5550, %v5548
      %v5555 = vpack.c.b16 %v5551, %v5549
      %5560 = vmatprep.subr.bf16.mxu0 %v5518
      %5561 = vmatpush1.bf16.msra.mxu0 %v5517
      %5562 = vmatprep.subr.bf16.mxu0 %v5516
      %5563 = vmatpush1.bf16.msra.mxu0 %v5515
      %5564 = vmatprep.subr.bf16.mxu0 %v5514
      %5565 = vmatpush1.bf16.msra.mxu0 %v5513
      %5566 = vmatprep.subr.bf16.mxu0 %v5512
      %5567 = vmatpush1.bf16.msra.mxu0 %v5511
      %5568 = vmatprep.subr.bf16.mxu0 %v5510
      %5569 = vmatpush1.bf16.msra.mxu0 %v5509
      %5570 = vmatprep.subr.bf16.mxu0 %v5508
      %5571 = vmatpush1.bf16.msra.mxu0 %v5507
      %5572 = vmatprep.subr.bf16.mxu0 %v5506
      %5573 = vmatpush1.bf16.msra.mxu0 %v5505
      %5574 = vmatprep.subr.bf16.mxu0 %v5504
      %5575 = vmatpush1.bf16.msra.mxu0 %v5503
      %5576 = vmatprep.subr.bf16.mxu0 %v5534
      %5577 = vmatpush2.bf16.msra.mxu0 %v5533
      %5578 = vmatprep.subr.bf16.mxu0 %v5532
      %5579 = vmatpush2.bf16.msra.mxu0 %v5531
      %5580 = vmatprep.subr.bf16.mxu0 %v5530
      %5581 = vmatpush2.bf16.msra.mxu0 %v5529
      %5582 = vmatprep.subr.bf16.mxu0 %v5528
      %5583 = vmatpush2.bf16.msra.mxu0 %v5527
      %5584 = vmatprep.subr.bf16.mxu0 %v5526
      %5585 = vmatpush2.bf16.msra.mxu0 %v5525
      %5586 = vmatprep.subr.bf16.mxu0 %v5524
      %5587 = vmatpush2.bf16.msra.mxu0 %v5523
      %5588 = vmatprep.subr.bf16.mxu0 %v5522
      %5589 = vmatpush2.bf16.msra.mxu0 %v5521
      %5590 = vmatprep.subr.bf16.mxu0 %v5520
      %5591 = vmatpush2.bf16.msra.mxu0 %v5519
      %5592 = vmatprep.mubr.bf16.mxu0 %v5553
      %5593 = vmatmul.mubr.bf16.gmra.mxu0 %v5552
      %v5594 = vpop.f32.mrf.mxu0
      %v5595 = vadd.f32 0.0, %v5594
      %v5596 = vpop.f32.mrf.mxu0
      %v5597 = vadd.f32 0.0, %v5596
      %v5598 = vpop.f32.mrf.mxu0
      %v5599 = vadd.f32 0.0, %v5598
      %v5600 = vpop.f32.mrf.mxu0
      %v5601 = vadd.f32 0.0, %v5600
      %5602 = vmatprep.mubr.bf16.mxu0 %v5555
      %5603 = vmatmul.mubr.bf16.gmra.mxu0 %v5554
      %v5604 = vpop.f32.mrf.mxu0
      %v5605 = vadd.f32 0.0, %v5604
      %v5606 = vpop.f32.mrf.mxu0
      %v5607 = vadd.f32 0.0, %v5606
      %v5608 = vpop.f32.mrf.mxu0
      %v5609 = vadd.f32 0.0, %v5608
      %v5610 = vpop.f32.mrf.mxu0
      %v5611 = vadd.f32 0.0, %v5610
      %5612 = vdwg.mxu0
      %v5613 = vadd.f32 %v4884, %v5595
      %v5614 = vadd.f32 %v4885, %v5597
      %v5615 = vadd.f32 %v4886, %v5599
      %v5616 = vadd.f32 %v4887, %v5601
      %v5617 = vadd.f32 %v4888, %v5605
      %v5618 = vadd.f32 %v4889, %v5607
      %v5619 = vadd.f32 %v4890, %v5609
      %v5620 = vadd.f32 %v4891, %v5611
      %s5621 = scalar_lea.vmem %s3, 896
      %v5622 = vld [vmem:[%s5621] sm:$0xf]
      %v5623 = vld [vmem:[%s5621 + $0x4] sm:$0xf]
      %v5624 = vld [vmem:[%s5621 + $0x8] sm:$0xf]
      %v5625 = vld [vmem:[%s5621 + $0xc] sm:$0xf]
      %v5626 = vld [vmem:[%s5621 + $0x10] sm:$0xf]
      %v5627 = vld [vmem:[%s5621 + $0x14] sm:$0xf]
      %v5628 = vld [vmem:[%s5621 + $0x18] sm:$0xf]
      %v5629 = vld [vmem:[%s5621 + $0x1c] sm:$0xf]
      %v5630 = vld [vmem:[%s5621 + $0x20] sm:$0xf]
      %v5631 = vld [vmem:[%s5621 + $0x24] sm:$0xf]
      %v5632 = vld [vmem:[%s5621 + $0x28] sm:$0xf]
      %v5633 = vld [vmem:[%s5621 + $0x2c] sm:$0xf]
      %v5634 = vld [vmem:[%s5621 + $0x30] sm:$0xf]
      %v5635 = vld [vmem:[%s5621 + $0x34] sm:$0xf]
      %v5636 = vld [vmem:[%s5621 + $0x38] sm:$0xf]
      %v5637 = vld [vmem:[%s5621 + $0x3c] sm:$0xf]
      %v5638 = vld [vmem:[%s5621 + $0x40] sm:$0xf]
      %v5639 = vld [vmem:[%s5621 + $0x44] sm:$0xf]
      %v5640 = vld [vmem:[%s5621 + $0x48] sm:$0xf]
      %v5641 = vld [vmem:[%s5621 + $0x4c] sm:$0xf]
      %v5642 = vld [vmem:[%s5621 + $0x50] sm:$0xf]
      %v5643 = vld [vmem:[%s5621 + $0x54] sm:$0xf]
      %v5644 = vld [vmem:[%s5621 + $0x58] sm:$0xf]
      %v5645 = vld [vmem:[%s5621 + $0x5c] sm:$0xf]
      %v5646 = vld [vmem:[%s5621 + $0x60] sm:$0xf]
      %v5647 = vld [vmem:[%s5621 + $0x64] sm:$0xf]
      %v5648 = vld [vmem:[%s5621 + $0x68] sm:$0xf]
      %v5649 = vld [vmem:[%s5621 + $0x6c] sm:$0xf]
      %v5650 = vld [vmem:[%s5621 + $0x70] sm:$0xf]
      %v5651 = vld [vmem:[%s5621 + $0x74] sm:$0xf]
      %v5652 = vld [vmem:[%s5621 + $0x78] sm:$0xf]
      %v5653 = vld [vmem:[%s5621 + $0x7c] sm:$0xf]
      %s5654 = scalar_lea.vmem %s4, 1792
      %v5655 = vld [vmem:[%s5654] sm:$0xff]
      %v5656 = vld [vmem:[%s5654 + $0x8] sm:$0xff]
      %v5657 = vld [vmem:[%s5654 + $0x10] sm:$0xff]
      %v5658 = vld [vmem:[%s5654 + $0x18] sm:$0xff]
      %v5659 = vld [vmem:[%s5654 + $0x20] sm:$0xff]
      %v5660 = vld [vmem:[%s5654 + $0x28] sm:$0xff]
      %v5661 = vld [vmem:[%s5654 + $0x30] sm:$0xff]
      %v5662 = vld [vmem:[%s5654 + $0x38] sm:$0xff]
      %v5663 = vld [vmem:[%s5654 + $0x40] sm:$0xff]
      %v5664 = vld [vmem:[%s5654 + $0x48] sm:$0xff]
      %v5665 = vld [vmem:[%s5654 + $0x50] sm:$0xff]
      %v5666 = vld [vmem:[%s5654 + $0x58] sm:$0xff]
      %v5667 = vld [vmem:[%s5654 + $0x60] sm:$0xff]
      %v5668 = vld [vmem:[%s5654 + $0x68] sm:$0xff]
      %v5669 = vld [vmem:[%s5654 + $0x70] sm:$0xff]
      %v5670 = vld [vmem:[%s5654 + $0x78] sm:$0xff]
      %v5671 = vld [vmem:[%s5654 + $0x80] sm:$0xff]
      %v5672 = vld [vmem:[%s5654 + $0x88] sm:$0xff]
      %v5673 = vld [vmem:[%s5654 + $0x90] sm:$0xff]
      %v5674 = vld [vmem:[%s5654 + $0x98] sm:$0xff]
      %v5675 = vld [vmem:[%s5654 + $0xa0] sm:$0xff]
      %v5676 = vld [vmem:[%s5654 + $0xa8] sm:$0xff]
      %v5677 = vld [vmem:[%s5654 + $0xb0] sm:$0xff]
      %v5678 = vld [vmem:[%s5654 + $0xb8] sm:$0xff]
      %v5679 = vld [vmem:[%s5654 + $0xc0] sm:$0xff]
      %v5680 = vld [vmem:[%s5654 + $0xc8] sm:$0xff]
      %v5681 = vld [vmem:[%s5654 + $0xd0] sm:$0xff]
      %v5682 = vld [vmem:[%s5654 + $0xd8] sm:$0xff]
      %v5683 = vld [vmem:[%s5654 + $0xe0] sm:$0xff]
      %v5684 = vld [vmem:[%s5654 + $0xe8] sm:$0xff]
      %v5685 = vld [vmem:[%s5654 + $0xf0] sm:$0xff]
      %v5686 = vld [vmem:[%s5654 + $0xf8] sm:$0xff]
      %5688 = vset.pattern.permute.xlu0 0
      %5689 = vperm.xlu0 %5688, %v5655
      %v5690 = vpop.permute.xlu0 %5689
      %5693 = vset.pattern.permute.xlu0 0
      %5694 = vperm.xlu0 %5693, %v5656
      %v5695 = vpop.permute.xlu0 %5694
      %5698 = vset.pattern.permute.xlu0 0
      %5699 = vperm.xlu0 %5698, %v5657
      %v5700 = vpop.permute.xlu0 %5699
      %5703 = vset.pattern.permute.xlu0 0
      %5704 = vperm.xlu0 %5703, %v5658
      %v5705 = vpop.permute.xlu0 %5704
      %5708 = vset.pattern.permute.xlu0 0
      %5709 = vperm.xlu0 %5708, %v5659
      %v5710 = vpop.permute.xlu0 %5709
      %5713 = vset.pattern.permute.xlu0 0
      %5714 = vperm.xlu0 %5713, %v5660
      %v5715 = vpop.permute.xlu0 %5714
      %5718 = vset.pattern.permute.xlu0 0
      %5719 = vperm.xlu0 %5718, %v5661
      %v5720 = vpop.permute.xlu0 %5719
      %5723 = vset.pattern.permute.xlu0 0
      %5724 = vperm.xlu0 %5723, %v5662
      %v5725 = vpop.permute.xlu0 %5724
      %5728 = vset.pattern.permute.xlu0 0
      %5729 = vperm.xlu0 %5728, %v5663
      %v5730 = vpop.permute.xlu0 %5729
      %5733 = vset.pattern.permute.xlu0 0
      %5734 = vperm.xlu0 %5733, %v5664
      %v5735 = vpop.permute.xlu0 %5734
      %5738 = vset.pattern.permute.xlu0 0
      %5739 = vperm.xlu0 %5738, %v5665
      %v5740 = vpop.permute.xlu0 %5739
      %5743 = vset.pattern.permute.xlu0 0
      %5744 = vperm.xlu0 %5743, %v5666
      %v5745 = vpop.permute.xlu0 %5744
      %5748 = vset.pattern.permute.xlu0 0
      %5749 = vperm.xlu0 %5748, %v5667
      %v5750 = vpop.permute.xlu0 %5749
      %5753 = vset.pattern.permute.xlu0 0
      %5754 = vperm.xlu0 %5753, %v5668
      %v5755 = vpop.permute.xlu0 %5754
      %5758 = vset.pattern.permute.xlu0 0
      %5759 = vperm.xlu0 %5758, %v5669
      %v5760 = vpop.permute.xlu0 %5759
      %5763 = vset.pattern.permute.xlu0 0
      %5764 = vperm.xlu0 %5763, %v5670
      %v5765 = vpop.permute.xlu0 %5764
      %5768 = vset.pattern.permute.xlu0 0
      %5769 = vperm.xlu0 %5768, %v5671
      %v5770 = vpop.permute.xlu0 %5769
      %5773 = vset.pattern.permute.xlu0 0
      %5774 = vperm.xlu0 %5773, %v5672
      %v5775 = vpop.permute.xlu0 %5774
      %5778 = vset.pattern.permute.xlu0 0
      %5779 = vperm.xlu0 %5778, %v5673
      %v5780 = vpop.permute.xlu0 %5779
      %5783 = vset.pattern.permute.xlu0 0
      %5784 = vperm.xlu0 %5783, %v5674
      %v5785 = vpop.permute.xlu0 %5784
      %5788 = vset.pattern.permute.xlu0 0
      %5789 = vperm.xlu0 %5788, %v5675
      %v5790 = vpop.permute.xlu0 %5789
      %5793 = vset.pattern.permute.xlu0 0
      %5794 = vperm.xlu0 %5793, %v5676
      %v5795 = vpop.permute.xlu0 %5794
      %5798 = vset.pattern.permute.xlu0 0
      %5799 = vperm.xlu0 %5798, %v5677
      %v5800 = vpop.permute.xlu0 %5799
      %5803 = vset.pattern.permute.xlu0 0
      %5804 = vperm.xlu0 %5803, %v5678
      %v5805 = vpop.permute.xlu0 %5804
      %5808 = vset.pattern.permute.xlu0 0
      %5809 = vperm.xlu0 %5808, %v5679
      %v5810 = vpop.permute.xlu0 %5809
      %5813 = vset.pattern.permute.xlu0 0
      %5814 = vperm.xlu0 %5813, %v5680
      %v5815 = vpop.permute.xlu0 %5814
      %5818 = vset.pattern.permute.xlu0 0
      %5819 = vperm.xlu0 %5818, %v5681
      %v5820 = vpop.permute.xlu0 %5819
      %5823 = vset.pattern.permute.xlu0 0
      %5824 = vperm.xlu0 %5823, %v5682
      %v5825 = vpop.permute.xlu0 %5824
      %5828 = vset.pattern.permute.xlu0 0
      %5829 = vperm.xlu0 %5828, %v5683
      %v5830 = vpop.permute.xlu0 %5829
      %5833 = vset.pattern.permute.xlu0 0
      %5834 = vperm.xlu0 %5833, %v5684
      %v5835 = vpop.permute.xlu0 %5834
      %5838 = vset.pattern.permute.xlu0 0
      %5839 = vperm.xlu0 %5838, %v5685
      %v5840 = vpop.permute.xlu0 %5839
      %5843 = vset.pattern.permute.xlu0 0
      %5844 = vperm.xlu0 %5843, %v5686
      %v5845 = vpop.permute.xlu0 %5844
      %v5879 = vunpack.c.l.b16 %v5622
      %v5880 = vunpack.c.l.b16 %v5623
      %v5881 = vunpack.c.l.b16 %v5624
      %v5882 = vunpack.c.l.b16 %v5625
      %v5883 = vunpack.c.l.b16 %v5626
      %v5884 = vunpack.c.l.b16 %v5627
      %v5885 = vunpack.c.l.b16 %v5628
      %v5886 = vunpack.c.l.b16 %v5629
      %v5887 = vunpack.c.l.b16 %v5630
      %v5888 = vunpack.c.l.b16 %v5631
      %v5889 = vunpack.c.l.b16 %v5632
      %v5890 = vunpack.c.l.b16 %v5633
      %v5891 = vunpack.c.l.b16 %v5634
      %v5892 = vunpack.c.l.b16 %v5635
      %v5893 = vunpack.c.l.b16 %v5636
      %v5894 = vunpack.c.l.b16 %v5637
      %v5895 = vunpack.c.l.b16 %v5638
      %v5896 = vunpack.c.l.b16 %v5639
      %v5897 = vunpack.c.l.b16 %v5640
      %v5898 = vunpack.c.l.b16 %v5641
      %v5899 = vunpack.c.l.b16 %v5642
      %v5900 = vunpack.c.l.b16 %v5643
      %v5901 = vunpack.c.l.b16 %v5644
      %v5902 = vunpack.c.l.b16 %v5645
      %v5903 = vunpack.c.l.b16 %v5646
      %v5904 = vunpack.c.l.b16 %v5647
      %v5905 = vunpack.c.l.b16 %v5648
      %v5906 = vunpack.c.l.b16 %v5649
      %v5907 = vunpack.c.l.b16 %v5650
      %v5908 = vunpack.c.l.b16 %v5651
      %v5909 = vunpack.c.l.b16 %v5652
      %v5910 = vunpack.c.l.b16 %v5653
      %v5911 = vpack.c.b16 %v5880, %v5879
      %v5912 = vpack.c.b16 %v5882, %v5881
      %v5913 = vpack.c.b16 %v5884, %v5883
      %v5914 = vpack.c.b16 %v5886, %v5885
      %v5915 = vpack.c.b16 %v5888, %v5887
      %v5916 = vpack.c.b16 %v5890, %v5889
      %v5917 = vpack.c.b16 %v5892, %v5891
      %v5918 = vpack.c.b16 %v5894, %v5893
      %v5919 = vpack.c.b16 %v5896, %v5895
      %v5920 = vpack.c.b16 %v5898, %v5897
      %v5921 = vpack.c.b16 %v5900, %v5899
      %v5922 = vpack.c.b16 %v5902, %v5901
      %v5923 = vpack.c.b16 %v5904, %v5903
      %v5924 = vpack.c.b16 %v5906, %v5905
      %v5925 = vpack.c.b16 %v5908, %v5907
      %v5926 = vpack.c.b16 %v5910, %v5909
      %v5928 = vsel %vm840, %v5911, 0
      %v5931 = vsel %vm840, %v5912, 0
      %v5934 = vsel %vm840, %v5913, 0
      %v5937 = vsel %vm840, %v5914, 0
      %v5940 = vsel %vm840, %v5915, 0
      %v5943 = vsel %vm840, %v5916, 0
      %v5946 = vsel %vm840, %v5917, 0
      %v5949 = vsel %vm840, %v5918, 0
      %v5952 = vsel %vm840, %v5919, 0
      %v5955 = vsel %vm840, %v5920, 0
      %v5958 = vsel %vm840, %v5921, 0
      %v5961 = vsel %vm840, %v5922, 0
      %v5964 = vsel %vm840, %v5923, 0
      %v5967 = vsel %vm840, %v5924, 0
      %v5970 = vsel %vm840, %v5925, 0
      %v5973 = vsel %vm840, %v5926, 0
      %5975 = vmatprep.subr.bf16.mxu0 0
      %5976 = vmatpush1.bf16.msra.mxu0 0
      %5977 = vmatprep.subr.bf16.mxu0 0
      %5978 = vmatpush1.bf16.msra.mxu0 0
      %5979 = vmatprep.subr.bf16.mxu0 0
      %5980 = vmatpush1.bf16.msra.mxu0 0
      %5981 = vmatprep.subr.bf16.mxu0 0
      %5982 = vmatpush1.bf16.msra.mxu0 0
      %5983 = vmatprep.subr.bf16.mxu0 %v535
      %5984 = vmatpush1.bf16.msra.mxu0 %v534
      %5985 = vmatprep.subr.bf16.mxu0 %v533
      %5986 = vmatpush1.bf16.msra.mxu0 %v532
      %5987 = vmatprep.subr.bf16.mxu0 %v531
      %5988 = vmatpush1.bf16.msra.mxu0 %v530
      %5989 = vmatprep.subr.bf16.mxu0 %v529
      %5990 = vmatpush1.bf16.msra.mxu0 %v528
      %5991 = vmatprep.subr.bf16.mxu0 0
      %5992 = vmatpush2.bf16.msra.mxu0 0
      %5993 = vmatprep.subr.bf16.mxu0 0
      %5994 = vmatpush2.bf16.msra.mxu0 0
      %5995 = vmatprep.subr.bf16.mxu0 0
      %5996 = vmatpush2.bf16.msra.mxu0 0
      %5997 = vmatprep.subr.bf16.mxu0 0
      %5998 = vmatpush2.bf16.msra.mxu0 0
      %5999 = vmatprep.subr.bf16.mxu0 0
      %6000 = vmatpush2.bf16.msra.mxu0 0
      %6001 = vmatprep.subr.bf16.mxu0 0
      %6002 = vmatpush2.bf16.msra.mxu0 0
      %6003 = vmatprep.subr.bf16.mxu0 0
      %6004 = vmatpush2.bf16.msra.mxu0 0
      %6005 = vmatprep.subr.bf16.mxu0 0
      %6006 = vmatpush2.bf16.msra.mxu0 0
      %6007 = vmatprep.mubr.bf16.mxu0 0
      %6008 = vmatmul.mubr.bf16.gmra.mxu0 %v5928
      %v6009 = vpop.f32.mrf.mxu0
      %v6010 = vadd.f32 %v5690, %v6009
      %v6011 = vpop.f32.mrf.mxu0
      %v6012 = vadd.f32 %v5690, %v6011
      %v6013 = vpop.f32.mrf.mxu0
      %v6014 = vadd.f32 %v5695, %v6013
      %v6015 = vpop.f32.mrf.mxu0
      %v6016 = vadd.f32 %v5695, %v6015
      %6017 = vmatprep.mubr.bf16.mxu0 0
      %6018 = vmatmul.mubr.bf16.gmra.mxu0 %v5931
      %v6019 = vpop.f32.mrf.mxu0
      %v6020 = vadd.f32 %v5700, %v6019
      %v6021 = vpop.f32.mrf.mxu0
      %v6022 = vadd.f32 %v5700, %v6021
      %v6023 = vpop.f32.mrf.mxu0
      %v6024 = vadd.f32 %v5705, %v6023
      %v6025 = vpop.f32.mrf.mxu0
      %v6026 = vadd.f32 %v5705, %v6025
      %6027 = vmatprep.mubr.bf16.mxu0 0
      %6028 = vmatmul.mubr.bf16.gmra.mxu0 %v5934
      %v6029 = vpop.f32.mrf.mxu0
      %v6030 = vadd.f32 %v5710, %v6029
      %v6031 = vpop.f32.mrf.mxu0
      %v6032 = vadd.f32 %v5710, %v6031
      %v6033 = vpop.f32.mrf.mxu0
      %v6034 = vadd.f32 %v5715, %v6033
      %v6035 = vpop.f32.mrf.mxu0
      %v6036 = vadd.f32 %v5715, %v6035
      %6037 = vmatprep.mubr.bf16.mxu0 0
      %6038 = vmatmul.mubr.bf16.gmra.mxu0 %v5937
      %v6039 = vpop.f32.mrf.mxu0
      %v6040 = vadd.f32 %v5720, %v6039
      %v6041 = vpop.f32.mrf.mxu0
      %v6042 = vadd.f32 %v5720, %v6041
      %v6043 = vpop.f32.mrf.mxu0
      %v6044 = vadd.f32 %v5725, %v6043
      %v6045 = vpop.f32.mrf.mxu0
      %v6046 = vadd.f32 %v5725, %v6045
      %6047 = vmatprep.mubr.bf16.mxu0 0
      %6048 = vmatmul.mubr.bf16.gmra.mxu0 %v5940
      %v6049 = vpop.f32.mrf.mxu0
      %v6050 = vadd.f32 %v5730, %v6049
      %v6051 = vpop.f32.mrf.mxu0
      %v6052 = vadd.f32 %v5730, %v6051
      %v6053 = vpop.f32.mrf.mxu0
      %v6054 = vadd.f32 %v5735, %v6053
      %v6055 = vpop.f32.mrf.mxu0
      %v6056 = vadd.f32 %v5735, %v6055
      %6057 = vmatprep.mubr.bf16.mxu0 0
      %6058 = vmatmul.mubr.bf16.gmra.mxu0 %v5943
      %v6059 = vpop.f32.mrf.mxu0
      %v6060 = vadd.f32 %v5740, %v6059
      %v6061 = vpop.f32.mrf.mxu0
      %v6062 = vadd.f32 %v5740, %v6061
      %v6063 = vpop.f32.mrf.mxu0
      %v6064 = vadd.f32 %v5745, %v6063
      %v6065 = vpop.f32.mrf.mxu0
      %v6066 = vadd.f32 %v5745, %v6065
      %6067 = vmatprep.mubr.bf16.mxu0 0
      %6068 = vmatmul.mubr.bf16.gmra.mxu0 %v5946
      %v6069 = vpop.f32.mrf.mxu0
      %v6070 = vadd.f32 %v5750, %v6069
      %v6071 = vpop.f32.mrf.mxu0
      %v6072 = vadd.f32 %v5750, %v6071
      %v6073 = vpop.f32.mrf.mxu0
      %v6074 = vadd.f32 %v5755, %v6073
      %v6075 = vpop.f32.mrf.mxu0
      %v6076 = vadd.f32 %v5755, %v6075
      %6077 = vmatprep.mubr.bf16.mxu0 0
      %6078 = vmatmul.mubr.bf16.gmra.mxu0 %v5949
      %v6079 = vpop.f32.mrf.mxu0
      %v6080 = vadd.f32 %v5760, %v6079
      %v6081 = vpop.f32.mrf.mxu0
      %v6082 = vadd.f32 %v5760, %v6081
      %v6083 = vpop.f32.mrf.mxu0
      %v6084 = vadd.f32 %v5765, %v6083
      %v6085 = vpop.f32.mrf.mxu0
      %v6086 = vadd.f32 %v5765, %v6085
      %6087 = vmatprep.mubr.bf16.mxu0 0
      %6088 = vmatmul.mubr.bf16.gmra.mxu0 %v5952
      %v6089 = vpop.f32.mrf.mxu0
      %v6090 = vadd.f32 %v5770, %v6089
      %v6091 = vpop.f32.mrf.mxu0
      %v6092 = vadd.f32 %v5770, %v6091
      %v6093 = vpop.f32.mrf.mxu0
      %v6094 = vadd.f32 %v5775, %v6093
      %v6095 = vpop.f32.mrf.mxu0
      %v6096 = vadd.f32 %v5775, %v6095
      %6097 = vmatprep.mubr.bf16.mxu0 0
      %6098 = vmatmul.mubr.bf16.gmra.mxu0 %v5955
      %v6099 = vpop.f32.mrf.mxu0
      %v6100 = vadd.f32 %v5780, %v6099
      %v6101 = vpop.f32.mrf.mxu0
      %v6102 = vadd.f32 %v5780, %v6101
      %v6103 = vpop.f32.mrf.mxu0
      %v6104 = vadd.f32 %v5785, %v6103
      %v6105 = vpop.f32.mrf.mxu0
      %v6106 = vadd.f32 %v5785, %v6105
      %6107 = vmatprep.mubr.bf16.mxu0 0
      %6108 = vmatmul.mubr.bf16.gmra.mxu0 %v5958
      %v6109 = vpop.f32.mrf.mxu0
      %v6110 = vadd.f32 %v5790, %v6109
      %v6111 = vpop.f32.mrf.mxu0
      %v6112 = vadd.f32 %v5790, %v6111
      %v6113 = vpop.f32.mrf.mxu0
      %v6114 = vadd.f32 %v5795, %v6113
      %v6115 = vpop.f32.mrf.mxu0
      %v6116 = vadd.f32 %v5795, %v6115
      %6117 = vmatprep.mubr.bf16.mxu0 0
      %6118 = vmatmul.mubr.bf16.gmra.mxu0 %v5961
      %v6119 = vpop.f32.mrf.mxu0
      %v6120 = vadd.f32 %v5800, %v6119
      %v6121 = vpop.f32.mrf.mxu0
      %v6122 = vadd.f32 %v5800, %v6121
      %v6123 = vpop.f32.mrf.mxu0
      %v6124 = vadd.f32 %v5805, %v6123
      %v6125 = vpop.f32.mrf.mxu0
      %v6126 = vadd.f32 %v5805, %v6125
      %6127 = vmatprep.mubr.bf16.mxu0 0
      %6128 = vmatmul.mubr.bf16.gmra.mxu0 %v5964
      %v6129 = vpop.f32.mrf.mxu0
      %v6130 = vadd.f32 %v5810, %v6129
      %v6131 = vpop.f32.mrf.mxu0
      %v6132 = vadd.f32 %v5810, %v6131
      %v6133 = vpop.f32.mrf.mxu0
      %v6134 = vadd.f32 %v5815, %v6133
      %v6135 = vpop.f32.mrf.mxu0
      %v6136 = vadd.f32 %v5815, %v6135
      %6137 = vmatprep.mubr.bf16.mxu0 0
      %6138 = vmatmul.mubr.bf16.gmra.mxu0 %v5967
      %v6139 = vpop.f32.mrf.mxu0
      %v6140 = vadd.f32 %v5820, %v6139
      %v6141 = vpop.f32.mrf.mxu0
      %v6142 = vadd.f32 %v5820, %v6141
      %v6143 = vpop.f32.mrf.mxu0
      %v6144 = vadd.f32 %v5825, %v6143
      %v6145 = vpop.f32.mrf.mxu0
      %v6146 = vadd.f32 %v5825, %v6145
      %6147 = vmatprep.mubr.bf16.mxu0 0
      %6148 = vmatmul.mubr.bf16.gmra.mxu0 %v5970
      %v6149 = vpop.f32.mrf.mxu0
      %v6150 = vadd.f32 %v5830, %v6149
      %v6151 = vpop.f32.mrf.mxu0
      %v6152 = vadd.f32 %v5830, %v6151
      %v6153 = vpop.f32.mrf.mxu0
      %v6154 = vadd.f32 %v5835, %v6153
      %v6155 = vpop.f32.mrf.mxu0
      %v6156 = vadd.f32 %v5835, %v6155
      %6157 = vmatprep.mubr.bf16.mxu0 0
      %6158 = vmatmul.mubr.bf16.gmra.mxu0 %v5973
      %v6159 = vpop.f32.mrf.mxu0
      %v6160 = vadd.f32 %v5840, %v6159
      %v6161 = vpop.f32.mrf.mxu0
      %v6162 = vadd.f32 %v5840, %v6161
      %v6163 = vpop.f32.mrf.mxu0
      %v6164 = vadd.f32 %v5845, %v6163
      %v6165 = vpop.f32.mrf.mxu0
      %v6166 = vadd.f32 %v5845, %v6165
      %6167 = vdwg.mxu0
      %v6168 = vmax.f32 %v6010, 0.0
      %v6169 = vmax.f32 %v6012, 0.0
      %v6170 = vmax.f32 %v6014, 0.0
      %v6171 = vmax.f32 %v6016, 0.0
      %v6172 = vmax.f32 %v6020, 0.0
      %v6173 = vmax.f32 %v6022, 0.0
      %v6174 = vmax.f32 %v6024, 0.0
      %v6175 = vmax.f32 %v6026, 0.0
      %v6176 = vmax.f32 %v6030, 0.0
      %v6177 = vmax.f32 %v6032, 0.0
      %v6178 = vmax.f32 %v6034, 0.0
      %v6179 = vmax.f32 %v6036, 0.0
      %v6180 = vmax.f32 %v6040, 0.0
      %v6181 = vmax.f32 %v6042, 0.0
      %v6182 = vmax.f32 %v6044, 0.0
      %v6183 = vmax.f32 %v6046, 0.0
      %v6184 = vmax.f32 %v6050, 0.0
      %v6185 = vmax.f32 %v6052, 0.0
      %v6186 = vmax.f32 %v6054, 0.0
      %v6187 = vmax.f32 %v6056, 0.0
      %v6188 = vmax.f32 %v6060, 0.0
      %v6189 = vmax.f32 %v6062, 0.0
      %v6190 = vmax.f32 %v6064, 0.0
      %v6191 = vmax.f32 %v6066, 0.0
      %v6192 = vmax.f32 %v6070, 0.0
      %v6193 = vmax.f32 %v6072, 0.0
      %v6194 = vmax.f32 %v6074, 0.0
      %v6195 = vmax.f32 %v6076, 0.0
      %v6196 = vmax.f32 %v6080, 0.0
      %v6197 = vmax.f32 %v6082, 0.0
      %v6198 = vmax.f32 %v6084, 0.0
      %v6199 = vmax.f32 %v6086, 0.0
      %v6200 = vmax.f32 %v6090, 0.0
      %v6201 = vmax.f32 %v6092, 0.0
      %v6202 = vmax.f32 %v6094, 0.0
      %v6203 = vmax.f32 %v6096, 0.0
      %v6204 = vmax.f32 %v6100, 0.0
      %v6205 = vmax.f32 %v6102, 0.0
      %v6206 = vmax.f32 %v6104, 0.0
      %v6207 = vmax.f32 %v6106, 0.0
      %v6208 = vmax.f32 %v6110, 0.0
      %v6209 = vmax.f32 %v6112, 0.0
      %v6210 = vmax.f32 %v6114, 0.0
      %v6211 = vmax.f32 %v6116, 0.0
      %v6212 = vmax.f32 %v6120, 0.0
      %v6213 = vmax.f32 %v6122, 0.0
      %v6214 = vmax.f32 %v6124, 0.0
      %v6215 = vmax.f32 %v6126, 0.0
      %v6216 = vmax.f32 %v6130, 0.0
      %v6217 = vmax.f32 %v6132, 0.0
      %v6218 = vmax.f32 %v6134, 0.0
      %v6219 = vmax.f32 %v6136, 0.0
      %v6220 = vmax.f32 %v6140, 0.0
      %v6221 = vmax.f32 %v6142, 0.0
      %v6222 = vmax.f32 %v6144, 0.0
      %v6223 = vmax.f32 %v6146, 0.0
      %v6224 = vmax.f32 %v6150, 0.0
      %v6225 = vmax.f32 %v6152, 0.0
      %v6226 = vmax.f32 %v6154, 0.0
      %v6227 = vmax.f32 %v6156, 0.0
      %v6228 = vmax.f32 %v6160, 0.0
      %v6229 = vmax.f32 %v6162, 0.0
      %v6230 = vmax.f32 %v6164, 0.0
      %v6231 = vmax.f32 %v6166, 0.0
      %v6232 = vpack.c.bf16 %v6170, %v6168
      %v6233 = vpack.c.bf16 %v6171, %v6169
      %v6234 = vpack.c.bf16 %v6174, %v6172
      %v6235 = vpack.c.bf16 %v6175, %v6173
      %v6236 = vpack.c.bf16 %v6178, %v6176
      %v6237 = vpack.c.bf16 %v6179, %v6177
      %v6238 = vpack.c.bf16 %v6182, %v6180
      %v6239 = vpack.c.bf16 %v6183, %v6181
      %v6240 = vpack.c.bf16 %v6186, %v6184
      %v6241 = vpack.c.bf16 %v6187, %v6185
      %v6242 = vpack.c.bf16 %v6190, %v6188
      %v6243 = vpack.c.bf16 %v6191, %v6189
      %v6244 = vpack.c.bf16 %v6194, %v6192
      %v6245 = vpack.c.bf16 %v6195, %v6193
      %v6246 = vpack.c.bf16 %v6198, %v6196
      %v6247 = vpack.c.bf16 %v6199, %v6197
      %v6248 = vpack.c.bf16 %v6202, %v6200
      %v6249 = vpack.c.bf16 %v6203, %v6201
      %v6250 = vpack.c.bf16 %v6206, %v6204
      %v6251 = vpack.c.bf16 %v6207, %v6205
      %v6252 = vpack.c.bf16 %v6210, %v6208
      %v6253 = vpack.c.bf16 %v6211, %v6209
      %v6254 = vpack.c.bf16 %v6214, %v6212
      %v6255 = vpack.c.bf16 %v6215, %v6213
      %v6256 = vpack.c.bf16 %v6218, %v6216
      %v6257 = vpack.c.bf16 %v6219, %v6217
      %v6258 = vpack.c.bf16 %v6222, %v6220
      %v6259 = vpack.c.bf16 %v6223, %v6221
      %v6260 = vpack.c.bf16 %v6226, %v6224
      %v6261 = vpack.c.bf16 %v6227, %v6225
      %v6262 = vpack.c.bf16 %v6230, %v6228
      %v6263 = vpack.c.bf16 %v6231, %v6229
      %s6264 = scalar_lea.vmem %s5, 224
      %v6265 = vld [vmem:[%s6264] sm:$0xff]
      %v6266 = vld [vmem:[%s6264 + $0x8] sm:$0xff]
      %v6267 = vld [vmem:[%s6264 + $0x10] sm:$0xff]
      %v6268 = vld [vmem:[%s6264 + $0x18] sm:$0xff]
      %v6273 = vunpack.c.l.b16 %v6265
      %v6274 = vunpack.c.h.b16 %v6265
      %v6275 = vunpack.c.l.b16 %v6266
      %v6276 = vunpack.c.h.b16 %v6266
      %v6277 = vunpack.c.l.b16 %v6267
      %v6278 = vunpack.c.h.b16 %v6267
      %v6279 = vunpack.c.l.b16 %v6268
      %v6280 = vunpack.c.h.b16 %v6268
      %v6281 = vpack.c.b16 %v6275, %v6273
      %v6282 = vpack.c.b16 %v6276, %v6274
      %v6283 = vpack.c.b16 %v6279, %v6277
      %v6284 = vpack.c.b16 %v6280, %v6278
      %6289 = vmatprep.subr.bf16.mxu0 %v6247
      %6290 = vmatpush1.bf16.msra.mxu0 %v6246
      %6291 = vmatprep.subr.bf16.mxu0 %v6245
      %6292 = vmatpush1.bf16.msra.mxu0 %v6244
      %6293 = vmatprep.subr.bf16.mxu0 %v6243
      %6294 = vmatpush1.bf16.msra.mxu0 %v6242
      %6295 = vmatprep.subr.bf16.mxu0 %v6241
      %6296 = vmatpush1.bf16.msra.mxu0 %v6240
      %6297 = vmatprep.subr.bf16.mxu0 %v6239
      %6298 = vmatpush1.bf16.msra.mxu0 %v6238
      %6299 = vmatprep.subr.bf16.mxu0 %v6237
      %6300 = vmatpush1.bf16.msra.mxu0 %v6236
      %6301 = vmatprep.subr.bf16.mxu0 %v6235
      %6302 = vmatpush1.bf16.msra.mxu0 %v6234
      %6303 = vmatprep.subr.bf16.mxu0 %v6233
      %6304 = vmatpush1.bf16.msra.mxu0 %v6232
      %6305 = vmatprep.subr.bf16.mxu0 %v6263
      %6306 = vmatpush2.bf16.msra.mxu0 %v6262
      %6307 = vmatprep.subr.bf16.mxu0 %v6261
      %6308 = vmatpush2.bf16.msra.mxu0 %v6260
      %6309 = vmatprep.subr.bf16.mxu0 %v6259
      %6310 = vmatpush2.bf16.msra.mxu0 %v6258
      %6311 = vmatprep.subr.bf16.mxu0 %v6257
      %6312 = vmatpush2.bf16.msra.mxu0 %v6256
      %6313 = vmatprep.subr.bf16.mxu0 %v6255
      %6314 = vmatpush2.bf16.msra.mxu0 %v6254
      %6315 = vmatprep.subr.bf16.mxu0 %v6253
      %6316 = vmatpush2.bf16.msra.mxu0 %v6252
      %6317 = vmatprep.subr.bf16.mxu0 %v6251
      %6318 = vmatpush2.bf16.msra.mxu0 %v6250
      %6319 = vmatprep.subr.bf16.mxu0 %v6249
      %6320 = vmatpush2.bf16.msra.mxu0 %v6248
      %6321 = vmatprep.mubr.bf16.mxu0 %v6282
      %6322 = vmatmul.mubr.bf16.gmra.mxu0 %v6281
      %v6323 = vpop.f32.mrf.mxu0
      %v6324 = vadd.f32 0.0, %v6323
      %v6325 = vpop.f32.mrf.mxu0
      %v6326 = vadd.f32 0.0, %v6325
      %v6327 = vpop.f32.mrf.mxu0
      %v6328 = vadd.f32 0.0, %v6327
      %v6329 = vpop.f32.mrf.mxu0
      %v6330 = vadd.f32 0.0, %v6329
      %6331 = vmatprep.mubr.bf16.mxu0 %v6284
      %6332 = vmatmul.mubr.bf16.gmra.mxu0 %v6283
      %v6333 = vpop.f32.mrf.mxu0
      %v6334 = vadd.f32 0.0, %v6333
      %v6335 = vpop.f32.mrf.mxu0
      %v6336 = vadd.f32 0.0, %v6335
      %v6337 = vpop.f32.mrf.mxu0
      %v6338 = vadd.f32 0.0, %v6337
      %v6339 = vpop.f32.mrf.mxu0
      %v6340 = vadd.f32 0.0, %v6339
      %6341 = vdwg.mxu0
      %v6342 = vadd.f32 %v5613, %v6324
      %v6343 = vadd.f32 %v5614, %v6326
      %v6344 = vadd.f32 %v5615, %v6328
      %v6345 = vadd.f32 %v5616, %v6330
      %v6346 = vadd.f32 %v5617, %v6334
      %v6347 = vadd.f32 %v5618, %v6336
      %v6348 = vadd.f32 %v5619, %v6338
      %v6349 = vadd.f32 %v5620, %v6340
      %v6350 = vld [vmem:[%s6] sm:$0xff]
      %v6351 = vld [vmem:[%s6 + $0x8] sm:$0xff]
      %v6352 = vld [vmem:[%s6 + $0x10] sm:$0xff]
      %v6353 = vld [vmem:[%s6 + $0x18] sm:$0xff]
      %6355 = vset.pattern.permute.xlu0 0
      %6356 = vperm.xlu0 %6355, %v6350
      %v6357 = vpop.permute.xlu0 %6356
      %6360 = vset.pattern.permute.xlu0 0
      %6361 = vperm.xlu0 %6360, %v6351
      %v6362 = vpop.permute.xlu0 %6361
      %6365 = vset.pattern.permute.xlu0 0
      %6366 = vperm.xlu0 %6365, %v6352
      %v6367 = vpop.permute.xlu0 %6366
      %6370 = vset.pattern.permute.xlu0 0
      %6371 = vperm.xlu0 %6370, %v6353
      %v6372 = vpop.permute.xlu0 %6371
      %v6374 = vadd.f32 %v6342, %v6357
      %v6375 = vadd.f32 %v6343, %v6357
      %v6376 = vadd.f32 %v6344, %v6362
      %v6377 = vadd.f32 %v6345, %v6362
      %v6378 = vadd.f32 %v6346, %v6367
      %v6379 = vadd.f32 %v6347, %v6367
      %v6380 = vadd.f32 %v6348, %v6372
      %v6381 = vadd.f32 %v6349, %v6372
      %v6382 = vmax.f32 %v6374, 0.0
      %v6383 = vmax.f32 %v6375, 0.0
      %v6384 = vmax.f32 %v6376, 0.0
      %v6385 = vmax.f32 %v6377, 0.0
      %v6386 = vmax.f32 %v6378, 0.0
      %v6387 = vmax.f32 %v6379, 0.0
      %v6388 = vmax.f32 %v6380, 0.0
      %v6389 = vmax.f32 %v6381, 0.0
      %v6390 = vpack.c.bf16 %v6384, %v6382
      %v6391 = vpack.c.bf16 %v6385, %v6383
      %v6392 = vpack.c.bf16 %v6388, %v6386
      %v6393 = vpack.c.bf16 %v6389, %v6387
      %v6394 = vunpack.c.l.bf16 %v6390
      %v6395 = vunpack.c.l.bf16 %v6391
      %v6396 = vunpack.c.h.bf16 %v6390
      %v6397 = vunpack.c.h.bf16 %v6391
      %v6398 = vunpack.c.l.bf16 %v6392
      %v6399 = vunpack.c.l.bf16 %v6393
      %v6400 = vunpack.c.h.bf16 %v6392
      %v6401 = vunpack.c.h.bf16 %v6393
      %v6402 = vld [vmem:[%s7] sm:$0xf]
      %v6403 = vld [vmem:[%s7 + $0x4] sm:$0xf]
      %v6404 = vld [vmem:[%s7 + $0x8] sm:$0xf]
      %v6405 = vld [vmem:[%s7 + $0xc] sm:$0xf]
      %v6406 = vunpack.c.l.bf16 %v6402
      %v6407 = vunpack.c.l.bf16 %v6403
      %v6408 = vunpack.c.l.bf16 %v6404
      %v6409 = vunpack.c.l.bf16 %v6405
      %6411 = vset.pattern.permute.xlu0 0
      %6412 = vperm.xlu0 %6411, %v6406
      %v6413 = vpop.permute.xlu0 %6412
      %6416 = vset.pattern.permute.xlu0 0
      %6417 = vperm.xlu0 %6416, %v6407
      %v6418 = vpop.permute.xlu0 %6417
      %6421 = vset.pattern.permute.xlu0 0
      %6422 = vperm.xlu0 %6421, %v6408
      %v6423 = vpop.permute.xlu0 %6422
      %6426 = vset.pattern.permute.xlu0 0
      %6427 = vperm.xlu0 %6426, %v6409
      %v6428 = vpop.permute.xlu0 %6427
      %v6430 = vmul.f32 %v6394, %v6413
      %v6431 = vmul.f32 %v6395, %v6413
      %v6432 = vmul.f32 %v6396, %v6418
      %v6433 = vmul.f32 %v6397, %v6418
      %v6434 = vmul.f32 %v6398, %v6423
      %v6435 = vmul.f32 %v6399, %v6423
      %v6436 = vmul.f32 %v6400, %v6428
      %v6437 = vmul.f32 %v6401, %v6428
      %v6438 = vadd.f32 %v6430, %v6432
      %v6439 = vadd.f32 %v6438, %v6434
      %v6440 = vadd.f32 %v6439, %v6436
      %v6441 = vrot.slane %v6440, 4
      %v6442 = vadd.f32 %v6440, %v6441
      %v6443 = vrot.slane %v6442, 2
      %v6444 = vadd.f32 %v6442, %v6443
      %v6445 = vrot.slane %v6444, 1
      %v6446 = vadd.f32 %v6444, %v6445
      %v6447 = vadd.f32 %v6431, %v6433
      %v6448 = vadd.f32 %v6447, %v6435
      %v6449 = vadd.f32 %v6448, %v6437
      %v6450 = vrot.slane %v6449, 4
      %v6451 = vadd.f32 %v6449, %v6450
      %v6452 = vrot.slane %v6451, 2
      %v6453 = vadd.f32 %v6451, %v6452
      %v6454 = vrot.slane %v6453, 1
      %v6455 = vadd.f32 %v6453, %v6454
      %v6456 = vld [vmem:[#allocation2] sm:$0x1]
      %6458 = vset.pattern.permute.xlu0 0
      %6459 = vperm.xlu0 %6458, %v6456
      %v6460 = vpop.permute.xlu0 %6459
      %v6462 = vlaneseq
      %v6463 = vshrl.u32 %v6462, 7
      %v6464 = vsub.s32 0, %v6463
      %v6465 = vrot.slane %v6460, %v6464
      %v6466 = vadd.f32 %v6446, %v6465
      %v6467 = vadd.f32 %v6455, %v6465
      %v6470 = vcombine.low %v6466, %v6467
      %v6472 = vunpack.c.l.s4 1966171168
      %v6473 = vunpack.c.0.s8 %v6472
      %v6474 = vlaneseq
      %v6475 = vshrl.u32 %v6474, 7
      %v6476 = vsub.s32 %v6473, %v6475
      %v6477 = vrot.slane %v6470, %v6476
      %v6479 = vunpack.c.l.s4 1966171168
      %v6480 = vunpack.c.0.s8 %v6479
      %v6481 = vlaneseq
      %v6482 = vshrl.u32 %v6481, 7
      %v6483 = vsub.s32 %v6480, %v6482
      %v6484 = vrot.slane %v6477, %v6483
      %v6486 = vlaneseq
      %vm6487 = vcmp.ge.s32.totalorder %v6486, 0
      %vm6488 = vcmp.lt.s32.totalorder %v6486, 256
      %vm6489 = vmand %vm6487, %vm6488
      %6490 = vst.msk [vmem:[%s334] sm:$0x3] %vm6489, %v6484
      %s6491 = smul.u32 2, %s22
      %p6492 = scmp.lt.s32.totalorder %s6491, 3
      %s6493 = scalar_select %p6492, %s6491, 3
      %s6494 = scalar_lea.vmem %s9, %s6493
      // Predicated region
      $region57: #{pix_transform_net_base.1} parent=55 // pred_check
        %p6495 = pneg %p234
      $region58: #{pix_transform_net_base.1} parent=55 // pred_check_branch
        %6497 = sbr.rel (%p6495) target = $region60
      $region59: #{pix_transform_net_base.1} parent=55 // pred_region
        %s6498 = smul.u32 2, %s22
      $region60: #{pix_transform_net_base.1} parent=55 // pred_fallthru
        _
    $region56: #{pix_transform_net_base.1} parent=5 // pred_fallthru
      _
    %p6499 = scmp.le.s32.totalorder 2, %s17
    // Predicated region
    $region61: #{pix_transform_net_base.1} parent=5 // pred_check
      %p6500 = pneg %p6499
    $region62: #{pix_transform_net_base.1} parent=5 // pred_check_branch
      %6502 = sbr.rel (%p6500) target = $region64
    $region63: #{pix_transform_net_base.1} parent=5 // pred_region
      %s6503 = ssub.s32 %s17, 2
      // Predicated region
      $region65: #{pix_transform_net_base.1} parent=63 // pred_check
        %p6504 = pneg %p240
      $region66: #{pix_transform_net_base.1} parent=63 // pred_check_branch
        %6506 = sbr.rel (%p6504) target = $region68
      $region67: #{pix_transform_net_base.1} parent=63 // pred_region
        %s6507 = smul.u32 2, %s23
        %p6508 = scmp.lt.s32.totalorder %s6507, 3
        %s6509 = scalar_select %p6508, %s6507, 3
        %s6510 = scalar_lea.vmem %s9, %s6509
      $region68: #{pix_transform_net_base.1} parent=63 // pred_fallthru
        _
    $region64: #{pix_transform_net_base.1} parent=5 // pred_fallthru
      _
  $region6: #{pix_transform_net_base.1} parent=0 // loop_footer
    %s21 = sadd.s32 1, %s17
  $region7: #{pix_transform_net_base.1} parent=0 // loop_footer_branch
    %16 = sbr.rel target = $region3
  $region8: #{pix_transform_net_base.1} parent=0 // loop_exit
    _

</llo_original>
